<compile_context>
chip_gen: v7x
topology: tpu7x:2x2x1
jax: 0.10.0
libtpu: 0.0.40
codegen_flags: <defaults>
</compile_context>

<pallas_src>
from functools import partial

import jax
import jax.numpy as jnp
from jax.experimental import pallas as pl
from jax.experimental.pallas import tpu as pltpu

EPS = 1.1920929e-07  # torch.finfo(float32).eps — torch.nn.RMSNorm default eps


def _rmsnorm(x, w):
    # x: (N, D) f32, w: (1, D) f32
    ms = jnp.mean(x * x, axis=-1, keepdims=True)
    return x * jax.lax.rsqrt(ms + EPS) * w


# --------------------- fused whole-model kernel (one layer per grid step) ----
def transformer_kernel(B, L, D, H, E, F,
                       x_ref,
                       n1_ref, wqkv_ref, bqkv_ref, wo_ref, bo_ref,
                       n2_ref, wg_ref, w1_ref, b1_ref, w2_ref, b2_ref,
                       ws1_ref, bs1_ref, ws2_ref, bs2_ref,
                       o_ref):
    N = B * L
    Dh = D // H
    scale = 1.0 / (Dh ** 0.5)

    # Residual stream lives in the resident output block across the layer axis.
    @pl.when(pl.program_id(0) == 0)
    def _():
        o_ref[...] = x_ref[...]

    x = o_ref[...]                                            # (N, D) f32

    # ------------- sublayer 1: x = SelfAttention(RMSNorm(x)) + x -------------
    xn = _rmsnorm(x, n1_ref[0])                               # (N, D) f32
    qkv = jnp.dot(xn.astype(jnp.bfloat16), wqkv_ref[0],
                  preferred_element_type=jnp.float32) + bqkv_ref[0]   # (N, 3D)
    q = qkv[:, 0 * D:1 * D].reshape(B, L, D)
    k = qkv[:, 1 * D:2 * D].reshape(B, L, D)
    v = qkv[:, 2 * D:3 * D].reshape(B, L, D)

    ctx_heads = []
    for h in range(H):                                        # static unroll, H=4
        sl = slice(h * Dh, (h + 1) * Dh)
        qh = q[:, :, sl].astype(jnp.bfloat16)
        kh = k[:, :, sl].astype(jnp.bfloat16)
        vh = v[:, :, sl].astype(jnp.bfloat16)
        s = jnp.einsum('bqd,bkd->bqk', qh, kh,
                       preferred_element_type=jnp.float32) * scale    # (B,L,L) f32
        s = s - jnp.max(s, axis=-1, keepdims=True)
        p = jnp.exp(s)
        p = p * pl.reciprocal(jnp.sum(p, axis=-1, keepdims=True), approx=True)
        ctx_h = jnp.einsum('bqk,bkd->bqd', p.astype(jnp.bfloat16), vh,
                           preferred_element_type=jnp.float32)        # (B,L,Dh)
        ctx_heads.append(ctx_h.reshape(N, Dh))
    ctx = jnp.concatenate(ctx_heads, axis=-1)                 # (N, D) f32
    # TODO(synk): attention dropout(p=0.1) skipped — eval-mode identity.
    attn_out = jnp.dot(ctx.astype(jnp.bfloat16), wo_ref[0],
                       preferred_element_type=jnp.float32) + bo_ref[0]
    x = x + attn_out

    # ------------- sublayer 2: x = MoE(RMSNorm(x)) + x -----------------------
    xn2 = _rmsnorm(x, n2_ref[0])                              # (N, D) f32

    # softmax gating over routed experts (kept fully in f32 for stable top-2)
    logits = jnp.dot(xn2, wg_ref[0], preferred_element_type=jnp.float32)  # (N, E)
    logits = logits - jnp.max(logits, axis=-1, keepdims=True)
    pe = jnp.exp(logits)
    pe = pe * pl.reciprocal(jnp.sum(pe, axis=-1, keepdims=True), approx=True)

    # top-2 selection (mask-based), renormalized among the selected experts
    m1 = jnp.max(pe, axis=-1, keepdims=True)
    mask1 = pe >= m1
    pe2 = jnp.where(mask1, -jnp.inf, pe)
    m2 = jnp.max(pe2, axis=-1, keepdims=True)
    mask2 = pe2 >= m2
    topk = jnp.where(mask1 | mask2, pe, 0.0)
    gate = topk * pl.reciprocal(jnp.sum(topk, axis=-1, keepdims=True),
                                approx=True)                  # (N, E) f32

    xb = xn2.astype(jnp.bfloat16)

    # all routed experts in ONE wide matmul: (N, D) @ (D, E*F) -> (N, E*F)
    hcat = jnp.maximum(
        jnp.dot(xb, w1_ref[0], preferred_element_type=jnp.float32) + b1_ref[0],
        0.0)                                                  # (N, E*F) f32

    # expand gate (N, E) -> (N, E*F) via a constant 0/1 matmul (expert-major
    # column blocks of width F) — avoids size-1 lane slices / lane reshapes.
    erow = jax.lax.broadcasted_iota(jnp.int32, (E, E * F), 0)
    ecol = jax.lax.broadcasted_iota(jnp.int32, (E, E * F), 1)
    expand = ((ecol >= erow * F) & (ecol < (erow + 1) * F)).astype(jnp.float32)
    gate_wide = jnp.dot(gate, expand, preferred_element_type=jnp.float32)

    hg = hcat * gate_wide                                     # gate-weighted hidden
    routed = (jnp.dot(hg.astype(jnp.bfloat16), w2_ref[0],
                      preferred_element_type=jnp.float32)
              + jnp.dot(gate, b2_ref[0],                      # sum_e gate_e * b2_e
                        preferred_element_type=jnp.float32))  # (N, D) f32

    # shared expert (always on)
    hs = jnp.maximum(
        jnp.dot(xb, ws1_ref[0], preferred_element_type=jnp.float32) + bs1_ref[0],
        0.0)
    shared = jnp.dot(hs.astype(jnp.bfloat16), ws2_ref[0],
                     preferred_element_type=jnp.float32) + bs2_ref[0]

    # TODO(synk): MoE load-balancing aux loss (loss_coef=0.001) is not part of
    # the forward output.
    o_ref[...] = x + routed + shared


# ------------------------------ full Transformer -----------------------------
def transformer_forward(x, params, num_heads):
    B, L, D = x.shape
    N = B * L
    NL = params["n1"].shape[0]
    E = params["wg"].shape[-1]
    F = params["ws1"].shape[-1]

    def wspec(arr):
        shp = arr.shape  # all stacked weights are 3-D: (num_layers, a, b)
        return pl.BlockSpec((1,) + shp[1:], lambda l: (l, 0, 0))

    order = ["n1", "wqkv", "bqkv", "wo", "bo",
             "n2", "wg", "w1", "b1", "w2", "b2",
             "ws1", "bs1", "ws2", "bs2"]
    weights = [params[k] for k in order]

    out = pl.pallas_call(
        partial(transformer_kernel, B, L, D, num_heads, E, F),
        out_shape=jax.ShapeDtypeStruct((N, D), jnp.float32),
        grid=(NL,),
        in_specs=[pl.BlockSpec((N, D), lambda l: (0, 0))]
                 + [wspec(w) for w in weights],
        out_specs=pl.BlockSpec((N, D), lambda l: (0, 0)),
        compiler_params=pltpu.CompilerParams(
            dimension_semantics=("arbitrary",)),   # layers are sequential
    )(x.reshape(N, D), *weights)
    return out.reshape(B, L, D)


# --------------------------------- parameters --------------------------------
def init_params(key, d_model, num_layers, num_experts, d_ff):
    D, E, F, NL = d_model, num_experts, d_ff, num_layers

    def dense(k, shape):
        return (0.02 * jax.random.normal(k, shape)).astype(jnp.float32)

    ks = jax.random.split(key, 16)
    wq = dense(ks[0], (NL, D, D))
    wk = dense(ks[1], (NL, D, D))
    wv = dense(ks[2], (NL, D, D))
    bq = dense(ks[3], (NL, 1, D))
    bk = dense(ks[4], (NL, 1, D))
    bv = dense(ks[5], (NL, 1, D))
    wo = dense(ks[6], (NL, D, D))
    bo = dense(ks[7], (NL, 1, D))
    wg = dense(ks[8], (NL, D, E))
    w1 = dense(ks[9], (NL, E, D, F))   # per-expert first linear
    b1 = dense(ks[10], (NL, E, 1, F))
    w2 = dense(ks[11], (NL, E, F, D))  # per-expert second linear
    b2 = dense(ks[12], (NL, E, 1, D))
    ws1 = dense(ks[13], (NL, D, F))    # shared expert
    ws2 = dense(ks[14], (NL, F, D))
    bs1 = jnp.zeros((NL, 1, F), jnp.float32)
    bs2 = jnp.zeros((NL, 1, D), jnp.float32)

    # ---- fuse / stack for the kernel --------------------------------------
    wqkv = jnp.concatenate([wq, wk, wv], axis=-1)                    # (NL, D, 3D)
    bqkv = jnp.concatenate([bq, bk, bv], axis=-1)                    # (NL, 1, 3D)
    w1cat = jnp.transpose(w1, (0, 2, 1, 3)).reshape(NL, D, E * F)    # expert-major cols
    b1cat = b1.reshape(NL, 1, E * F)
    w2cat = w2.reshape(NL, E * F, D)                                 # expert-major rows
    b2stk = b2.reshape(NL, E, D)

    bf16 = jnp.bfloat16
    return {
        "n1": jnp.ones((NL, 1, D), jnp.float32),   # torch RMSNorm init
        "n2": jnp.ones((NL, 1, D), jnp.float32),
        "wqkv": wqkv.astype(bf16), "bqkv": bqkv,
        "wo": wo.astype(bf16), "bo": bo,
        "wg": wg,                                   # gating kept in f32
        "w1": w1cat.astype(bf16), "b1": b1cat,
        "w2": w2cat.astype(bf16), "b2": b2stk,
        "ws1": ws1.astype(bf16), "bs1": bs1,
        "ws2": ws2.astype(bf16), "bs2": bs2,
    }


if __name__ == "__main__":
    d_model, num_heads, num_layers = 32, 4, 2
    num_experts, d_ff = 8, d_model          # MoE(d_ff=d_model, num_router_experts=8)
    B, L = 2, 8

    key = jax.random.PRNGKey(0)
    kx, kp = jax.random.split(key)
    x = jax.random.normal(kx, (B, L, d_model), dtype=jnp.float32)
    params = init_params(kp, d_model, num_layers, num_experts, d_ff)

    out = transformer_forward(x, params, num_heads)
    jax.block_until_ready(out)
    assert out.shape == (B, L, d_model) and out.dtype == jnp.float32
    print("KERNEL_OK")
</pallas_src>

<mosaic_0001>
module attributes {stable_mosaic.version = 11 : i64} {
  func.func @transformer_kernel(%arg0: i32, %arg1: memref<16x32xf32, #tpu.memory_space<vmem>>, %arg2: memref<1x1x32xf32, #tpu.memory_space<vmem>>, %arg3: memref<1x32x96xbf16, #tpu.memory_space<vmem>>, %arg4: memref<1x1x96xf32, #tpu.memory_space<vmem>>, %arg5: memref<1x32x32xbf16, #tpu.memory_space<vmem>>, %arg6: memref<1x1x32xf32, #tpu.memory_space<vmem>>, %arg7: memref<1x1x32xf32, #tpu.memory_space<vmem>>, %arg8: memref<1x32x8xf32, #tpu.memory_space<vmem>>, %arg9: memref<1x32x256xbf16, #tpu.memory_space<vmem>>, %arg10: memref<1x1x256xf32, #tpu.memory_space<vmem>>, %arg11: memref<1x256x32xbf16, #tpu.memory_space<vmem>>, %arg12: memref<1x8x32xf32, #tpu.memory_space<vmem>>, %arg13: memref<1x32x32xbf16, #tpu.memory_space<vmem>>, %arg14: memref<1x1x32xf32, #tpu.memory_space<vmem>>, %arg15: memref<1x32x32xbf16, #tpu.memory_space<vmem>>, %arg16: memref<1x1x32xf32, #tpu.memory_space<vmem>>, %arg17: memref<16x32xf32, #tpu.memory_space<vmem>>) attributes {dimension_semantics = [#tpu.dimension_semantics<arbitrary>], iteration_bounds = array<i64: 2>, scalar_prefetch = 0 : i64, scratch_operands = 0 : i64, tpu.core_type = #tpu.core_type<tc>, window_params = [{pipeline_mode = #tpu.pipeline_mode<synchronous>, transform_indices = @transform_0, window_bounds = array<i64: 16, 32>}, {transform_indices = @transform_1, window_bounds = array<i64: 1, 1, 32>}, {transform_indices = @transform_2, window_bounds = array<i64: 1, 32, 96>}, {transform_indices = @transform_3, window_bounds = array<i64: 1, 1, 96>}, {transform_indices = @transform_4, window_bounds = array<i64: 1, 32, 32>}, {transform_indices = @transform_5, window_bounds = array<i64: 1, 1, 32>}, {transform_indices = @transform_6, window_bounds = array<i64: 1, 1, 32>}, {transform_indices = @transform_7, window_bounds = array<i64: 1, 32, 8>}, {transform_indices = @transform_8, window_bounds = array<i64: 1, 32, 256>}, {transform_indices = @transform_9, window_bounds = array<i64: 1, 1, 256>}, {transform_indices = @transform_10, window_bounds = array<i64: 1, 256, 32>}, {transform_indices = @transform_11, window_bounds = array<i64: 1, 8, 32>}, {transform_indices = @transform_12, window_bounds = array<i64: 1, 32, 32>}, {transform_indices = @transform_13, window_bounds = array<i64: 1, 1, 32>}, {transform_indices = @transform_14, window_bounds = array<i64: 1, 32, 32>}, {transform_indices = @transform_15, window_bounds = array<i64: 1, 1, 32>}, {pipeline_mode = #tpu.pipeline_mode<synchronous>, transform_indices = @transform_16, window_bounds = array<i64: 16, 32>}]} {
    %c0_i32 = arith.constant 0 : i32
    %0 = arith.cmpi eq, %arg0, %c0_i32 : i32
    %1 = arith.extui %0 : i1 to i32
    %c0_i32_0 = arith.constant 0 : i32
    %2 = arith.cmpi ne, %1, %c0_i32_0 : i32
    scf.if %2 {
      %c0_93 = arith.constant 0 : index
      %c0_94 = arith.constant 0 : index
      %228 = vector.load %arg1[%c0_93, %c0_94] : memref<16x32xf32, #tpu.memory_space<vmem>>, vector<16x32xf32>
      %c0_95 = arith.constant 0 : index
      %c0_96 = arith.constant 0 : index
      %229 = vector.load %arg17[%c0_95, %c0_96] : memref<16x32xf32, #tpu.memory_space<vmem>>, vector<16x32xf32>
      tpu.vector_store %arg17[%c0_95, %c0_96], %228 {strides = array<i32>} : memref<16x32xf32, #tpu.memory_space<vmem>>, vector<16x32xf32>,
    } else {
    }
    %c0 = arith.constant 0 : index
    %c0_1 = arith.constant 0 : index
    %3 = vector.load %arg17[%c0, %c0_1] : memref<16x32xf32, #tpu.memory_space<vmem>>, vector<16x32xf32>
    %c0_2 = arith.constant 0 : index
    %c0_3 = arith.constant 0 : index
    %c0_4 = arith.constant 0 : index
    %4 = vector.load %arg2[%c0_2, %c0_3, %c0_4] : memref<1x1x32xf32, #tpu.memory_space<vmem>>, vector<1x1x32xf32>
    %5 = vector.shape_cast %4 : vector<1x1x32xf32> to vector<1x32xf32>
    %6 = arith.mulf %3, %3 : vector<16x32xf32>
    %cst = arith.constant dense<0.000000e+00> : vector<16xf32>
    %7 = vector.multi_reduction <add>, %6, %cst [1] : vector<16x32xf32> to vector<16xf32>
    %8 = vector.shape_cast %7 : vector<16xf32> to vector<16x1xf32>
    %cst_5 = arith.constant 3.200000e+01 : f32
    %9 = vector.broadcast %cst_5 : f32 to vector<16x1xf32>
    %10 = arith.divf %8, %9 : vector<16x1xf32>
    %cst_6 = arith.constant 1.1920929E-7 : f32
    %11 = vector.broadcast %cst_6 : f32 to vector<16x1xf32>
    %12 = arith.addf %10, %11 : vector<16x1xf32>
    %13 = math.rsqrt %12 : vector<16x1xf32>
    %14 = vector.broadcast %13 : vector<16x1xf32> to vector<16x32xf32>
    %15 = arith.mulf %3, %14 : vector<16x32xf32>
    %16 = vector.broadcast %5 : vector<1x32xf32> to vector<16x32xf32>
    %17 = arith.mulf %15, %16 : vector<16x32xf32>
    %18 = arith.truncf %17 : vector<16x32xf32> to vector<16x32xbf16>
    %c0_7 = arith.constant 0 : index
    %c0_8 = arith.constant 0 : index
    %c0_9 = arith.constant 0 : index
    %19 = vector.load %arg3[%c0_7, %c0_8, %c0_9] : memref<1x32x96xbf16, #tpu.memory_space<vmem>>, vector<1x32x96xbf16>
    %20 = vector.shape_cast %19 : vector<1x32x96xbf16> to vector<32x96xbf16>
    %cst_10 = arith.constant dense<0.000000e+00> : vector<16x96xf32>
    %21 = tpu.matmul %18, %20, %cst_10 {dimension_numbers = #tpu.dot_dimension_numbers<[1], [0], [0], [1], [0, 0, 1, 1], [], []>} : vector<16x32xbf16>, vector<32x96xbf16>, vector<16x96xf32> -> vector<16x96xf32>
    %c0_11 = arith.constant 0 : index
    %c0_12 = arith.constant 0 : index
    %c0_13 = arith.constant 0 : index
    %22 = vector.load %arg4[%c0_11, %c0_12, %c0_13] : memref<1x1x96xf32, #tpu.memory_space<vmem>>, vector<1x1x96xf32>
    %23 = vector.shape_cast %22 : vector<1x1x96xf32> to vector<1x96xf32>
    %24 = vector.broadcast %23 : vector<1x96xf32> to vector<16x96xf32>
    %25 = arith.addf %21, %24 : vector<16x96xf32>
    %26 = vector.extract_strided_slice %25 {offsets = [0, 0], sizes = [16, 32], strides = [1, 1]} : vector<16x96xf32> to vector<16x32xf32>
    %27 = vector.shape_cast %26 : vector<16x32xf32> to vector<2x8x32xf32>
    %28 = vector.extract_strided_slice %25 {offsets = [0, 32], sizes = [16, 32], strides = [1, 1]} : vector<16x96xf32> to vector<16x32xf32>
    %29 = vector.shape_cast %28 : vector<16x32xf32> to vector<2x8x32xf32>
    %30 = vector.extract_strided_slice %25 {offsets = [0, 64], sizes = [16, 32], strides = [1, 1]} : vector<16x96xf32> to vector<16x32xf32>
    %31 = vector.shape_cast %30 : vector<16x32xf32> to vector<2x8x32xf32>
    %32 = vector.extract_strided_slice %27 {offsets = [0, 0, 0], sizes = [2, 8, 8], strides = [1, 1, 1]} : vector<2x8x32xf32> to vector<2x8x8xf32>
    %33 = arith.truncf %32 : vector<2x8x8xf32> to vector<2x8x8xbf16>
    %34 = vector.extract_strided_slice %29 {offsets = [0, 0, 0], sizes = [2, 8, 8], strides = [1, 1, 1]} : vector<2x8x32xf32> to vector<2x8x8xf32>
    %35 = arith.truncf %34 : vector<2x8x8xf32> to vector<2x8x8xbf16>
    %36 = vector.extract_strided_slice %31 {offsets = [0, 0, 0], sizes = [2, 8, 8], strides = [1, 1, 1]} : vector<2x8x32xf32> to vector<2x8x8xf32>
    %37 = arith.truncf %36 : vector<2x8x8xf32> to vector<2x8x8xbf16>
    "tpu.trace_start"() <{level = 10 : i32, message = "bqd,bkd->bqk"}> : () -> ()
    %cst_14 = arith.constant dense<0.000000e+00> : vector<2x8x8xf32>
    %38 = tpu.matmul %33, %35, %cst_14 {dimension_numbers = #tpu.dot_dimension_numbers<[2], [2], [1], [1], [0, 0, 0, 1, 1, 1], [0], [0]>} : vector<2x8x8xbf16>, vector<2x8x8xbf16>, vector<2x8x8xf32> -> vector<2x8x8xf32>
    "tpu.trace_stop"() : () -> ()
    %cst_15 = arith.constant 0.353553385 : f32
    %39 = vector.broadcast %cst_15 : f32 to vector<2x8x8xf32>
    %40 = arith.mulf %38, %39 : vector<2x8x8xf32>
    %cst_16 = arith.constant dense<0xFF800000> : vector<2x8xf32>
    %41 = vector.multi_reduction <maximumf>, %40, %cst_16 [2] : vector<2x8x8xf32> to vector<2x8xf32>
    %42 = vector.shape_cast %41 : vector<2x8xf32> to vector<2x8x1xf32>
    %43 = vector.broadcast %42 : vector<2x8x1xf32> to vector<2x8x8xf32>
    %44 = arith.subf %40, %43 : vector<2x8x8xf32>
    %45 = math.exp %44 : vector<2x8x8xf32>
    %cst_17 = arith.constant dense<0.000000e+00> : vector<2x8xf32>
    %46 = vector.multi_reduction <add>, %45, %cst_17 [2] : vector<2x8x8xf32> to vector<2x8xf32>
    %47 = vector.shape_cast %46 : vector<2x8xf32> to vector<2x8x1xf32>
    %48 = tpu.reciprocal %47 {approx = true} : vector<2x8x1xf32> -> vector<2x8x1xf32>
    %49 = vector.broadcast %48 : vector<2x8x1xf32> to vector<2x8x8xf32>
    %50 = arith.mulf %45, %49 : vector<2x8x8xf32>
    %51 = arith.truncf %50 : vector<2x8x8xf32> to vector<2x8x8xbf16>
    "tpu.trace_start"() <{level = 10 : i32, message = "bqk,bkd->bqd"}> : () -> ()
    %cst_18 = arith.constant dense<0.000000e+00> : vector<2x8x8xf32>
    %52 = tpu.matmul %51, %37, %cst_18 {dimension_numbers = #tpu.dot_dimension_numbers<[2], [1], [1], [2], [0, 0, 0, 1, 1, 2], [0], [0]>} : vector<2x8x8xbf16>, vector<2x8x8xbf16>, vector<2x8x8xf32> -> vector<2x8x8xf32>
    "tpu.trace_stop"() : () -> ()
    %53 = vector.shape_cast %52 : vector<2x8x8xf32> to vector<16x8xf32>
    %54 = vector.extract_strided_slice %27 {offsets = [0, 0, 8], sizes = [2, 8, 8], strides = [1, 1, 1]} : vector<2x8x32xf32> to vector<2x8x8xf32>
    %55 = arith.truncf %54 : vector<2x8x8xf32> to vector<2x8x8xbf16>
    %56 = vector.extract_strided_slice %29 {offsets = [0, 0, 8], sizes = [2, 8, 8], strides = [1, 1, 1]} : vector<2x8x32xf32> to vector<2x8x8xf32>
    %57 = arith.truncf %56 : vector<2x8x8xf32> to vector<2x8x8xbf16>
    %58 = vector.extract_strided_slice %31 {offsets = [0, 0, 8], sizes = [2, 8, 8], strides = [1, 1, 1]} : vector<2x8x32xf32> to vector<2x8x8xf32>
    %59 = arith.truncf %58 : vector<2x8x8xf32> to vector<2x8x8xbf16>
    "tpu.trace_start"() <{level = 10 : i32, message = "bqd,bkd->bqk"}> : () -> ()
    %cst_19 = arith.constant dense<0.000000e+00> : vector<2x8x8xf32>
    %60 = tpu.matmul %55, %57, %cst_19 {dimension_numbers = #tpu.dot_dimension_numbers<[2], [2], [1], [1], [0, 0, 0, 1, 1, 1], [0], [0]>} : vector<2x8x8xbf16>, vector<2x8x8xbf16>, vector<2x8x8xf32> -> vector<2x8x8xf32>
    "tpu.trace_stop"() : () -> ()
    %cst_20 = arith.constant 0.353553385 : f32
    %61 = vector.broadcast %cst_20 : f32 to vector<2x8x8xf32>
    %62 = arith.mulf %60, %61 : vector<2x8x8xf32>
    %cst_21 = arith.constant dense<0xFF800000> : vector<2x8xf32>
    %63 = vector.multi_reduction <maximumf>, %62, %cst_21 [2] : vector<2x8x8xf32> to vector<2x8xf32>
    %64 = vector.shape_cast %63 : vector<2x8xf32> to vector<2x8x1xf32>
    %65 = vector.broadcast %64 : vector<2x8x1xf32> to vector<2x8x8xf32>
    %66 = arith.subf %62, %65 : vector<2x8x8xf32>
    %67 = math.exp %66 : vector<2x8x8xf32>
    %cst_22 = arith.constant dense<0.000000e+00> : vector<2x8xf32>
    %68 = vector.multi_reduction <add>, %67, %cst_22 [2] : vector<2x8x8xf32> to vector<2x8xf32>
    %69 = vector.shape_cast %68 : vector<2x8xf32> to vector<2x8x1xf32>
    %70 = tpu.reciprocal %69 {approx = true} : vector<2x8x1xf32> -> vector<2x8x1xf32>
    %71 = vector.broadcast %70 : vector<2x8x1xf32> to vector<2x8x8xf32>
    %72 = arith.mulf %67, %71 : vector<2x8x8xf32>
    %73 = arith.truncf %72 : vector<2x8x8xf32> to vector<2x8x8xbf16>
    "tpu.trace_start"() <{level = 10 : i32, message = "bqk,bkd->bqd"}> : () -> ()
    %cst_23 = arith.constant dense<0.000000e+00> : vector<2x8x8xf32>
    %74 = tpu.matmul %73, %59, %cst_23 {dimension_numbers = #tpu.dot_dimension_numbers<[2], [1], [1], [2], [0, 0, 0, 1, 1, 2], [0], [0]>} : vector<2x8x8xbf16>, vector<2x8x8xbf16>, vector<2x8x8xf32> -> vector<2x8x8xf32>
    "tpu.trace_stop"() : () -> ()
    %75 = vector.shape_cast %74 : vector<2x8x8xf32> to vector<16x8xf32>
    %76 = vector.extract_strided_slice %27 {offsets = [0, 0, 16], sizes = [2, 8, 8], strides = [1, 1, 1]} : vector<2x8x32xf32> to vector<2x8x8xf32>
    %77 = arith.truncf %76 : vector<2x8x8xf32> to vector<2x8x8xbf16>
    %78 = vector.extract_strided_slice %29 {offsets = [0, 0, 16], sizes = [2, 8, 8], strides = [1, 1, 1]} : vector<2x8x32xf32> to vector<2x8x8xf32>
    %79 = arith.truncf %78 : vector<2x8x8xf32> to vector<2x8x8xbf16>
    %80 = vector.extract_strided_slice %31 {offsets = [0, 0, 16], sizes = [2, 8, 8], strides = [1, 1, 1]} : vector<2x8x32xf32> to vector<2x8x8xf32>
    %81 = arith.truncf %80 : vector<2x8x8xf32> to vector<2x8x8xbf16>
    "tpu.trace_start"() <{level = 10 : i32, message = "bqd,bkd->bqk"}> : () -> ()
    %cst_24 = arith.constant dense<0.000000e+00> : vector<2x8x8xf32>
    %82 = tpu.matmul %77, %79, %cst_24 {dimension_numbers = #tpu.dot_dimension_numbers<[2], [2], [1], [1], [0, 0, 0, 1, 1, 1], [0], [0]>} : vector<2x8x8xbf16>, vector<2x8x8xbf16>, vector<2x8x8xf32> -> vector<2x8x8xf32>
    "tpu.trace_stop"() : () -> ()
    %cst_25 = arith.constant 0.353553385 : f32
    %83 = vector.broadcast %cst_25 : f32 to vector<2x8x8xf32>
    %84 = arith.mulf %82, %83 : vector<2x8x8xf32>
    %cst_26 = arith.constant dense<0xFF800000> : vector<2x8xf32>
    %85 = vector.multi_reduction <maximumf>, %84, %cst_26 [2] : vector<2x8x8xf32> to vector<2x8xf32>
    %86 = vector.shape_cast %85 : vector<2x8xf32> to vector<2x8x1xf32>
    %87 = vector.broadcast %86 : vector<2x8x1xf32> to vector<2x8x8xf32>
    %88 = arith.subf %84, %87 : vector<2x8x8xf32>
    %89 = math.exp %88 : vector<2x8x8xf32>
    %cst_27 = arith.constant dense<0.000000e+00> : vector<2x8xf32>
    %90 = vector.multi_reduction <add>, %89, %cst_27 [2] : vector<2x8x8xf32> to vector<2x8xf32>
    %91 = vector.shape_cast %90 : vector<2x8xf32> to vector<2x8x1xf32>
    %92 = tpu.reciprocal %91 {approx = true} : vector<2x8x1xf32> -> vector<2x8x1xf32>
    %93 = vector.broadcast %92 : vector<2x8x1xf32> to vector<2x8x8xf32>
    %94 = arith.mulf %89, %93 : vector<2x8x8xf32>
    %95 = arith.truncf %94 : vector<2x8x8xf32> to vector<2x8x8xbf16>
    "tpu.trace_start"() <{level = 10 : i32, message = "bqk,bkd->bqd"}> : () -> ()
    %cst_28 = arith.constant dense<0.000000e+00> : vector<2x8x8xf32>
    %96 = tpu.matmul %95, %81, %cst_28 {dimension_numbers = #tpu.dot_dimension_numbers<[2], [1], [1], [2], [0, 0, 0, 1, 1, 2], [0], [0]>} : vector<2x8x8xbf16>, vector<2x8x8xbf16>, vector<2x8x8xf32> -> vector<2x8x8xf32>
    "tpu.trace_stop"() : () -> ()
    %97 = vector.shape_cast %96 : vector<2x8x8xf32> to vector<16x8xf32>
    %98 = vector.extract_strided_slice %27 {offsets = [0, 0, 24], sizes = [2, 8, 8], strides = [1, 1, 1]} : vector<2x8x32xf32> to vector<2x8x8xf32>
    %99 = arith.truncf %98 : vector<2x8x8xf32> to vector<2x8x8xbf16>
    %100 = vector.extract_strided_slice %29 {offsets = [0, 0, 24], sizes = [2, 8, 8], strides = [1, 1, 1]} : vector<2x8x32xf32> to vector<2x8x8xf32>
    %101 = arith.truncf %100 : vector<2x8x8xf32> to vector<2x8x8xbf16>
    %102 = vector.extract_strided_slice %31 {offsets = [0, 0, 24], sizes = [2, 8, 8], strides = [1, 1, 1]} : vector<2x8x32xf32> to vector<2x8x8xf32>
    %103 = arith.truncf %102 : vector<2x8x8xf32> to vector<2x8x8xbf16>
    "tpu.trace_start"() <{level = 10 : i32, message = "bqd,bkd->bqk"}> : () -> ()
    %cst_29 = arith.constant dense<0.000000e+00> : vector<2x8x8xf32>
    %104 = tpu.matmul %99, %101, %cst_29 {dimension_numbers = #tpu.dot_dimension_numbers<[2], [2], [1], [1], [0, 0, 0, 1, 1, 1], [0], [0]>} : vector<2x8x8xbf16>, vector<2x8x8xbf16>, vector<2x8x8xf32> -> vector<2x8x8xf32>
    "tpu.trace_stop"() : () -> ()
    %cst_30 = arith.constant 0.353553385 : f32
    %105 = vector.broadcast %cst_30 : f32 to vector<2x8x8xf32>
    %106 = arith.mulf %104, %105 : vector<2x8x8xf32>
    %cst_31 = arith.constant dense<0xFF800000> : vector<2x8xf32>
    %107 = vector.multi_reduction <maximumf>, %106, %cst_31 [2] : vector<2x8x8xf32> to vector<2x8xf32>
    %108 = vector.shape_cast %107 : vector<2x8xf32> to vector<2x8x1xf32>
    %109 = vector.broadcast %108 : vector<2x8x1xf32> to vector<2x8x8xf32>
    %110 = arith.subf %106, %109 : vector<2x8x8xf32>
    %111 = math.exp %110 : vector<2x8x8xf32>
    %cst_32 = arith.constant dense<0.000000e+00> : vector<2x8xf32>
    %112 = vector.multi_reduction <add>, %111, %cst_32 [2] : vector<2x8x8xf32> to vector<2x8xf32>
    %113 = vector.shape_cast %112 : vector<2x8xf32> to vector<2x8x1xf32>
    %114 = tpu.reciprocal %113 {approx = true} : vector<2x8x1xf32> -> vector<2x8x1xf32>
    %115 = vector.broadcast %114 : vector<2x8x1xf32> to vector<2x8x8xf32>
    %116 = arith.mulf %111, %115 : vector<2x8x8xf32>
    %117 = arith.truncf %116 : vector<2x8x8xf32> to vector<2x8x8xbf16>
    "tpu.trace_start"() <{level = 10 : i32, message = "bqk,bkd->bqd"}> : () -> ()
    %cst_33 = arith.constant dense<0.000000e+00> : vector<2x8x8xf32>
    %118 = tpu.matmul %117, %103, %cst_33 {dimension_numbers = #tpu.dot_dimension_numbers<[2], [1], [1], [2], [0, 0, 0, 1, 1, 2], [0], [0]>} : vector<2x8x8xbf16>, vector<2x8x8xbf16>, vector<2x8x8xf32> -> vector<2x8x8xf32>
    "tpu.trace_stop"() : () -> ()
    %119 = vector.shape_cast %118 : vector<2x8x8xf32> to vector<16x8xf32>
    %120 = tpu.concatenate %53, %75, %97, %119 in 1 : vector<16x8xf32>, vector<16x8xf32>, vector<16x8xf32>, vector<16x8xf32> -> vector<16x32xf32>
    %121 = arith.truncf %120 : vector<16x32xf32> to vector<16x32xbf16>
    %c0_34 = arith.constant 0 : index
    %c0_35 = arith.constant 0 : index
    %c0_36 = arith.constant 0 : index
    %122 = vector.load %arg5[%c0_34, %c0_35, %c0_36] : memref<1x32x32xbf16, #tpu.memory_space<vmem>>, vector<1x32x32xbf16>
    %123 = vector.shape_cast %122 : vector<1x32x32xbf16> to vector<32x32xbf16>
    %cst_37 = arith.constant dense<0.000000e+00> : vector<16x32xf32>
    %124 = tpu.matmul %121, %123, %cst_37 {dimension_numbers = #tpu.dot_dimension_numbers<[1], [0], [0], [1], [0, 0, 1, 1], [], []>} : vector<16x32xbf16>, vector<32x32xbf16>, vector<16x32xf32> -> vector<16x32xf32>
    %c0_38 = arith.constant 0 : index
    %c0_39 = arith.constant 0 : index
    %c0_40 = arith.constant 0 : index
    %125 = vector.load %arg6[%c0_38, %c0_39, %c0_40] : memref<1x1x32xf32, #tpu.memory_space<vmem>>, vector<1x1x32xf32>
    %126 = vector.shape_cast %125 : vector<1x1x32xf32> to vector<1x32xf32>
    %127 = vector.broadcast %126 : vector<1x32xf32> to vector<16x32xf32>
    %128 = arith.addf %124, %127 : vector<16x32xf32>
    %129 = arith.addf %3, %128 : vector<16x32xf32>
    %c0_41 = arith.constant 0 : index
    %c0_42 = arith.constant 0 : index
    %c0_43 = arith.constant 0 : index
    %130 = vector.load %arg7[%c0_41, %c0_42, %c0_43] : memref<1x1x32xf32, #tpu.memory_space<vmem>>, vector<1x1x32xf32>
    %131 = vector.shape_cast %130 : vector<1x1x32xf32> to vector<1x32xf32>
    %132 = arith.mulf %129, %129 : vector<16x32xf32>
    %cst_44 = arith.constant dense<0.000000e+00> : vector<16xf32>
    %133 = vector.multi_reduction <add>, %132, %cst_44 [1] : vector<16x32xf32> to vector<16xf32>
    %134 = vector.shape_cast %133 : vector<16xf32> to vector<16x1xf32>
    %cst_45 = arith.constant 3.200000e+01 : f32
    %135 = vector.broadcast %cst_45 : f32 to vector<16x1xf32>
    %136 = arith.divf %134, %135 : vector<16x1xf32>
    %cst_46 = arith.constant 1.1920929E-7 : f32
    %137 = vector.broadcast %cst_46 : f32 to vector<16x1xf32>
    %138 = arith.addf %136, %137 : vector<16x1xf32>
    %139 = math.rsqrt %138 : vector<16x1xf32>
    %140 = vector.broadcast %139 : vector<16x1xf32> to vector<16x32xf32>
    %141 = arith.mulf %129, %140 : vector<16x32xf32>
    %142 = vector.broadcast %131 : vector<1x32xf32> to vector<16x32xf32>
    %143 = arith.mulf %141, %142 : vector<16x32xf32>
    %c0_47 = arith.constant 0 : index
    %c0_48 = arith.constant 0 : index
    %c0_49 = arith.constant 0 : index
    %144 = vector.load %arg8[%c0_47, %c0_48, %c0_49] : memref<1x32x8xf32, #tpu.memory_space<vmem>>, vector<1x32x8xf32>
    %145 = vector.shape_cast %144 : vector<1x32x8xf32> to vector<32x8xf32>
    %cst_50 = arith.constant dense<0.000000e+00> : vector<16x8xf32>
    %146 = tpu.matmul %143, %145, %cst_50 {dimension_numbers = #tpu.dot_dimension_numbers<[1], [0], [0], [1], [0, 0, 1, 1], [], []>} : vector<16x32xf32>, vector<32x8xf32>, vector<16x8xf32> -> vector<16x8xf32>
    %cst_51 = arith.constant dense<0xFF800000> : vector<16xf32>
    %147 = vector.multi_reduction <maximumf>, %146, %cst_51 [1] : vector<16x8xf32> to vector<16xf32>
    %148 = vector.shape_cast %147 : vector<16xf32> to vector<16x1xf32>
    %149 = vector.broadcast %148 : vector<16x1xf32> to vector<16x8xf32>
    %150 = arith.subf %146, %149 : vector<16x8xf32>
    %151 = math.exp %150 : vector<16x8xf32>
    %cst_52 = arith.constant dense<0.000000e+00> : vector<16xf32>
    %152 = vector.multi_reduction <add>, %151, %cst_52 [1] : vector<16x8xf32> to vector<16xf32>
    %153 = vector.shape_cast %152 : vector<16xf32> to vector<16x1xf32>
    %154 = tpu.reciprocal %153 {approx = true} : vector<16x1xf32> -> vector<16x1xf32>
    %155 = vector.broadcast %154 : vector<16x1xf32> to vector<16x8xf32>
    %156 = arith.mulf %151, %155 : vector<16x8xf32>
    %cst_53 = arith.constant dense<0xFF800000> : vector<16xf32>
    %157 = vector.multi_reduction <maximumf>, %156, %cst_53 [1] : vector<16x8xf32> to vector<16xf32>
    %158 = vector.shape_cast %157 : vector<16xf32> to vector<16x1xf32>
    %159 = vector.broadcast %158 : vector<16x1xf32> to vector<16x8xf32>
    %160 = arith.cmpf oge, %156, %159 : vector<16x8xf32>
    %cst_54 = arith.constant 0xFF800000 : f32
    %161 = vector.broadcast %cst_54 : f32 to vector<16x8xf32>
    %162 = arith.select %160, %161, %156 : vector<16x8xi1>, vector<16x8xf32>
    %cst_55 = arith.constant dense<0xFF800000> : vector<16xf32>
    %163 = vector.multi_reduction <maximumf>, %162, %cst_55 [1] : vector<16x8xf32> to vector<16xf32>
    %164 = vector.shape_cast %163 : vector<16xf32> to vector<16x1xf32>
    %165 = vector.broadcast %164 : vector<16x1xf32> to vector<16x8xf32>
    %166 = arith.cmpf oge, %162, %165 : vector<16x8xf32>
    %167 = arith.ori %160, %166 : vector<16x8xi1>
    %cst_56 = arith.constant 0.000000e+00 : f32
    %168 = vector.broadcast %cst_56 : f32 to vector<16x8xf32>
    %169 = arith.select %167, %156, %168 : vector<16x8xi1>, vector<16x8xf32>
    %cst_57 = arith.constant dense<0.000000e+00> : vector<16xf32>
    %170 = vector.multi_reduction <add>, %169, %cst_57 [1] : vector<16x8xf32> to vector<16xf32>
    %171 = vector.shape_cast %170 : vector<16xf32> to vector<16x1xf32>
    %172 = tpu.reciprocal %171 {approx = true} : vector<16x1xf32> -> vector<16x1xf32>
    %173 = vector.broadcast %172 : vector<16x1xf32> to vector<16x8xf32>
    %174 = arith.mulf %169, %173 : vector<16x8xf32>
    %175 = arith.truncf %143 : vector<16x32xf32> to vector<16x32xbf16>
    %c0_58 = arith.constant 0 : index
    %c0_59 = arith.constant 0 : index
    %c0_60 = arith.constant 0 : index
    %176 = vector.load %arg9[%c0_58, %c0_59, %c0_60] : memref<1x32x256xbf16, #tpu.memory_space<vmem>>, vector<1x32x256xbf16>
    %177 = vector.shape_cast %176 : vector<1x32x256xbf16> to vector<32x256xbf16>
    %cst_61 = arith.constant dense<0.000000e+00> : vector<16x256xf32>
    %178 = tpu.matmul %175, %177, %cst_61 {dimension_numbers = #tpu.dot_dimension_numbers<[1], [0], [0], [1], [0, 0, 1, 1], [], []>} : vector<16x32xbf16>, vector<32x256xbf16>, vector<16x256xf32> -> vector<16x256xf32>
    %c0_62 = arith.constant 0 : index
    %c0_63 = arith.constant 0 : index
    %c0_64 = arith.constant 0 : index
    %179 = vector.load %arg10[%c0_62, %c0_63, %c0_64] : memref<1x1x256xf32, #tpu.memory_space<vmem>>, vector<1x1x256xf32>
    %180 = vector.shape_cast %179 : vector<1x1x256xf32> to vector<1x256xf32>
    %181 = vector.broadcast %180 : vector<1x256xf32> to vector<16x256xf32>
    %182 = arith.addf %178, %181 : vector<16x256xf32>
    %cst_65 = arith.constant 0.000000e+00 : f32
    %183 = vector.broadcast %cst_65 : f32 to vector<16x256xf32>
    %184 = arith.maximumf %182, %183 : vector<16x256xf32>
    %185 = tpu.iota {dimensions = array<i32: 0>} : vector<8x256xi32>
    %186 = tpu.iota {dimensions = array<i32: 1>} : vector<8x256xi32>
    %c32_i32 = arith.constant 32 : i32
    %187 = vector.broadcast %c32_i32 : i32 to vector<8x256xi32>
    %188 = arith.muli %185, %187 : vector<8x256xi32>
    %189 = arith.cmpi sge, %186, %188 : vector<8x256xi32>
    %c1_i32 = arith.constant 1 : i32
    %190 = vector.broadcast %c1_i32 : i32 to vector<8x256xi32>
    %191 = arith.addi %185, %190 : vector<8x256xi32>
    %c32_i32_66 = arith.constant 32 : i32
    %192 = vector.broadcast %c32_i32_66 : i32 to vector<8x256xi32>
    %193 = arith.muli %191, %192 : vector<8x256xi32>
    %194 = arith.cmpi slt, %186, %193 : vector<8x256xi32>
    %195 = arith.andi %189, %194 : vector<8x256xi1>
    %196 = arith.extui %195 : vector<8x256xi1> to vector<8x256xi32>
    %197 = arith.sitofp %196 : vector<8x256xi32> to vector<8x256xf32>
    %cst_67 = arith.constant dense<0.000000e+00> : vector<16x256xf32>
    %198 = tpu.matmul %174, %197, %cst_67 {dimension_numbers = #tpu.dot_dimension_numbers<[1], [0], [0], [1], [0, 0, 1, 1], [], []>} : vector<16x8xf32>, vector<8x256xf32>, vector<16x256xf32> -> vector<16x256xf32>
    %199 = arith.mulf %184, %198 : vector<16x256xf32>
    %200 = arith.truncf %199 : vector<16x256xf32> to vector<16x256xbf16>
    %c0_68 = arith.constant 0 : index
    %c0_69 = arith.constant 0 : index
    %c0_70 = arith.constant 0 : index
    %201 = vector.load %arg11[%c0_68, %c0_69, %c0_70] : memref<1x256x32xbf16, #tpu.memory_space<vmem>>, vector<1x256x32xbf16>
    %202 = vector.shape_cast %201 : vector<1x256x32xbf16> to vector<256x32xbf16>
    %cst_71 = arith.constant dense<0.000000e+00> : vector<16x32xf32>
    %203 = tpu.matmul %200, %202, %cst_71 {dimension_numbers = #tpu.dot_dimension_numbers<[1], [0], [0], [1], [0, 0, 1, 1], [], []>} : vector<16x256xbf16>, vector<256x32xbf16>, vector<16x32xf32> -> vector<16x32xf32>
    %c0_72 = arith.constant 0 : index
    %c0_73 = arith.constant 0 : index
    %c0_74 = arith.constant 0 : index
    %204 = vector.load %arg12[%c0_72, %c0_73, %c0_74] : memref<1x8x32xf32, #tpu.memory_space<vmem>>, vector<1x8x32xf32>
    %205 = vector.shape_cast %204 : vector<1x8x32xf32> to vector<8x32xf32>
    %cst_75 = arith.constant dense<0.000000e+00> : vector<16x32xf32>
    %206 = tpu.matmul %174, %205, %cst_75 {dimension_numbers = #tpu.dot_dimension_numbers<[1], [0], [0], [1], [0, 0, 1, 1], [], []>} : vector<16x8xf32>, vector<8x32xf32>, vector<16x32xf32> -> vector<16x32xf32>
    %207 = arith.addf %203, %206 : vector<16x32xf32>
    %c0_76 = arith.constant 0 : index
    %c0_77 = arith.constant 0 : index
    %c0_78 = arith.constant 0 : index
    %208 = vector.load %arg13[%c0_76, %c0_77, %c0_78] : memref<1x32x32xbf16, #tpu.memory_space<vmem>>, vector<1x32x32xbf16>
    %209 = vector.shape_cast %208 : vector<1x32x32xbf16> to vector<32x32xbf16>
    %cst_79 = arith.constant dense<0.000000e+00> : vector<16x32xf32>
    %210 = tpu.matmul %175, %209, %cst_79 {dimension_numbers = #tpu.dot_dimension_numbers<[1], [0], [0], [1], [0, 0, 1, 1], [], []>} : vector<16x32xbf16>, vector<32x32xbf16>, vector<16x32xf32> -> vector<16x32xf32>
    %c0_80 = arith.constant 0 : index
    %c0_81 = arith.constant 0 : index
    %c0_82 = arith.constant 0 : index
    %211 = vector.load %arg14[%c0_80, %c0_81, %c0_82] : memref<1x1x32xf32, #tpu.memory_space<vmem>>, vector<1x1x32xf32>
    %212 = vector.shape_cast %211 : vector<1x1x32xf32> to vector<1x32xf32>
    %213 = vector.broadcast %212 : vector<1x32xf32> to vector<16x32xf32>
    %214 = arith.addf %210, %213 : vector<16x32xf32>
    %cst_83 = arith.constant 0.000000e+00 : f32
    %215 = vector.broadcast %cst_83 : f32 to vector<16x32xf32>
    %216 = arith.maximumf %214, %215 : vector<16x32xf32>
    %217 = arith.truncf %216 : vector<16x32xf32> to vector<16x32xbf16>
    %c0_84 = arith.constant 0 : index
    %c0_85 = arith.constant 0 : index
    %c0_86 = arith.constant 0 : index
    %218 = vector.load %arg15[%c0_84, %c0_85, %c0_86] : memref<1x32x32xbf16, #tpu.memory_space<vmem>>, vector<1x32x32xbf16>
    %219 = vector.shape_cast %218 : vector<1x32x32xbf16> to vector<32x32xbf16>
    %cst_87 = arith.constant dense<0.000000e+00> : vector<16x32xf32>
    %220 = tpu.matmul %217, %219, %cst_87 {dimension_numbers = #tpu.dot_dimension_numbers<[1], [0], [0], [1], [0, 0, 1, 1], [], []>} : vector<16x32xbf16>, vector<32x32xbf16>, vector<16x32xf32> -> vector<16x32xf32>
    %c0_88 = arith.constant 0 : index
    %c0_89 = arith.constant 0 : index
    %c0_90 = arith.constant 0 : index
    %221 = vector.load %arg16[%c0_88, %c0_89, %c0_90] : memref<1x1x32xf32, #tpu.memory_space<vmem>>, vector<1x1x32xf32>
    %222 = vector.shape_cast %221 : vector<1x1x32xf32> to vector<1x32xf32>
    %223 = vector.broadcast %222 : vector<1x32xf32> to vector<16x32xf32>
    %224 = arith.addf %220, %223 : vector<16x32xf32>
    %225 = arith.addf %129, %207 : vector<16x32xf32>
    %226 = arith.addf %225, %224 : vector<16x32xf32>
    %c0_91 = arith.constant 0 : index
    %c0_92 = arith.constant 0 : index
    %227 = vector.load %arg17[%c0_91, %c0_92] : memref<16x32xf32, #tpu.memory_space<vmem>>, vector<16x32xf32>
    tpu.vector_store %arg17[%c0_91, %c0_92], %226 {strides = array<i32>} : memref<16x32xf32, #tpu.memory_space<vmem>>, vector<16x32xf32>,
    return
  }
  func.func @transform_0(%arg0: i32) -> (i32, i32) {
    %c0_i32 = arith.constant 0 : i32
    %c0_i32_0 = arith.constant 0 : i32
    %c0_i32_1 = arith.constant 0 : i32
    return %c0_i32, %c0_i32_0 : i32, i32
  }
  func.func @transform_1(%arg0: i32) -> (i32, i32, i32) {
    %c0_i32 = arith.constant 0 : i32
    %c0_i32_0 = arith.constant 0 : i32
    %c0_i32_1 = arith.constant 0 : i32
    return %arg0, %c0_i32, %c0_i32_0 : i32, i32, i32
  }
  func.func @transform_2(%arg0: i32) -> (i32, i32, i32) {
    %c0_i32 = arith.constant 0 : i32
    %c0_i32_0 = arith.constant 0 : i32
    %c0_i32_1 = arith.constant 0 : i32
    return %arg0, %c0_i32, %c0_i32_0 : i32, i32, i32
  }
  func.func @transform_3(%arg0: i32) -> (i32, i32, i32) {
    %c0_i32 = arith.constant 0 : i32
    %c0_i32_0 = arith.constant 0 : i32
    %c0_i32_1 = arith.constant 0 : i32
    return %arg0, %c0_i32, %c0_i32_0 : i32, i32, i32
  }
  func.func @transform_4(%arg0: i32) -> (i32, i32, i32) {
    %c0_i32 = arith.constant 0 : i32
    %c0_i32_0 = arith.constant 0 : i32
    %c0_i32_1 = arith.constant 0 : i32
    return %arg0, %c0_i32, %c0_i32_0 : i32, i32, i32
  }
  func.func @transform_5(%arg0: i32) -> (i32, i32, i32) {
    %c0_i32 = arith.constant 0 : i32
    %c0_i32_0 = arith.constant 0 : i32
    %c0_i32_1 = arith.constant 0 : i32
    return %arg0, %c0_i32, %c0_i32_0 : i32, i32, i32
  }
  func.func @transform_6(%arg0: i32) -> (i32, i32, i32) {
    %c0_i32 = arith.constant 0 : i32
    %c0_i32_0 = arith.constant 0 : i32
    %c0_i32_1 = arith.constant 0 : i32
    return %arg0, %c0_i32, %c0_i32_0 : i32, i32, i32
  }
  func.func @transform_7(%arg0: i32) -> (i32, i32, i32) {
    %c0_i32 = arith.constant 0 : i32
    %c0_i32_0 = arith.constant 0 : i32
    %c0_i32_1 = arith.constant 0 : i32
    return %arg0, %c0_i32, %c0_i32_0 : i32, i32, i32
  }
  func.func @transform_8(%arg0: i32) -> (i32, i32, i32) {
    %c0_i32 = arith.constant 0 : i32
    %c0_i32_0 = arith.constant 0 : i32
    %c0_i32_1 = arith.constant 0 : i32
    return %arg0, %c0_i32, %c0_i32_0 : i32, i32, i32
  }
  func.func @transform_9(%arg0: i32) -> (i32, i32, i32) {
    %c0_i32 = arith.constant 0 : i32
    %c0_i32_0 = arith.constant 0 : i32
    %c0_i32_1 = arith.constant 0 : i32
    return %arg0, %c0_i32, %c0_i32_0 : i32, i32, i32
  }
  func.func @transform_10(%arg0: i32) -> (i32, i32, i32) {
    %c0_i32 = arith.constant 0 : i32
    %c0_i32_0 = arith.constant 0 : i32
    %c0_i32_1 = arith.constant 0 : i32
    return %arg0, %c0_i32, %c0_i32_0 : i32, i32, i32
  }
  func.func @transform_11(%arg0: i32) -> (i32, i32, i32) {
    %c0_i32 = arith.constant 0 : i32
    %c0_i32_0 = arith.constant 0 : i32
    %c0_i32_1 = arith.constant 0 : i32
    return %arg0, %c0_i32, %c0_i32_0 : i32, i32, i32
  }
  func.func @transform_12(%arg0: i32) -> (i32, i32, i32) {
    %c0_i32 = arith.constant 0 : i32
    %c0_i32_0 = arith.constant 0 : i32
    %c0_i32_1 = arith.constant 0 : i32
    return %arg0, %c0_i32, %c0_i32_0 : i32, i32, i32
  }
  func.func @transform_13(%arg0: i32) -> (i32, i32, i32) {
    %c0_i32 = arith.constant 0 : i32
    %c0_i32_0 = arith.constant 0 : i32
    %c0_i32_1 = arith.constant 0 : i32
    return %arg0, %c0_i32, %c0_i32_0 : i32, i32, i32
  }
  func.func @transform_14(%arg0: i32) -> (i32, i32, i32) {
    %c0_i32 = arith.constant 0 : i32
    %c0_i32_0 = arith.constant 0 : i32
    %c0_i32_1 = arith.constant 0 : i32
    return %arg0, %c0_i32, %c0_i32_0 : i32, i32, i32
  }
  func.func @transform_15(%arg0: i32) -> (i32, i32, i32) {
    %c0_i32 = arith.constant 0 : i32
    %c0_i32_0 = arith.constant 0 : i32
    %c0_i32_1 = arith.constant 0 : i32
    return %arg0, %c0_i32, %c0_i32_0 : i32, i32, i32
  }
  func.func @transform_16(%arg0: i32) -> (i32, i32) {
    %c0_i32 = arith.constant 0 : i32
    %c0_i32_0 = arith.constant 0 : i32
    %c0_i32_1 = arith.constant 0 : i32
    return %c0_i32, %c0_i32_0 : i32, i32
  }
}

</mosaic_0001>

<llo_original>
// kernel: tpu_custom_call.1
$region0: #{tpu_custom_call.1}
  #allocation0 [shape = 'u32[]', space=smem, size = 0x4, offset = 0x4, fixed_abs, tag = 'smem constant byte address 0x4 - core index']
  #allocation1 [shape = 'u32[144,128]{1,0:T(1,128)}', space=vmem, size = 0x12000, scoped, tag = 'internal scratch']
  %s0 = inlined_call_operand.vmem [shape: f32[16,32], index: 0, kind: input, shape index: {}]
  %s1 = inlined_call_operand.vmem [shape: f32[2,1,32], index: 1, kind: input, shape index: {}]
  %s2 = inlined_call_operand.vmem [shape: bf16[2,32,96], index: 2, kind: input, shape index: {}]
  %s3 = inlined_call_operand.vmem [shape: f32[2,1,96], index: 3, kind: input, shape index: {}]
  %s4 = inlined_call_operand.vmem [shape: bf16[2,32,32], index: 4, kind: input, shape index: {}]
  %s5 = inlined_call_operand.vmem [shape: f32[2,1,32], index: 5, kind: input, shape index: {}]
  %s6 = inlined_call_operand.vmem [shape: f32[2,1,32], index: 6, kind: input, shape index: {}]
  %s7 = inlined_call_operand.vmem [shape: f32[2,32,8], index: 7, kind: input, shape index: {}]
  %s8 = inlined_call_operand.vmem [shape: bf16[2,32,256], index: 8, kind: input, shape index: {}]
  %s9 = inlined_call_operand.vmem [shape: f32[2,1,256], index: 9, kind: input, shape index: {}]
  %s10 = inlined_call_operand.vmem [shape: bf16[2,256,32], index: 10, kind: input, shape index: {}]
  %s11 = inlined_call_operand.vmem [shape: f32[2,8,32], index: 11, kind: input, shape index: {}]
  %s12 = inlined_call_operand.vmem [shape: bf16[2,32,32], index: 12, kind: input, shape index: {}]
  %s13 = inlined_call_operand.vmem [shape: f32[2,1,32], index: 13, kind: input, shape index: {}]
  %s14 = inlined_call_operand.vmem [shape: bf16[2,32,32], index: 14, kind: input, shape index: {}]
  %s15 = inlined_call_operand.vmem [shape: f32[2,1,32], index: 15, kind: input, shape index: {}]
  %s16 = inlined_call_operand.hbm [shape: f32[16,32], index: 16, kind: output, shape index: {}]
  %s17 = sld [smem:[#allocation0]]
  $region101: #{tpu_custom_call.1} parent=0
    _
  %s19 = ssub.s32 1, %s17
  %s20 = scalar_select 0, %s19, %s17
  $region1: #{tpu_custom_call.1} parent=0
    #allocation2 [shape = 'u8[8192]{0}', space=vmem, size = 0x2000, scoped, tag = 'output window, operand 0, single buffered']
    #allocation3 [shape = 's32[2]{0}', space=sflag, size = 0x8, scoped, tag = 'scoped memory for tpu_custom_call.1']
    %21 = vsyncpa [#allocation3], 0
    loop: start=0, step=1, limit=4
    $region2: #{tpu_custom_call.1} parent=1 // loop_pre_header
      _
    $region3: #{tpu_custom_call.1} parent=1 // loop_header
      %s23 = sphi 0, %s27
      %p24 = scmp.ge.s32.totalorder %s23, 4
      %s31 = sphi 0, %s31
      %s33 = sphi 0, %s31
      %s34 = sphi 0, %s33
      %s48 = sphi 0, %s34
      %s54 = sphi 0, %s56
      %s57 = sphi 0, %s54
      %s58 = sphi 0, %s57
      %s74 = sphi 0, %s58
      %s80 = sphi 0, %s82
      %s83 = sphi 0, %s80
      %s84 = sphi 0, %s83
      %s100 = sphi 0, %s84
      %s106 = sphi 0, %s108
      %s109 = sphi 0, %s106
      %s110 = sphi 0, %s109
      %s126 = sphi 0, %s110
      %s132 = sphi 0, %s134
      %s135 = sphi 0, %s132
      %s136 = sphi 0, %s135
      %s152 = sphi 0, %s136
      %s158 = sphi 0, %s160
      %s161 = sphi 0, %s158
      %s162 = sphi 0, %s161
      %s178 = sphi 0, %s162
      %s184 = sphi 0, %s186
      %s187 = sphi 0, %s184
      %s188 = sphi 0, %s187
      %s204 = sphi 0, %s188
      %s210 = sphi 0, %s212
      %s213 = sphi 0, %s210
      %s214 = sphi 0, %s213
      %s230 = sphi 0, %s214
      %s236 = sphi 0, %s238
      %s239 = sphi 0, %s236
      %s240 = sphi 0, %s239
      %s256 = sphi 0, %s240
      %s262 = sphi 0, %s264
      %s265 = sphi 0, %s262
      %s266 = sphi 0, %s265
      %s282 = sphi 0, %s266
      %s288 = sphi 0, %s290
      %s291 = sphi 0, %s288
      %s292 = sphi 0, %s291
      %s308 = sphi 0, %s292
      %s314 = sphi 0, %s316
      %s317 = sphi 0, %s314
      %s318 = sphi 0, %s317
      %s334 = sphi 0, %s318
      %s340 = sphi 0, %s342
      %s343 = sphi 0, %s340
      %s344 = sphi 0, %s343
      %s360 = sphi 0, %s344
      %s366 = sphi 0, %s368
      %s369 = sphi 0, %s366
      %s370 = sphi 0, %s369
      %s386 = sphi 0, %s370
      %s392 = sphi 0, %s394
      %s395 = sphi 0, %s392
      %s396 = sphi 0, %s395
      %s412 = sphi 0, %s396
      %s418 = sphi 0, %s420
      %s421 = sphi 0, %s418
      %s422 = sphi 0, %s421
      %s438 = sphi 0, %s422
      %s442 = sphi 0, %s442
      %s444 = sphi 0, %s442
      %s445 = sphi 0, %s444
      %s459 = sphi 0, %s445
    $region4: #{tpu_custom_call.1} parent=1 // loop_header_branch
      %26 = sbr.rel (%p24) target = $region8
    $region5: #{tpu_custom_call.1} parent=1 // loop_body
      %s28 = ssub.s32 %s23, 1
      %s29 = ssub.s32 %s23, 2
      %s30 = sadd.s32 %s23, 1
      %s32 = sadd.s32 %s31, 1
      %p35 = scmp.eq.s32.totalorder %s23, 1
      %p36 = scmp.ne.s32.totalorder %s31, %s33
      %p37 = scmp.eq.s32.totalorder %s23, 0
      %p38 = por %p36, %p37
      %p39 = scmp.ne.s32.totalorder %s31, %s33
      %p40 = scmp.eq.s32.totalorder %s28, 1
      %p41 = por %p39, %p40
      %p42 = scmp.ne.s32.totalorder %s33, %s34
      %p43 = scmp.eq.s32.totalorder %s28, 0
      %p44 = por %p42, %p43
      %p45 = scmp.ne.s32.totalorder %s33, %s34
      %p46 = scmp.eq.s32.totalorder %s29, 1
      %p47 = por %p45, %p46
      %p49 = scmp.ne.s32.totalorder %s34, %s48
      %p50 = scmp.eq.s32.totalorder %s29, 0
      %p51 = por %p49, %p50
      %s52 = ssub.s32 %s23, %s30
      %p53 = scmp.eq.s32.totalorder %s52, 0
      %s55 = sadd.s32 %s54, 1
      %s56 = scalar_select %p53, %s54, %s55
      %p59 = pneg %p53
      %p60 = scmp.eq.s32.totalorder %s23, 1
      %p61 = por %p59, %p60
      %p62 = scmp.ne.s32.totalorder %s54, %s57
      %p63 = scmp.eq.s32.totalorder %s23, 0
      %p64 = por %p62, %p63
      %p65 = scmp.ne.s32.totalorder %s54, %s57
      %p66 = scmp.eq.s32.totalorder %s28, 1
      %p67 = por %p65, %p66
      %p68 = scmp.ne.s32.totalorder %s57, %s58
      %p69 = scmp.eq.s32.totalorder %s28, 0
      %p70 = por %p68, %p69
      %p71 = scmp.ne.s32.totalorder %s57, %s58
      %p72 = scmp.eq.s32.totalorder %s29, 1
      %p73 = por %p71, %p72
      %p75 = scmp.ne.s32.totalorder %s58, %s74
      %p76 = scmp.eq.s32.totalorder %s29, 0
      %p77 = por %p75, %p76
      %s78 = ssub.s32 %s23, %s30
      %p79 = scmp.eq.s32.totalorder %s78, 0
      %s81 = sadd.s32 %s80, 1
      %s82 = scalar_select %p79, %s80, %s81
      %p85 = pneg %p79
      %p86 = scmp.eq.s32.totalorder %s23, 1
      %p87 = por %p85, %p86
      %p88 = scmp.ne.s32.totalorder %s80, %s83
      %p89 = scmp.eq.s32.totalorder %s23, 0
      %p90 = por %p88, %p89
      %p91 = scmp.ne.s32.totalorder %s80, %s83
      %p92 = scmp.eq.s32.totalorder %s28, 1
      %p93 = por %p91, %p92
      %p94 = scmp.ne.s32.totalorder %s83, %s84
      %p95 = scmp.eq.s32.totalorder %s28, 0
      %p96 = por %p94, %p95
      %p97 = scmp.ne.s32.totalorder %s83, %s84
      %p98 = scmp.eq.s32.totalorder %s29, 1
      %p99 = por %p97, %p98
      %p101 = scmp.ne.s32.totalorder %s84, %s100
      %p102 = scmp.eq.s32.totalorder %s29, 0
      %p103 = por %p101, %p102
      %s104 = ssub.s32 %s23, %s30
      %p105 = scmp.eq.s32.totalorder %s104, 0
      %s107 = sadd.s32 %s106, 1
      %s108 = scalar_select %p105, %s106, %s107
      %p111 = pneg %p105
      %p112 = scmp.eq.s32.totalorder %s23, 1
      %p113 = por %p111, %p112
      %p114 = scmp.ne.s32.totalorder %s106, %s109
      %p115 = scmp.eq.s32.totalorder %s23, 0
      %p116 = por %p114, %p115
      %p117 = scmp.ne.s32.totalorder %s106, %s109
      %p118 = scmp.eq.s32.totalorder %s28, 1
      %p119 = por %p117, %p118
      %p120 = scmp.ne.s32.totalorder %s109, %s110
      %p121 = scmp.eq.s32.totalorder %s28, 0
      %p122 = por %p120, %p121
      %p123 = scmp.ne.s32.totalorder %s109, %s110
      %p124 = scmp.eq.s32.totalorder %s29, 1
      %p125 = por %p123, %p124
      %p127 = scmp.ne.s32.totalorder %s110, %s126
      %p128 = scmp.eq.s32.totalorder %s29, 0
      %p129 = por %p127, %p128
      %s130 = ssub.s32 %s23, %s30
      %p131 = scmp.eq.s32.totalorder %s130, 0
      %s133 = sadd.s32 %s132, 1
      %s134 = scalar_select %p131, %s132, %s133
      %p137 = pneg %p131
      %p138 = scmp.eq.s32.totalorder %s23, 1
      %p139 = por %p137, %p138
      %p140 = scmp.ne.s32.totalorder %s132, %s135
      %p141 = scmp.eq.s32.totalorder %s23, 0
      %p142 = por %p140, %p141
      %p143 = scmp.ne.s32.totalorder %s132, %s135
      %p144 = scmp.eq.s32.totalorder %s28, 1
      %p145 = por %p143, %p144
      %p146 = scmp.ne.s32.totalorder %s135, %s136
      %p147 = scmp.eq.s32.totalorder %s28, 0
      %p148 = por %p146, %p147
      %p149 = scmp.ne.s32.totalorder %s135, %s136
      %p150 = scmp.eq.s32.totalorder %s29, 1
      %p151 = por %p149, %p150
      %p153 = scmp.ne.s32.totalorder %s136, %s152
      %p154 = scmp.eq.s32.totalorder %s29, 0
      %p155 = por %p153, %p154
      %s156 = ssub.s32 %s23, %s30
      %p157 = scmp.eq.s32.totalorder %s156, 0
      %s159 = sadd.s32 %s158, 1
      %s160 = scalar_select %p157, %s158, %s159
      %p163 = pneg %p157
      %p164 = scmp.eq.s32.totalorder %s23, 1
      %p165 = por %p163, %p164
      %p166 = scmp.ne.s32.totalorder %s158, %s161
      %p167 = scmp.eq.s32.totalorder %s23, 0
      %p168 = por %p166, %p167
      %p169 = scmp.ne.s32.totalorder %s158, %s161
      %p170 = scmp.eq.s32.totalorder %s28, 1
      %p171 = por %p169, %p170
      %p172 = scmp.ne.s32.totalorder %s161, %s162
      %p173 = scmp.eq.s32.totalorder %s28, 0
      %p174 = por %p172, %p173
      %p175 = scmp.ne.s32.totalorder %s161, %s162
      %p176 = scmp.eq.s32.totalorder %s29, 1
      %p177 = por %p175, %p176
      %p179 = scmp.ne.s32.totalorder %s162, %s178
      %p180 = scmp.eq.s32.totalorder %s29, 0
      %p181 = por %p179, %p180
      %s182 = ssub.s32 %s23, %s30
      %p183 = scmp.eq.s32.totalorder %s182, 0
      %s185 = sadd.s32 %s184, 1
      %s186 = scalar_select %p183, %s184, %s185
      %p189 = pneg %p183
      %p190 = scmp.eq.s32.totalorder %s23, 1
      %p191 = por %p189, %p190
      %p192 = scmp.ne.s32.totalorder %s184, %s187
      %p193 = scmp.eq.s32.totalorder %s23, 0
      %p194 = por %p192, %p193
      %p195 = scmp.ne.s32.totalorder %s184, %s187
      %p196 = scmp.eq.s32.totalorder %s28, 1
      %p197 = por %p195, %p196
      %p198 = scmp.ne.s32.totalorder %s187, %s188
      %p199 = scmp.eq.s32.totalorder %s28, 0
      %p200 = por %p198, %p199
      %p201 = scmp.ne.s32.totalorder %s187, %s188
      %p202 = scmp.eq.s32.totalorder %s29, 1
      %p203 = por %p201, %p202
      %p205 = scmp.ne.s32.totalorder %s188, %s204
      %p206 = scmp.eq.s32.totalorder %s29, 0
      %p207 = por %p205, %p206
      %s208 = ssub.s32 %s23, %s30
      %p209 = scmp.eq.s32.totalorder %s208, 0
      %s211 = sadd.s32 %s210, 1
      %s212 = scalar_select %p209, %s210, %s211
      %p215 = pneg %p209
      %p216 = scmp.eq.s32.totalorder %s23, 1
      %p217 = por %p215, %p216
      %p218 = scmp.ne.s32.totalorder %s210, %s213
      %p219 = scmp.eq.s32.totalorder %s23, 0
      %p220 = por %p218, %p219
      %p221 = scmp.ne.s32.totalorder %s210, %s213
      %p222 = scmp.eq.s32.totalorder %s28, 1
      %p223 = por %p221, %p222
      %p224 = scmp.ne.s32.totalorder %s213, %s214
      %p225 = scmp.eq.s32.totalorder %s28, 0
      %p226 = por %p224, %p225
      %p227 = scmp.ne.s32.totalorder %s213, %s214
      %p228 = scmp.eq.s32.totalorder %s29, 1
      %p229 = por %p227, %p228
      %p231 = scmp.ne.s32.totalorder %s214, %s230
      %p232 = scmp.eq.s32.totalorder %s29, 0
      %p233 = por %p231, %p232
      %s234 = ssub.s32 %s23, %s30
      %p235 = scmp.eq.s32.totalorder %s234, 0
      %s237 = sadd.s32 %s236, 1
      %s238 = scalar_select %p235, %s236, %s237
      %p241 = pneg %p235
      %p242 = scmp.eq.s32.totalorder %s23, 1
      %p243 = por %p241, %p242
      %p244 = scmp.ne.s32.totalorder %s236, %s239
      %p245 = scmp.eq.s32.totalorder %s23, 0
      %p246 = por %p244, %p245
      %p247 = scmp.ne.s32.totalorder %s236, %s239
      %p248 = scmp.eq.s32.totalorder %s28, 1
      %p249 = por %p247, %p248
      %p250 = scmp.ne.s32.totalorder %s239, %s240
      %p251 = scmp.eq.s32.totalorder %s28, 0
      %p252 = por %p250, %p251
      %p253 = scmp.ne.s32.totalorder %s239, %s240
      %p254 = scmp.eq.s32.totalorder %s29, 1
      %p255 = por %p253, %p254
      %p257 = scmp.ne.s32.totalorder %s240, %s256
      %p258 = scmp.eq.s32.totalorder %s29, 0
      %p259 = por %p257, %p258
      %s260 = ssub.s32 %s23, %s30
      %p261 = scmp.eq.s32.totalorder %s260, 0
      %s263 = sadd.s32 %s262, 1
      %s264 = scalar_select %p261, %s262, %s263
      %p267 = pneg %p261
      %p268 = scmp.eq.s32.totalorder %s23, 1
      %p269 = por %p267, %p268
      %p270 = scmp.ne.s32.totalorder %s262, %s265
      %p271 = scmp.eq.s32.totalorder %s23, 0
      %p272 = por %p270, %p271
      %p273 = scmp.ne.s32.totalorder %s262, %s265
      %p274 = scmp.eq.s32.totalorder %s28, 1
      %p275 = por %p273, %p274
      %p276 = scmp.ne.s32.totalorder %s265, %s266
      %p277 = scmp.eq.s32.totalorder %s28, 0
      %p278 = por %p276, %p277
      %p279 = scmp.ne.s32.totalorder %s265, %s266
      %p280 = scmp.eq.s32.totalorder %s29, 1
      %p281 = por %p279, %p280
      %p283 = scmp.ne.s32.totalorder %s266, %s282
      %p284 = scmp.eq.s32.totalorder %s29, 0
      %p285 = por %p283, %p284
      %s286 = ssub.s32 %s23, %s30
      %p287 = scmp.eq.s32.totalorder %s286, 0
      %s289 = sadd.s32 %s288, 1
      %s290 = scalar_select %p287, %s288, %s289
      %p293 = pneg %p287
      %p294 = scmp.eq.s32.totalorder %s23, 1
      %p295 = por %p293, %p294
      %p296 = scmp.ne.s32.totalorder %s288, %s291
      %p297 = scmp.eq.s32.totalorder %s23, 0
      %p298 = por %p296, %p297
      %p299 = scmp.ne.s32.totalorder %s288, %s291
      %p300 = scmp.eq.s32.totalorder %s28, 1
      %p301 = por %p299, %p300
      %p302 = scmp.ne.s32.totalorder %s291, %s292
      %p303 = scmp.eq.s32.totalorder %s28, 0
      %p304 = por %p302, %p303
      %p305 = scmp.ne.s32.totalorder %s291, %s292
      %p306 = scmp.eq.s32.totalorder %s29, 1
      %p307 = por %p305, %p306
      %p309 = scmp.ne.s32.totalorder %s292, %s308
      %p310 = scmp.eq.s32.totalorder %s29, 0
      %p311 = por %p309, %p310
      %s312 = ssub.s32 %s23, %s30
      %p313 = scmp.eq.s32.totalorder %s312, 0
      %s315 = sadd.s32 %s314, 1
      %s316 = scalar_select %p313, %s314, %s315
      %p319 = pneg %p313
      %p320 = scmp.eq.s32.totalorder %s23, 1
      %p321 = por %p319, %p320
      %p322 = scmp.ne.s32.totalorder %s314, %s317
      %p323 = scmp.eq.s32.totalorder %s23, 0
      %p324 = por %p322, %p323
      %p325 = scmp.ne.s32.totalorder %s314, %s317
      %p326 = scmp.eq.s32.totalorder %s28, 1
      %p327 = por %p325, %p326
      %p328 = scmp.ne.s32.totalorder %s317, %s318
      %p329 = scmp.eq.s32.totalorder %s28, 0
      %p330 = por %p328, %p329
      %p331 = scmp.ne.s32.totalorder %s317, %s318
      %p332 = scmp.eq.s32.totalorder %s29, 1
      %p333 = por %p331, %p332
      %p335 = scmp.ne.s32.totalorder %s318, %s334
      %p336 = scmp.eq.s32.totalorder %s29, 0
      %p337 = por %p335, %p336
      %s338 = ssub.s32 %s23, %s30
      %p339 = scmp.eq.s32.totalorder %s338, 0
      %s341 = sadd.s32 %s340, 1
      %s342 = scalar_select %p339, %s340, %s341
      %p345 = pneg %p339
      %p346 = scmp.eq.s32.totalorder %s23, 1
      %p347 = por %p345, %p346
      %p348 = scmp.ne.s32.totalorder %s340, %s343
      %p349 = scmp.eq.s32.totalorder %s23, 0
      %p350 = por %p348, %p349
      %p351 = scmp.ne.s32.totalorder %s340, %s343
      %p352 = scmp.eq.s32.totalorder %s28, 1
      %p353 = por %p351, %p352
      %p354 = scmp.ne.s32.totalorder %s343, %s344
      %p355 = scmp.eq.s32.totalorder %s28, 0
      %p356 = por %p354, %p355
      %p357 = scmp.ne.s32.totalorder %s343, %s344
      %p358 = scmp.eq.s32.totalorder %s29, 1
      %p359 = por %p357, %p358
      %p361 = scmp.ne.s32.totalorder %s344, %s360
      %p362 = scmp.eq.s32.totalorder %s29, 0
      %p363 = por %p361, %p362
      %s364 = ssub.s32 %s23, %s30
      %p365 = scmp.eq.s32.totalorder %s364, 0
      %s367 = sadd.s32 %s366, 1
      %s368 = scalar_select %p365, %s366, %s367
      %p371 = pneg %p365
      %p372 = scmp.eq.s32.totalorder %s23, 1
      %p373 = por %p371, %p372
      %p374 = scmp.ne.s32.totalorder %s366, %s369
      %p375 = scmp.eq.s32.totalorder %s23, 0
      %p376 = por %p374, %p375
      %p377 = scmp.ne.s32.totalorder %s366, %s369
      %p378 = scmp.eq.s32.totalorder %s28, 1
      %p379 = por %p377, %p378
      %p380 = scmp.ne.s32.totalorder %s369, %s370
      %p381 = scmp.eq.s32.totalorder %s28, 0
      %p382 = por %p380, %p381
      %p383 = scmp.ne.s32.totalorder %s369, %s370
      %p384 = scmp.eq.s32.totalorder %s29, 1
      %p385 = por %p383, %p384
      %p387 = scmp.ne.s32.totalorder %s370, %s386
      %p388 = scmp.eq.s32.totalorder %s29, 0
      %p389 = por %p387, %p388
      %s390 = ssub.s32 %s23, %s30
      %p391 = scmp.eq.s32.totalorder %s390, 0
      %s393 = sadd.s32 %s392, 1
      %s394 = scalar_select %p391, %s392, %s393
      %p397 = pneg %p391
      %p398 = scmp.eq.s32.totalorder %s23, 1
      %p399 = por %p397, %p398
      %p400 = scmp.ne.s32.totalorder %s392, %s395
      %p401 = scmp.eq.s32.totalorder %s23, 0
      %p402 = por %p400, %p401
      %p403 = scmp.ne.s32.totalorder %s392, %s395
      %p404 = scmp.eq.s32.totalorder %s28, 1
      %p405 = por %p403, %p404
      %p406 = scmp.ne.s32.totalorder %s395, %s396
      %p407 = scmp.eq.s32.totalorder %s28, 0
      %p408 = por %p406, %p407
      %p409 = scmp.ne.s32.totalorder %s395, %s396
      %p410 = scmp.eq.s32.totalorder %s29, 1
      %p411 = por %p409, %p410
      %p413 = scmp.ne.s32.totalorder %s396, %s412
      %p414 = scmp.eq.s32.totalorder %s29, 0
      %p415 = por %p413, %p414
      %s416 = ssub.s32 %s23, %s30
      %p417 = scmp.eq.s32.totalorder %s416, 0
      %s419 = sadd.s32 %s418, 1
      %s420 = scalar_select %p417, %s418, %s419
      %p423 = pneg %p417
      %p424 = scmp.eq.s32.totalorder %s23, 1
      %p425 = por %p423, %p424
      %p426 = scmp.ne.s32.totalorder %s418, %s421
      %p427 = scmp.eq.s32.totalorder %s23, 0
      %p428 = por %p426, %p427
      %p429 = scmp.ne.s32.totalorder %s418, %s421
      %p430 = scmp.eq.s32.totalorder %s28, 1
      %p431 = por %p429, %p430
      %p432 = scmp.ne.s32.totalorder %s421, %s422
      %p433 = scmp.eq.s32.totalorder %s28, 0
      %p434 = por %p432, %p433
      %p435 = scmp.ne.s32.totalorder %s421, %s422
      %p436 = scmp.eq.s32.totalorder %s29, 1
      %p437 = por %p435, %p436
      %p439 = scmp.ne.s32.totalorder %s422, %s438
      %p440 = scmp.eq.s32.totalorder %s29, 0
      %p441 = por %p439, %p440
      %s443 = sadd.s32 %s442, 1
      %p446 = scmp.eq.s32.totalorder %s23, 1
      %p447 = scmp.ne.s32.totalorder %s442, %s444
      %p448 = scmp.eq.s32.totalorder %s23, 0
      %p449 = por %p447, %p448
      %p450 = scmp.ne.s32.totalorder %s442, %s444
      %p451 = scmp.eq.s32.totalorder %s28, 1
      %p452 = por %p450, %p451
      %p453 = scmp.ne.s32.totalorder %s444, %s445
      %p454 = scmp.eq.s32.totalorder %s28, 0
      %p455 = por %p453, %p454
      %p456 = scmp.ne.s32.totalorder %s444, %s445
      %p457 = scmp.eq.s32.totalorder %s29, 1
      %p458 = por %p456, %p457
      %p460 = scmp.ne.s32.totalorder %s445, %s459
      %p461 = scmp.eq.s32.totalorder %s29, 0
      %p462 = por %p460, %p461
      %p463 = scmp.le.s32.totalorder 1, %s23
      %p464 = scmp.lt.s32.totalorder %s23, 3
      %p465 = pnand %p463, %p464
      %p466 = pneg %p465
      // Predicated region
      $region9: #{tpu_custom_call.1} parent=5 // pred_check
        _
      $region10: #{tpu_custom_call.1} parent=5 // pred_check_branch
        %468 = sbr.rel (%p465) target = $region12
      $region11: #{tpu_custom_call.1} parent=5 // pred_region
        %s469 = ssub.s32 %s23, 1
        // Predicated region
        $region13: #{tpu_custom_call.1} parent=11 // pred_check
          %p470 = pneg %p44
        $region14: #{tpu_custom_call.1} parent=11 // pred_check_branch
          %472 = sbr.rel (%p470) target = $region16
        $region15: #{tpu_custom_call.1} parent=11 // pred_region
          _
        $region16: #{tpu_custom_call.1} parent=11 // pred_fallthru
          _
      $region12: #{tpu_custom_call.1} parent=5 // pred_fallthru
        _
      %p473 = scmp.lt.s32.totalorder %s23, 2
      // Predicated region
      $region17: #{tpu_custom_call.1} parent=5 // pred_check
        %p474 = pneg %p473
      $region18: #{tpu_custom_call.1} parent=5 // pred_check_branch
        %476 = sbr.rel (%p474) target = $region20
      $region19: #{tpu_custom_call.1} parent=5 // pred_region
        // Predicated region
        $region21: #{tpu_custom_call.1} parent=19 // pred_check
          %p477 = pneg %p64
        $region22: #{tpu_custom_call.1} parent=19 // pred_check_branch
          %479 = sbr.rel (%p477) target = $region24
        $region23: #{tpu_custom_call.1} parent=19 // pred_region
          %p480 = scmp.lt.s32.totalorder %s23, 1
          %s481 = scalar_select %p480, %s23, 1
          %s482 = scalar_lea.vmem %s1, %s481
        $region24: #{tpu_custom_call.1} parent=19 // pred_fallthru
          _
        // Predicated region
        $region25: #{tpu_custom_call.1} parent=19 // pred_check
          %p483 = pneg %p90
        $region26: #{tpu_custom_call.1} parent=19 // pred_check_branch
          %485 = sbr.rel (%p483) target = $region28
        $region27: #{tpu_custom_call.1} parent=19 // pred_region
          %p486 = scmp.lt.s32.totalorder %s23, 1
          %s487 = scalar_select %p486, %s23, 1
          %s488 = smul.addr %s487, 4
          %s489 = smul.addr %s488, 4
          %s490 = scalar_lea.vmem %s2, %s489
        $region28: #{tpu_custom_call.1} parent=19 // pred_fallthru
          _
        // Predicated region
        $region29: #{tpu_custom_call.1} parent=19 // pred_check
          %p491 = pneg %p116
        $region30: #{tpu_custom_call.1} parent=19 // pred_check_branch
          %493 = sbr.rel (%p491) target = $region32
        $region31: #{tpu_custom_call.1} parent=19 // pred_region
          %p494 = scmp.lt.s32.totalorder %s23, 1
          %s495 = scalar_select %p494, %s23, 1
          %s496 = scalar_lea.vmem %s3, %s495
        $region32: #{tpu_custom_call.1} parent=19 // pred_fallthru
          _
        // Predicated region
        $region33: #{tpu_custom_call.1} parent=19 // pred_check
          %p497 = pneg %p142
        $region34: #{tpu_custom_call.1} parent=19 // pred_check_branch
          %499 = sbr.rel (%p497) target = $region36
        $region35: #{tpu_custom_call.1} parent=19 // pred_region
          %p500 = scmp.lt.s32.totalorder %s23, 1
          %s501 = scalar_select %p500, %s23, 1
          %s502 = smul.addr %s501, 4
          %s503 = smul.addr %s502, 4
          %s504 = scalar_lea.vmem %s4, %s503
        $region36: #{tpu_custom_call.1} parent=19 // pred_fallthru
          _
        // Predicated region
        $region37: #{tpu_custom_call.1} parent=19 // pred_check
          %p505 = pneg %p168
        $region38: #{tpu_custom_call.1} parent=19 // pred_check_branch
          %507 = sbr.rel (%p505) target = $region40
        $region39: #{tpu_custom_call.1} parent=19 // pred_region
          %p508 = scmp.lt.s32.totalorder %s23, 1
          %s509 = scalar_select %p508, %s23, 1
          %s510 = scalar_lea.vmem %s5, %s509
        $region40: #{tpu_custom_call.1} parent=19 // pred_fallthru
          _
        // Predicated region
        $region41: #{tpu_custom_call.1} parent=19 // pred_check
          %p511 = pneg %p194
        $region42: #{tpu_custom_call.1} parent=19 // pred_check_branch
          %513 = sbr.rel (%p511) target = $region44
        $region43: #{tpu_custom_call.1} parent=19 // pred_region
          %p514 = scmp.lt.s32.totalorder %s23, 1
          %s515 = scalar_select %p514, %s23, 1
          %s516 = scalar_lea.vmem %s6, %s515
        $region44: #{tpu_custom_call.1} parent=19 // pred_fallthru
          _
        // Predicated region
        $region45: #{tpu_custom_call.1} parent=19 // pred_check
          %p517 = pneg %p220
        $region46: #{tpu_custom_call.1} parent=19 // pred_check_branch
          %519 = sbr.rel (%p517) target = $region48
        $region47: #{tpu_custom_call.1} parent=19 // pred_region
          %p520 = scmp.lt.s32.totalorder %s23, 1
          %s521 = scalar_select %p520, %s23, 1
          %s522 = smul.addr %s521, 4
          %s523 = smul.addr %s522, 8
          %s524 = scalar_lea.vmem %s7, %s523
        $region48: #{tpu_custom_call.1} parent=19 // pred_fallthru
          _
        // Predicated region
        $region49: #{tpu_custom_call.1} parent=19 // pred_check
          %p525 = pneg %p246
        $region50: #{tpu_custom_call.1} parent=19 // pred_check_branch
          %527 = sbr.rel (%p525) target = $region52
        $region51: #{tpu_custom_call.1} parent=19 // pred_region
          %p528 = scmp.lt.s32.totalorder %s23, 1
          %s529 = scalar_select %p528, %s23, 1
          %s530 = smul.addr %s529, 8
          %s531 = smul.addr %s530, 4
          %s532 = scalar_lea.vmem %s8, %s531
        $region52: #{tpu_custom_call.1} parent=19 // pred_fallthru
          _
        // Predicated region
        $region53: #{tpu_custom_call.1} parent=19 // pred_check
          %p533 = pneg %p272
        $region54: #{tpu_custom_call.1} parent=19 // pred_check_branch
          %535 = sbr.rel (%p533) target = $region56
        $region55: #{tpu_custom_call.1} parent=19 // pred_region
          %p536 = scmp.lt.s32.totalorder %s23, 1
          %s537 = scalar_select %p536, %s23, 1
          %s538 = smul.addr %s537, 2
          %s539 = scalar_lea.vmem %s9, %s538
        $region56: #{tpu_custom_call.1} parent=19 // pred_fallthru
          _
        // Predicated region
        $region57: #{tpu_custom_call.1} parent=19 // pred_check
          %p540 = pneg %p298
        $region58: #{tpu_custom_call.1} parent=19 // pred_check_branch
          %542 = sbr.rel (%p540) target = $region60
        $region59: #{tpu_custom_call.1} parent=19 // pred_region
          %p543 = scmp.lt.s32.totalorder %s23, 1
          %s544 = scalar_select %p543, %s23, 1
          %s545 = smul.addr %s544, 32
          %s546 = smul.addr %s545, 4
          %s547 = scalar_lea.vmem %s10, %s546
        $region60: #{tpu_custom_call.1} parent=19 // pred_fallthru
          _
        // Predicated region
        $region61: #{tpu_custom_call.1} parent=19 // pred_check
          %p548 = pneg %p324
        $region62: #{tpu_custom_call.1} parent=19 // pred_check_branch
          %550 = sbr.rel (%p548) target = $region64
        $region63: #{tpu_custom_call.1} parent=19 // pred_region
          %p551 = scmp.lt.s32.totalorder %s23, 1
          %s552 = scalar_select %p551, %s23, 1
          %s553 = smul.addr %s552, 8
          %s554 = scalar_lea.vmem %s11, %s553
        $region64: #{tpu_custom_call.1} parent=19 // pred_fallthru
          _
        // Predicated region
        $region65: #{tpu_custom_call.1} parent=19 // pred_check
          %p555 = pneg %p350
        $region66: #{tpu_custom_call.1} parent=19 // pred_check_branch
          %557 = sbr.rel (%p555) target = $region68
        $region67: #{tpu_custom_call.1} parent=19 // pred_region
          %p558 = scmp.lt.s32.totalorder %s23, 1
          %s559 = scalar_select %p558, %s23, 1
          %s560 = smul.addr %s559, 4
          %s561 = smul.addr %s560, 4
          %s562 = scalar_lea.vmem %s12, %s561
        $region68: #{tpu_custom_call.1} parent=19 // pred_fallthru
          _
        // Predicated region
        $region69: #{tpu_custom_call.1} parent=19 // pred_check
          %p563 = pneg %p376
        $region70: #{tpu_custom_call.1} parent=19 // pred_check_branch
          %565 = sbr.rel (%p563) target = $region72
        $region71: #{tpu_custom_call.1} parent=19 // pred_region
          %p566 = scmp.lt.s32.totalorder %s23, 1
          %s567 = scalar_select %p566, %s23, 1
          %s568 = scalar_lea.vmem %s13, %s567
        $region72: #{tpu_custom_call.1} parent=19 // pred_fallthru
          _
        // Predicated region
        $region73: #{tpu_custom_call.1} parent=19 // pred_check
          %p569 = pneg %p402
        $region74: #{tpu_custom_call.1} parent=19 // pred_check_branch
          %571 = sbr.rel (%p569) target = $region76
        $region75: #{tpu_custom_call.1} parent=19 // pred_region
          %p572 = scmp.lt.s32.totalorder %s23, 1
          %s573 = scalar_select %p572, %s23, 1
          %s574 = smul.addr %s573, 4
          %s575 = smul.addr %s574, 4
          %s576 = scalar_lea.vmem %s14, %s575
        $region76: #{tpu_custom_call.1} parent=19 // pred_fallthru
          _
        // Predicated region
        $region77: #{tpu_custom_call.1} parent=19 // pred_check
          %p577 = pneg %p428
        $region78: #{tpu_custom_call.1} parent=19 // pred_check_branch
          %579 = sbr.rel (%p577) target = $region80
        $region79: #{tpu_custom_call.1} parent=19 // pred_region
          %p580 = scmp.lt.s32.totalorder %s23, 1
          %s581 = scalar_select %p580, %s23, 1
          %s582 = scalar_lea.vmem %s15, %s581
        $region80: #{tpu_custom_call.1} parent=19 // pred_fallthru
          _
      $region20: #{tpu_custom_call.1} parent=5 // pred_fallthru
        _
      %p583 = scmp.le.s32.totalorder 1, %s23
      %p584 = scmp.lt.s32.totalorder %s23, 3
      %p585 = pnand %p583, %p584
      %p586 = pneg %p585
      // Predicated region
      $region81: #{tpu_custom_call.1} parent=5 // pred_check
        _
      $region82: #{tpu_custom_call.1} parent=5 // pred_check_branch
        %588 = sbr.rel (%p585) target = $region84
      $region83: #{tpu_custom_call.1} parent=5 // pred_region
        %s589 = ssub.s32 %s23, 1
        %p590 = pneg %p44
        %p591 = pneg %p41
        %p592 = scmp.lt.s32.totalorder %s28, 1
        %s593 = scalar_select %p592, %s28, 1
        %s594 = scalar_lea.vmem %s1, %s593
        %p595 = pneg %p70
        %p596 = pneg %p67
        %p597 = scmp.lt.s32.totalorder %s28, 1
        %s598 = scalar_select %p597, %s28, 1
        %s599 = smul.addr %s598, 4
        %s600 = smul.addr %s599, 4
        %s601 = scalar_lea.vmem %s2, %s600
        %p602 = pneg %p96
        %p603 = pneg %p93
        %p604 = scmp.lt.s32.totalorder %s28, 1
        %s605 = scalar_select %p604, %s28, 1
        %s606 = scalar_lea.vmem %s3, %s605
        %p607 = pneg %p122
        %p608 = pneg %p119
        %p609 = scmp.lt.s32.totalorder %s28, 1
        %s610 = scalar_select %p609, %s28, 1
        %s611 = smul.addr %s610, 4
        %s612 = smul.addr %s611, 4
        %s613 = scalar_lea.vmem %s4, %s612
        %p614 = pneg %p148
        %p615 = pneg %p145
        %p616 = scmp.lt.s32.totalorder %s28, 1
        %s617 = scalar_select %p616, %s28, 1
        %s618 = scalar_lea.vmem %s5, %s617
        %p619 = pneg %p174
        %p620 = pneg %p171
        %p621 = scmp.lt.s32.totalorder %s28, 1
        %s622 = scalar_select %p621, %s28, 1
        %s623 = scalar_lea.vmem %s6, %s622
        %p624 = pneg %p200
        %p625 = pneg %p197
        %p626 = scmp.lt.s32.totalorder %s28, 1
        %s627 = scalar_select %p626, %s28, 1
        %s628 = smul.addr %s627, 4
        %s629 = smul.addr %s628, 8
        %s630 = scalar_lea.vmem %s7, %s629
        %p631 = pneg %p226
        %p632 = pneg %p223
        %p633 = scmp.lt.s32.totalorder %s28, 1
        %s634 = scalar_select %p633, %s28, 1
        %s635 = smul.addr %s634, 8
        %s636 = smul.addr %s635, 4
        %s637 = scalar_lea.vmem %s8, %s636
        %p638 = pneg %p252
        %p639 = pneg %p249
        %p640 = scmp.lt.s32.totalorder %s28, 1
        %s641 = scalar_select %p640, %s28, 1
        %s642 = smul.addr %s641, 2
        %s643 = scalar_lea.vmem %s9, %s642
        %p644 = pneg %p278
        %p645 = pneg %p275
        %p646 = scmp.lt.s32.totalorder %s28, 1
        %s647 = scalar_select %p646, %s28, 1
        %s648 = smul.addr %s647, 32
        %s649 = smul.addr %s648, 4
        %s650 = scalar_lea.vmem %s10, %s649
        %p651 = pneg %p304
        %p652 = pneg %p301
        %p653 = scmp.lt.s32.totalorder %s28, 1
        %s654 = scalar_select %p653, %s28, 1
        %s655 = smul.addr %s654, 8
        %s656 = scalar_lea.vmem %s11, %s655
        %p657 = pneg %p330
        %p658 = pneg %p327
        %p659 = scmp.lt.s32.totalorder %s28, 1
        %s660 = scalar_select %p659, %s28, 1
        %s661 = smul.addr %s660, 4
        %s662 = smul.addr %s661, 4
        %s663 = scalar_lea.vmem %s12, %s662
        %p664 = pneg %p356
        %p665 = pneg %p353
        %p666 = scmp.lt.s32.totalorder %s28, 1
        %s667 = scalar_select %p666, %s28, 1
        %s668 = scalar_lea.vmem %s13, %s667
        %p669 = pneg %p382
        %p670 = pneg %p379
        %p671 = scmp.lt.s32.totalorder %s28, 1
        %s672 = scalar_select %p671, %s28, 1
        %s673 = smul.addr %s672, 4
        %s674 = smul.addr %s673, 4
        %s675 = scalar_lea.vmem %s14, %s674
        %p676 = pneg %p408
        %p677 = pneg %p405
        %p678 = scmp.lt.s32.totalorder %s28, 1
        %s679 = scalar_select %p678, %s28, 1
        %s680 = scalar_lea.vmem %s15, %s679
        %p681 = pneg %p434
        %p682 = pneg %p431
        %p683 = pneg %p455
        %p684 = pneg %p452
        %p685 = scmp.lt.s32.totalorder %s28, 1
        %s686 = scalar_select %p685, %s28, 1
        %s687 = scalar_lea.vmem %s1, %s686
        %p688 = scmp.lt.s32.totalorder %s28, 1
        %s689 = scalar_select %p688, %s28, 1
        %s690 = smul.addr %s689, 4
        %s691 = smul.addr %s690, 4
        %s692 = scalar_lea.vmem %s2, %s691
        %p693 = scmp.lt.s32.totalorder %s28, 1
        %s694 = scalar_select %p693, %s28, 1
        %s695 = scalar_lea.vmem %s3, %s694
        %p696 = scmp.lt.s32.totalorder %s28, 1
        %s697 = scalar_select %p696, %s28, 1
        %s698 = smul.addr %s697, 4
        %s699 = smul.addr %s698, 4
        %s700 = scalar_lea.vmem %s4, %s699
        %p701 = scmp.lt.s32.totalorder %s28, 1
        %s702 = scalar_select %p701, %s28, 1
        %s703 = scalar_lea.vmem %s5, %s702
        %p704 = scmp.lt.s32.totalorder %s28, 1
        %s705 = scalar_select %p704, %s28, 1
        %s706 = scalar_lea.vmem %s6, %s705
        %p707 = scmp.lt.s32.totalorder %s28, 1
        %s708 = scalar_select %p707, %s28, 1
        %s709 = smul.addr %s708, 4
        %s710 = smul.addr %s709, 8
        %s711 = scalar_lea.vmem %s7, %s710
        %p712 = scmp.lt.s32.totalorder %s28, 1
        %s713 = scalar_select %p712, %s28, 1
        %s714 = smul.addr %s713, 8
        %s715 = smul.addr %s714, 4
        %s716 = scalar_lea.vmem %s8, %s715
        %p717 = scmp.lt.s32.totalorder %s28, 1
        %s718 = scalar_select %p717, %s28, 1
        %s719 = smul.addr %s718, 2
        %s720 = scalar_lea.vmem %s9, %s719
        %p721 = scmp.lt.s32.totalorder %s28, 1
        %s722 = scalar_select %p721, %s28, 1
        %s723 = smul.addr %s722, 32
        %s724 = smul.addr %s723, 4
        %s725 = scalar_lea.vmem %s10, %s724
        %p726 = scmp.lt.s32.totalorder %s28, 1
        %s727 = scalar_select %p726, %s28, 1
        %s728 = smul.addr %s727, 8
        %s729 = scalar_lea.vmem %s11, %s728
        %p730 = scmp.lt.s32.totalorder %s28, 1
        %s731 = scalar_select %p730, %s28, 1
        %s732 = smul.addr %s731, 4
        %s733 = smul.addr %s732, 4
        %s734 = scalar_lea.vmem %s12, %s733
        %p735 = scmp.lt.s32.totalorder %s28, 1
        %s736 = scalar_select %p735, %s28, 1
        %s737 = scalar_lea.vmem %s13, %s736
        %p738 = scmp.lt.s32.totalorder %s28, 1
        %s739 = scalar_select %p738, %s28, 1
        %s740 = smul.addr %s739, 4
        %s741 = smul.addr %s740, 4
        %s742 = scalar_lea.vmem %s14, %s741
        %p743 = scmp.lt.s32.totalorder %s28, 1
        %s744 = scalar_select %p743, %s28, 1
        %s745 = scalar_lea.vmem %s15, %s744
        %p747 = scmp.eq.s32.totalorder %s28, 0
        // Predicated region
        $region85: #{tpu_custom_call.1} parent=83 // pred_check
          %p748 = pneg %p747
        $region86: #{tpu_custom_call.1} parent=83 // pred_check_branch
          %750 = sbr.rel (%p748) target = $region88
        $region87: #{tpu_custom_call.1} parent=83 // pred_region
          %v751 = vld [vmem:[%s0] sm:$0xff]
          %v752 = vld [vmem:[%s0 + $0x8] sm:$0xff]
          %vm753 = vcmask 261120
          %754 = vst.msk [vmem:[#allocation2] sm:$0xff] %vm753, %v751
          %755 = vst.msk [vmem:[#allocation2 + $0x8] sm:$0xff] %vm753, %v752
        $region88: #{tpu_custom_call.1} parent=83 // pred_fallthru
          _
        %v756 = vld [vmem:[#allocation2] sm:$0xff]
        %v757 = vld [vmem:[#allocation2 + $0x8] sm:$0xff]
        %v758 = vld [vmem:[%s687] sm:$0x1]
        %v759 = vmul.f32 %v756, %v756
        %v760 = vmul.f32 %v757, %v757
        %vm761 = vcmask 261120
        %v762 = vsel %vm761, %v759, 0.0
        %763 = vadd.xlane.f32.xlu0 %v762
        %v764 = vpop.xlane.xlu0 %763
        %v765 = vsel %vm761, %v760, 0.0
        %766 = vadd.xlane.f32.xlu0 %v765
        %v767 = vpop.xlane.xlu0 %766
        %v768 = vrcp.pop 32.0
        %v769 = vmul.f32 %v764, %v768
        %v770 = vmul.f32 %v767, %v768
        %v771 = vadd.f32 %v769, 1.1920929e-07
        %v772 = vadd.f32 %v770, 1.1920929e-07
        %v773 = vrsqrt.pop %v771
        %v774 = vrsqrt.pop %v772
        %v775 = vmul.f32 %v756, %v773
        %v776 = vmul.f32 %v757, %v774
        %v778 = vlaneseq
        %v779 = vshrl.u32 %v778, 7
        %v780 = vsub.s32 0, %v779
        %v781 = vrot.slane %v758, %v780
        %v783 = vmul.f32 %v775, %v781
        %v784 = vmul.f32 %v776, %v781
        %v785 = vpack.c.bf16 %v784, %v783
        %v786 = vld [vmem:[%s692] sm:$0xf]
        %v787 = vld [vmem:[%s692 + $0x4] sm:$0xf]
        %v788 = vld [vmem:[%s692 + $0x8] sm:$0xf]
        %v789 = vld [vmem:[%s692 + $0xc] sm:$0xf]
        %v790 = vld [vmem:[%s695] sm:$0x1]
        %v792 = vlaneseq
        %v793 = vshrl.u32 %v792, 7
        %v794 = vsub.s32 0, %v793
        %v795 = vrot.slane %v790, %v794
        %v801 = vunpack.c.l.b16 %v786
        %v802 = vunpack.c.l.b16 %v787
        %v803 = vunpack.c.l.b16 %v788
        %v804 = vunpack.c.l.b16 %v789
        %v805 = vpack.c.b16 %v802, %v801
        %v806 = vpack.c.b16 %v804, %v803
        %v810 = vsel %vm761, %v785, 0
        %812 = vmatprep.subr.bf16.mxu0 0
        %813 = vmatpush1.bf16.msra.mxu0 %v805
        %814 = vmatprep.subr.bf16.mxu0 0
        %815 = vmatpush1.bf16.msra.mxu0 %v806
        %816 = vmatprep.subr.bf16.mxu0 0
        %817 = vmatpush1.bf16.msra.mxu0 0
        %818 = vmatprep.subr.bf16.mxu0 0
        %819 = vmatpush1.bf16.msra.mxu0 0
        %820 = vmatprep.subr.bf16.mxu0 0
        %821 = vmatpush1.bf16.msra.mxu0 0
        %822 = vmatprep.subr.bf16.mxu0 0
        %823 = vmatpush1.bf16.msra.mxu0 0
        %824 = vmatprep.subr.bf16.mxu0 0
        %825 = vmatpush1.bf16.msra.mxu0 0
        %826 = vmatprep.subr.bf16.mxu0 0
        %827 = vmatpush1.bf16.msra.mxu0 0
        %828 = vmatprep.subr.bf16.mxu0 0
        %829 = vmatpush1.bf16.msra.mxu0 0
        %830 = vmatprep.subr.bf16.mxu0 0
        %831 = vmatpush1.bf16.msra.mxu0 0
        %832 = vmatprep.subr.bf16.mxu0 0
        %833 = vmatpush1.bf16.msra.mxu0 0
        %834 = vmatprep.subr.bf16.mxu0 0
        %835 = vmatpush1.bf16.msra.mxu0 0
        %836 = vmatprep.subr.bf16.mxu0 0
        %837 = vmatpush1.bf16.msra.mxu0 0
        %838 = vmatprep.subr.bf16.mxu0 0
        %839 = vmatpush1.bf16.msra.mxu0 0
        %840 = vmatprep.subr.bf16.mxu0 0
        %841 = vmatpush1.bf16.msra.mxu0 0
        %842 = vmatprep.subr.bf16.mxu0 0
        %843 = vmatpush1.bf16.msra.mxu0 0
        %844 = vmatprep.mubr.bf16.mxu0 0
        %845 = vmatmul.mubr.bf16.gmra.mrb[0].mxu0 %v810
        %v846 = vpop.f32.mrb[0].mxu0
        %v847 = vadd.f32 %v795, %v846
        %v848 = vpop.f32.mrb[0].mxu0
        %v849 = vpop.f32.mrb[0].mxu0
        %v850 = vadd.f32 %v795, %v849
        %v851 = vpop.f32.mrb[0].mxu0
        %852 = vdwg.mxu0
        %v853 = vpack.c.bf16 %v847, %v847
        %v854 = vpack.c.bf16 %v850, %v850
        %856 = vrot.lane.b32.xlu0 %v853, 96
        %v857 = vpop.permute.xlu0 %856
        %vm858 = vcmask 64512
        %v860 = vsel %vm858, %v853, 0
        %v863 = vsel %vm858, %v857, 0
        %865 = vmatprep.subr.bf16.mxu0 0
        %866 = vmatpush1.bf16.xpose.msra.mxu0 %v863
        %867 = vmatprep.subr.bf16.mxu0 0
        %868 = vmatpush1.bf16.xpose.msra.mxu0 0
        %869 = vmatprep.subr.bf16.mxu0 0
        %870 = vmatpush1.bf16.xpose.msra.mxu0 0
        %871 = vmatprep.subr.bf16.mxu0 0
        %872 = vmatpush1.bf16.xpose.msra.mxu0 0
        %873 = vmatprep.subr.bf16.mxu0 0
        %874 = vmatpush1.bf16.xpose.msra.mxu0 0
        %875 = vmatprep.subr.bf16.mxu0 0
        %876 = vmatpush1.bf16.xpose.msra.mxu0 0
        %877 = vmatprep.subr.bf16.mxu0 0
        %878 = vmatpush1.bf16.xpose.msra.mxu0 0
        %879 = vmatprep.subr.bf16.mxu0 0
        %880 = vmatpush1.bf16.xpose.msra.mxu0 0
        %881 = vmatprep.subr.bf16.mxu0 0
        %882 = vmatpush1.bf16.xpose.msra.mxu0 0
        %883 = vmatprep.subr.bf16.mxu0 0
        %884 = vmatpush1.bf16.xpose.msra.mxu0 0
        %885 = vmatprep.subr.bf16.mxu0 0
        %886 = vmatpush1.bf16.xpose.msra.mxu0 0
        %887 = vmatprep.subr.bf16.mxu0 0
        %888 = vmatpush1.bf16.xpose.msra.mxu0 0
        %889 = vmatprep.subr.bf16.mxu0 0
        %890 = vmatpush1.bf16.xpose.msra.mxu0 0
        %891 = vmatprep.subr.bf16.mxu0 0
        %892 = vmatpush1.bf16.xpose.msra.mxu0 0
        %893 = vmatprep.subr.bf16.mxu0 0
        %894 = vmatpush1.bf16.xpose.msra.mxu0 0
        %895 = vmatprep.subr.bf16.mxu0 0
        %896 = vmatpush1.bf16.xpose.msra.mxu0 0
        %897 = vmatprep.mubr.bf16.mxu0 0
        %898 = vmatmul.mubr.bf16.gmra.mrb[0].mxu0 %v860
        %v899 = vpop.f32.mrb[0].mxu0
        %v900 = vadd.f32 0.0, %v899
        %v901 = vpop.f32.mrb[0].mxu0
        %v902 = vpop.f32.mrb[0].mxu0
        %v903 = vpop.f32.mrb[0].mxu0
        %904 = vdwg.mxu0
        %906 = vrot.lane.b32.xlu0 %v854, 96
        %v907 = vpop.permute.xlu0 %906
        %v909 = vsel %vm858, %v854, 0
        %v912 = vsel %vm858, %v907, 0
        %914 = vmatprep.subr.bf16.mxu0 0
        %915 = vmatpush1.bf16.xpose.msra.mxu0 %v912
        %916 = vmatprep.subr.bf16.mxu0 0
        %917 = vmatpush1.bf16.xpose.msra.mxu0 0
        %918 = vmatprep.subr.bf16.mxu0 0
        %919 = vmatpush1.bf16.xpose.msra.mxu0 0
        %920 = vmatprep.subr.bf16.mxu0 0
        %921 = vmatpush1.bf16.xpose.msra.mxu0 0
        %922 = vmatprep.subr.bf16.mxu0 0
        %923 = vmatpush1.bf16.xpose.msra.mxu0 0
        %924 = vmatprep.subr.bf16.mxu0 0
        %925 = vmatpush1.bf16.xpose.msra.mxu0 0
        %926 = vmatprep.subr.bf16.mxu0 0
        %927 = vmatpush1.bf16.xpose.msra.mxu0 0
        %928 = vmatprep.subr.bf16.mxu0 0
        %929 = vmatpush1.bf16.xpose.msra.mxu0 0
        %930 = vmatprep.subr.bf16.mxu0 0
        %931 = vmatpush1.bf16.xpose.msra.mxu0 0
        %932 = vmatprep.subr.bf16.mxu0 0
        %933 = vmatpush1.bf16.xpose.msra.mxu0 0
        %934 = vmatprep.subr.bf16.mxu0 0
        %935 = vmatpush1.bf16.xpose.msra.mxu0 0
        %936 = vmatprep.subr.bf16.mxu0 0
        %937 = vmatpush1.bf16.xpose.msra.mxu0 0
        %938 = vmatprep.subr.bf16.mxu0 0
        %939 = vmatpush1.bf16.xpose.msra.mxu0 0
        %940 = vmatprep.subr.bf16.mxu0 0
        %941 = vmatpush1.bf16.xpose.msra.mxu0 0
        %942 = vmatprep.subr.bf16.mxu0 0
        %943 = vmatpush1.bf16.xpose.msra.mxu0 0
        %944 = vmatprep.subr.bf16.mxu0 0
        %945 = vmatpush1.bf16.xpose.msra.mxu0 0
        %946 = vmatprep.mubr.bf16.mxu0 0
        %947 = vmatmul.mubr.bf16.gmra.mrb[0].mxu0 %v909
        %v948 = vpop.f32.mrb[0].mxu0
        %v949 = vadd.f32 0.0, %v948
        %v950 = vpop.f32.mrb[0].mxu0
        %v951 = vpop.f32.mrb[0].mxu0
        %v952 = vpop.f32.mrb[0].mxu0
        %953 = vdwg.mxu0
        %v954 = vmul.f32 %v900, 0.35355338
        %v955 = vmul.f32 %v949, 0.35355338
        %v956 = vsel %vm858, %v954, -inf
        %957 = vmax.xlane.f32.xlu0 %v956
        %v958 = vpop.xlane.xlu0 %957
        %v959 = vsel %vm858, %v955, -inf
        %960 = vmax.xlane.f32.xlu0 %v959
        %v961 = vpop.xlane.xlu0 %960
        %v962 = vsub.f32 %v954, %v958
        %v963 = vsub.f32 %v955, %v961
        %v964 = vmul.f32 %v962, 1.442695
        %v965 = vpow.pop %v964
        %v966 = vmul.f32 %v963, 1.442695
        %v967 = vpow.pop %v966
        %v968 = vsel %vm858, %v965, 0.0
        %969 = vadd.xlane.f32.xlu0 %v968
        %v970 = vpop.xlane.xlu0 %969
        %v971 = vsel %vm858, %v967, 0.0
        %972 = vadd.xlane.f32.xlu0 %v971
        %v973 = vpop.xlane.xlu0 %972
        %v974 = vrcp.pop %v970
        %v975 = vrcp.pop %v973
        %v976 = vmul.f32 %v965, %v974
        %v977 = vmul.f32 %v967, %v975
        %v978 = vpack.c.bf16 %v976, %v976
        %v979 = vpack.c.bf16 %v977, %v977
        %980 = vrot.lane.b32.xlu0 %v853, 64
        %v981 = vpop.permute.xlu0 %980
        %v983 = vsel %vm858, %v978, 0
        %vm985 = vcmask 1043456
        %v987 = vsel %vm985, %v981, 0
        %989 = vmatprep.subr.bf16.mxu0 0
        %990 = vmatpush1.bf16.msra.mxu0 %v987
        %991 = vmatprep.subr.bf16.mxu0 0
        %992 = vmatpush1.bf16.msra.mxu0 0
        %993 = vmatprep.subr.bf16.mxu0 0
        %994 = vmatpush1.bf16.msra.mxu0 0
        %995 = vmatprep.subr.bf16.mxu0 0
        %996 = vmatpush1.bf16.msra.mxu0 0
        %997 = vmatprep.subr.bf16.mxu0 0
        %998 = vmatpush1.bf16.msra.mxu0 0
        %999 = vmatprep.subr.bf16.mxu0 0
        %1000 = vmatpush1.bf16.msra.mxu0 0
        %1001 = vmatprep.subr.bf16.mxu0 0
        %1002 = vmatpush1.bf16.msra.mxu0 0
        %1003 = vmatprep.subr.bf16.mxu0 0
        %1004 = vmatpush1.bf16.msra.mxu0 0
        %1005 = vmatprep.subr.bf16.mxu0 0
        %1006 = vmatpush1.bf16.msra.mxu0 0
        %1007 = vmatprep.subr.bf16.mxu0 0
        %1008 = vmatpush1.bf16.msra.mxu0 0
        %1009 = vmatprep.subr.bf16.mxu0 0
        %1010 = vmatpush1.bf16.msra.mxu0 0
        %1011 = vmatprep.subr.bf16.mxu0 0
        %1012 = vmatpush1.bf16.msra.mxu0 0
        %1013 = vmatprep.subr.bf16.mxu0 0
        %1014 = vmatpush1.bf16.msra.mxu0 0
        %1015 = vmatprep.subr.bf16.mxu0 0
        %1016 = vmatpush1.bf16.msra.mxu0 0
        %1017 = vmatprep.subr.bf16.mxu0 0
        %1018 = vmatpush1.bf16.msra.mxu0 0
        %1019 = vmatprep.subr.bf16.mxu0 0
        %1020 = vmatpush1.bf16.msra.mxu0 0
        %1021 = vmatprep.mubr.bf16.mxu0 0
        %1022 = vmatmul.mubr.bf16.gmra.mrb[0].mxu0 %v983
        %v1023 = vpop.f32.mrb[0].mxu0
        %v1024 = vadd.f32 0.0, %v1023
        %v1025 = vpop.f32.mrb[0].mxu0
        %v1026 = vpop.f32.mrb[0].mxu0
        %v1027 = vpop.f32.mrb[0].mxu0
        %1028 = vdwg.mxu0
        %1029 = vrot.lane.b32.xlu0 %v854, 64
        %v1030 = vpop.permute.xlu0 %1029
        %v1032 = vsel %vm858, %v979, 0
        %v1035 = vsel %vm985, %v1030, 0
        %1037 = vmatprep.subr.bf16.mxu0 0
        %1038 = vmatpush1.bf16.msra.mxu0 %v1035
        %1039 = vmatprep.subr.bf16.mxu0 0
        %1040 = vmatpush1.bf16.msra.mxu0 0
        %1041 = vmatprep.subr.bf16.mxu0 0
        %1042 = vmatpush1.bf16.msra.mxu0 0
        %1043 = vmatprep.subr.bf16.mxu0 0
        %1044 = vmatpush1.bf16.msra.mxu0 0
        %1045 = vmatprep.subr.bf16.mxu0 0
        %1046 = vmatpush1.bf16.msra.mxu0 0
        %1047 = vmatprep.subr.bf16.mxu0 0
        %1048 = vmatpush1.bf16.msra.mxu0 0
        %1049 = vmatprep.subr.bf16.mxu0 0
        %1050 = vmatpush1.bf16.msra.mxu0 0
        %1051 = vmatprep.subr.bf16.mxu0 0
        %1052 = vmatpush1.bf16.msra.mxu0 0
        %1053 = vmatprep.subr.bf16.mxu0 0
        %1054 = vmatpush1.bf16.msra.mxu0 0
        %1055 = vmatprep.subr.bf16.mxu0 0
        %1056 = vmatpush1.bf16.msra.mxu0 0
        %1057 = vmatprep.subr.bf16.mxu0 0
        %1058 = vmatpush1.bf16.msra.mxu0 0
        %1059 = vmatprep.subr.bf16.mxu0 0
        %1060 = vmatpush1.bf16.msra.mxu0 0
        %1061 = vmatprep.subr.bf16.mxu0 0
        %1062 = vmatpush1.bf16.msra.mxu0 0
        %1063 = vmatprep.subr.bf16.mxu0 0
        %1064 = vmatpush1.bf16.msra.mxu0 0
        %1065 = vmatprep.subr.bf16.mxu0 0
        %1066 = vmatpush1.bf16.msra.mxu0 0
        %1067 = vmatprep.subr.bf16.mxu0 0
        %1068 = vmatpush1.bf16.msra.mxu0 0
        %1069 = vmatprep.mubr.bf16.mxu0 0
        %1070 = vmatmul.mubr.bf16.gmra.mrb[0].mxu0 %v1032
        %v1071 = vpop.f32.mrb[0].mxu0
        %v1072 = vadd.f32 0.0, %v1071
        %v1073 = vpop.f32.mrb[0].mxu0
        %v1074 = vpop.f32.mrb[0].mxu0
        %v1075 = vpop.f32.mrb[0].mxu0
        %1076 = vdwg.mxu0
        %1077 = vrot.lane.b32.xlu0 %v853, 120
        %v1078 = vpop.permute.xlu0 %1077
        %1079 = vrot.lane.b32.xlu0 %v853, 88
        %v1080 = vpop.permute.xlu0 %1079
        %v1082 = vsel %vm858, %v1078, 0
        %v1085 = vsel %vm858, %v1080, 0
        %1087 = vmatprep.subr.bf16.mxu0 0
        %1088 = vmatpush1.bf16.xpose.msra.mxu0 %v1085
        %1089 = vmatprep.subr.bf16.mxu0 0
        %1090 = vmatpush1.bf16.xpose.msra.mxu0 0
        %1091 = vmatprep.subr.bf16.mxu0 0
        %1092 = vmatpush1.bf16.xpose.msra.mxu0 0
        %1093 = vmatprep.subr.bf16.mxu0 0
        %1094 = vmatpush1.bf16.xpose.msra.mxu0 0
        %1095 = vmatprep.subr.bf16.mxu0 0
        %1096 = vmatpush1.bf16.xpose.msra.mxu0 0
        %1097 = vmatprep.subr.bf16.mxu0 0
        %1098 = vmatpush1.bf16.xpose.msra.mxu0 0
        %1099 = vmatprep.subr.bf16.mxu0 0
        %1100 = vmatpush1.bf16.xpose.msra.mxu0 0
        %1101 = vmatprep.subr.bf16.mxu0 0
        %1102 = vmatpush1.bf16.xpose.msra.mxu0 0
        %1103 = vmatprep.subr.bf16.mxu0 0
        %1104 = vmatpush1.bf16.xpose.msra.mxu0 0
        %1105 = vmatprep.subr.bf16.mxu0 0
        %1106 = vmatpush1.bf16.xpose.msra.mxu0 0
        %1107 = vmatprep.subr.bf16.mxu0 0
        %1108 = vmatpush1.bf16.xpose.msra.mxu0 0
        %1109 = vmatprep.subr.bf16.mxu0 0
        %1110 = vmatpush1.bf16.xpose.msra.mxu0 0
        %1111 = vmatprep.subr.bf16.mxu0 0
        %1112 = vmatpush1.bf16.xpose.msra.mxu0 0
        %1113 = vmatprep.subr.bf16.mxu0 0
        %1114 = vmatpush1.bf16.xpose.msra.mxu0 0
        %1115 = vmatprep.subr.bf16.mxu0 0
        %1116 = vmatpush1.bf16.xpose.msra.mxu0 0
        %1117 = vmatprep.subr.bf16.mxu0 0
        %1118 = vmatpush1.bf16.xpose.msra.mxu0 0
        %1119 = vmatprep.mubr.bf16.mxu0 0
        %1120 = vmatmul.mubr.bf16.gmra.mrb[0].mxu0 %v1082
        %v1121 = vpop.f32.mrb[0].mxu0
        %v1122 = vadd.f32 0.0, %v1121
        %v1123 = vpop.f32.mrb[0].mxu0
        %v1124 = vpop.f32.mrb[0].mxu0
        %v1125 = vpop.f32.mrb[0].mxu0
        %1126 = vdwg.mxu0
        %1127 = vrot.lane.b32.xlu0 %v854, 120
        %v1128 = vpop.permute.xlu0 %1127
        %1129 = vrot.lane.b32.xlu0 %v854, 88
        %v1130 = vpop.permute.xlu0 %1129
        %v1132 = vsel %vm858, %v1128, 0
        %v1135 = vsel %vm858, %v1130, 0
        %1137 = vmatprep.subr.bf16.mxu0 0
        %1138 = vmatpush1.bf16.xpose.msra.mxu0 %v1135
        %1139 = vmatprep.subr.bf16.mxu0 0
        %1140 = vmatpush1.bf16.xpose.msra.mxu0 0
        %1141 = vmatprep.subr.bf16.mxu0 0
        %1142 = vmatpush1.bf16.xpose.msra.mxu0 0
        %1143 = vmatprep.subr.bf16.mxu0 0
        %1144 = vmatpush1.bf16.xpose.msra.mxu0 0
        %1145 = vmatprep.subr.bf16.mxu0 0
        %1146 = vmatpush1.bf16.xpose.msra.mxu0 0
        %1147 = vmatprep.subr.bf16.mxu0 0
        %1148 = vmatpush1.bf16.xpose.msra.mxu0 0
        %1149 = vmatprep.subr.bf16.mxu0 0
        %1150 = vmatpush1.bf16.xpose.msra.mxu0 0
        %1151 = vmatprep.subr.bf16.mxu0 0
        %1152 = vmatpush1.bf16.xpose.msra.mxu0 0
        %1153 = vmatprep.subr.bf16.mxu0 0
        %1154 = vmatpush1.bf16.xpose.msra.mxu0 0
        %1155 = vmatprep.subr.bf16.mxu0 0
        %1156 = vmatpush1.bf16.xpose.msra.mxu0 0
        %1157 = vmatprep.subr.bf16.mxu0 0
        %1158 = vmatpush1.bf16.xpose.msra.mxu0 0
        %1159 = vmatprep.subr.bf16.mxu0 0
        %1160 = vmatpush1.bf16.xpose.msra.mxu0 0
        %1161 = vmatprep.subr.bf16.mxu0 0
        %1162 = vmatpush1.bf16.xpose.msra.mxu0 0
        %1163 = vmatprep.subr.bf16.mxu0 0
        %1164 = vmatpush1.bf16.xpose.msra.mxu0 0
        %1165 = vmatprep.subr.bf16.mxu0 0
        %1166 = vmatpush1.bf16.xpose.msra.mxu0 0
        %1167 = vmatprep.subr.bf16.mxu0 0
        %1168 = vmatpush1.bf16.xpose.msra.mxu0 0
        %1169 = vmatprep.mubr.bf16.mxu0 0
        %1170 = vmatmul.mubr.bf16.gmra.mrb[0].mxu0 %v1132
        %v1171 = vpop.f32.mrb[0].mxu0
        %v1172 = vadd.f32 0.0, %v1171
        %v1173 = vpop.f32.mrb[0].mxu0
        %v1174 = vpop.f32.mrb[0].mxu0
        %v1175 = vpop.f32.mrb[0].mxu0
        %1176 = vdwg.mxu0
        %v1177 = vmul.f32 %v1122, 0.35355338
        %v1178 = vmul.f32 %v1172, 0.35355338
        %v1179 = vsel %vm858, %v1177, -inf
        %1180 = vmax.xlane.f32.xlu0 %v1179
        %v1181 = vpop.xlane.xlu0 %1180
        %v1182 = vsel %vm858, %v1178, -inf
        %1183 = vmax.xlane.f32.xlu0 %v1182
        %v1184 = vpop.xlane.xlu0 %1183
        %v1185 = vsub.f32 %v1177, %v1181
        %v1186 = vsub.f32 %v1178, %v1184
        %v1187 = vmul.f32 %v1185, 1.442695
        %v1188 = vpow.pop %v1187
        %v1189 = vmul.f32 %v1186, 1.442695
        %v1190 = vpow.pop %v1189
        %v1191 = vsel %vm858, %v1188, 0.0
        %1192 = vadd.xlane.f32.xlu0 %v1191
        %v1193 = vpop.xlane.xlu0 %1192
        %v1194 = vsel %vm858, %v1190, 0.0
        %1195 = vadd.xlane.f32.xlu0 %v1194
        %v1196 = vpop.xlane.xlu0 %1195
        %v1197 = vrcp.pop %v1193
        %v1198 = vrcp.pop %v1196
        %v1199 = vmul.f32 %v1188, %v1197
        %v1200 = vmul.f32 %v1190, %v1198
        %v1201 = vpack.c.bf16 %v1199, %v1199
        %v1202 = vpack.c.bf16 %v1200, %v1200
        %1203 = vrot.lane.b32.xlu0 %v853, 56
        %v1204 = vpop.permute.xlu0 %1203
        %v1206 = vsel %vm858, %v1201, 0
        %v1209 = vsel %vm985, %v1204, 0
        %1211 = vmatprep.subr.bf16.mxu0 0
        %1212 = vmatpush1.bf16.msra.mxu0 %v1209
        %1213 = vmatprep.subr.bf16.mxu0 0
        %1214 = vmatpush1.bf16.msra.mxu0 0
        %1215 = vmatprep.subr.bf16.mxu0 0
        %1216 = vmatpush1.bf16.msra.mxu0 0
        %1217 = vmatprep.subr.bf16.mxu0 0
        %1218 = vmatpush1.bf16.msra.mxu0 0
        %1219 = vmatprep.subr.bf16.mxu0 0
        %1220 = vmatpush1.bf16.msra.mxu0 0
        %1221 = vmatprep.subr.bf16.mxu0 0
        %1222 = vmatpush1.bf16.msra.mxu0 0
        %1223 = vmatprep.subr.bf16.mxu0 0
        %1224 = vmatpush1.bf16.msra.mxu0 0
        %1225 = vmatprep.subr.bf16.mxu0 0
        %1226 = vmatpush1.bf16.msra.mxu0 0
        %1227 = vmatprep.subr.bf16.mxu0 0
        %1228 = vmatpush1.bf16.msra.mxu0 0
        %1229 = vmatprep.subr.bf16.mxu0 0
        %1230 = vmatpush1.bf16.msra.mxu0 0
        %1231 = vmatprep.subr.bf16.mxu0 0
        %1232 = vmatpush1.bf16.msra.mxu0 0
        %1233 = vmatprep.subr.bf16.mxu0 0
        %1234 = vmatpush1.bf16.msra.mxu0 0
        %1235 = vmatprep.subr.bf16.mxu0 0
        %1236 = vmatpush1.bf16.msra.mxu0 0
        %1237 = vmatprep.subr.bf16.mxu0 0
        %1238 = vmatpush1.bf16.msra.mxu0 0
        %1239 = vmatprep.subr.bf16.mxu0 0
        %1240 = vmatpush1.bf16.msra.mxu0 0
        %1241 = vmatprep.subr.bf16.mxu0 0
        %1242 = vmatpush1.bf16.msra.mxu0 0
        %1243 = vmatprep.mubr.bf16.mxu0 0
        %1244 = vmatmul.mubr.bf16.gmra.mrb[0].mxu0 %v1206
        %v1245 = vpop.f32.mrb[0].mxu0
        %v1246 = vadd.f32 0.0, %v1245
        %v1247 = vpop.f32.mrb[0].mxu0
        %v1248 = vpop.f32.mrb[0].mxu0
        %v1249 = vpop.f32.mrb[0].mxu0
        %1250 = vdwg.mxu0
        %1251 = vrot.lane.b32.xlu0 %v854, 56
        %v1252 = vpop.permute.xlu0 %1251
        %v1254 = vsel %vm858, %v1202, 0
        %v1257 = vsel %vm985, %v1252, 0
        %1259 = vmatprep.subr.bf16.mxu0 0
        %1260 = vmatpush1.bf16.msra.mxu0 %v1257
        %1261 = vmatprep.subr.bf16.mxu0 0
        %1262 = vmatpush1.bf16.msra.mxu0 0
        %1263 = vmatprep.subr.bf16.mxu0 0
        %1264 = vmatpush1.bf16.msra.mxu0 0
        %1265 = vmatprep.subr.bf16.mxu0 0
        %1266 = vmatpush1.bf16.msra.mxu0 0
        %1267 = vmatprep.subr.bf16.mxu0 0
        %1268 = vmatpush1.bf16.msra.mxu0 0
        %1269 = vmatprep.subr.bf16.mxu0 0
        %1270 = vmatpush1.bf16.msra.mxu0 0
        %1271 = vmatprep.subr.bf16.mxu0 0
        %1272 = vmatpush1.bf16.msra.mxu0 0
        %1273 = vmatprep.subr.bf16.mxu0 0
        %1274 = vmatpush1.bf16.msra.mxu0 0
        %1275 = vmatprep.subr.bf16.mxu0 0
        %1276 = vmatpush1.bf16.msra.mxu0 0
        %1277 = vmatprep.subr.bf16.mxu0 0
        %1278 = vmatpush1.bf16.msra.mxu0 0
        %1279 = vmatprep.subr.bf16.mxu0 0
        %1280 = vmatpush1.bf16.msra.mxu0 0
        %1281 = vmatprep.subr.bf16.mxu0 0
        %1282 = vmatpush1.bf16.msra.mxu0 0
        %1283 = vmatprep.subr.bf16.mxu0 0
        %1284 = vmatpush1.bf16.msra.mxu0 0
        %1285 = vmatprep.subr.bf16.mxu0 0
        %1286 = vmatpush1.bf16.msra.mxu0 0
        %1287 = vmatprep.subr.bf16.mxu0 0
        %1288 = vmatpush1.bf16.msra.mxu0 0
        %1289 = vmatprep.subr.bf16.mxu0 0
        %1290 = vmatpush1.bf16.msra.mxu0 0
        %1291 = vmatprep.mubr.bf16.mxu0 0
        %1292 = vmatmul.mubr.bf16.gmra.mrb[0].mxu0 %v1254
        %v1293 = vpop.f32.mrb[0].mxu0
        %v1294 = vadd.f32 0.0, %v1293
        %v1295 = vpop.f32.mrb[0].mxu0
        %v1296 = vpop.f32.mrb[0].mxu0
        %v1297 = vpop.f32.mrb[0].mxu0
        %1298 = vdwg.mxu0
        %1299 = vrot.lane.b32.xlu0 %v853, 112
        %v1300 = vpop.permute.xlu0 %1299
        %1301 = vrot.lane.b32.xlu0 %v853, 80
        %v1302 = vpop.permute.xlu0 %1301
        %v1304 = vsel %vm858, %v1300, 0
        %v1307 = vsel %vm858, %v1302, 0
        %1309 = vmatprep.subr.bf16.mxu0 0
        %1310 = vmatpush1.bf16.xpose.msra.mxu0 %v1307
        %1311 = vmatprep.subr.bf16.mxu0 0
        %1312 = vmatpush1.bf16.xpose.msra.mxu0 0
        %1313 = vmatprep.subr.bf16.mxu0 0
        %1314 = vmatpush1.bf16.xpose.msra.mxu0 0
        %1315 = vmatprep.subr.bf16.mxu0 0
        %1316 = vmatpush1.bf16.xpose.msra.mxu0 0
        %1317 = vmatprep.subr.bf16.mxu0 0
        %1318 = vmatpush1.bf16.xpose.msra.mxu0 0
        %1319 = vmatprep.subr.bf16.mxu0 0
        %1320 = vmatpush1.bf16.xpose.msra.mxu0 0
        %1321 = vmatprep.subr.bf16.mxu0 0
        %1322 = vmatpush1.bf16.xpose.msra.mxu0 0
        %1323 = vmatprep.subr.bf16.mxu0 0
        %1324 = vmatpush1.bf16.xpose.msra.mxu0 0
        %1325 = vmatprep.subr.bf16.mxu0 0
        %1326 = vmatpush1.bf16.xpose.msra.mxu0 0
        %1327 = vmatprep.subr.bf16.mxu0 0
        %1328 = vmatpush1.bf16.xpose.msra.mxu0 0
        %1329 = vmatprep.subr.bf16.mxu0 0
        %1330 = vmatpush1.bf16.xpose.msra.mxu0 0
        %1331 = vmatprep.subr.bf16.mxu0 0
        %1332 = vmatpush1.bf16.xpose.msra.mxu0 0
        %1333 = vmatprep.subr.bf16.mxu0 0
        %1334 = vmatpush1.bf16.xpose.msra.mxu0 0
        %1335 = vmatprep.subr.bf16.mxu0 0
        %1336 = vmatpush1.bf16.xpose.msra.mxu0 0
        %1337 = vmatprep.subr.bf16.mxu0 0
        %1338 = vmatpush1.bf16.xpose.msra.mxu0 0
        %1339 = vmatprep.subr.bf16.mxu0 0
        %1340 = vmatpush1.bf16.xpose.msra.mxu0 0
        %1341 = vmatprep.mubr.bf16.mxu0 0
        %1342 = vmatmul.mubr.bf16.gmra.mrb[0].mxu0 %v1304
        %v1343 = vpop.f32.mrb[0].mxu0
        %v1344 = vadd.f32 0.0, %v1343
        %v1345 = vpop.f32.mrb[0].mxu0
        %v1346 = vpop.f32.mrb[0].mxu0
        %v1347 = vpop.f32.mrb[0].mxu0
        %1348 = vdwg.mxu0
        %1349 = vrot.lane.b32.xlu0 %v854, 112
        %v1350 = vpop.permute.xlu0 %1349
        %1351 = vrot.lane.b32.xlu0 %v854, 80
        %v1352 = vpop.permute.xlu0 %1351
        %v1354 = vsel %vm858, %v1350, 0
        %v1357 = vsel %vm858, %v1352, 0
        %1359 = vmatprep.subr.bf16.mxu0 0
        %1360 = vmatpush1.bf16.xpose.msra.mxu0 %v1357
        %1361 = vmatprep.subr.bf16.mxu0 0
        %1362 = vmatpush1.bf16.xpose.msra.mxu0 0
        %1363 = vmatprep.subr.bf16.mxu0 0
        %1364 = vmatpush1.bf16.xpose.msra.mxu0 0
        %1365 = vmatprep.subr.bf16.mxu0 0
        %1366 = vmatpush1.bf16.xpose.msra.mxu0 0
        %1367 = vmatprep.subr.bf16.mxu0 0
        %1368 = vmatpush1.bf16.xpose.msra.mxu0 0
        %1369 = vmatprep.subr.bf16.mxu0 0
        %1370 = vmatpush1.bf16.xpose.msra.mxu0 0
        %1371 = vmatprep.subr.bf16.mxu0 0
        %1372 = vmatpush1.bf16.xpose.msra.mxu0 0
        %1373 = vmatprep.subr.bf16.mxu0 0
        %1374 = vmatpush1.bf16.xpose.msra.mxu0 0
        %1375 = vmatprep.subr.bf16.mxu0 0
        %1376 = vmatpush1.bf16.xpose.msra.mxu0 0
        %1377 = vmatprep.subr.bf16.mxu0 0
        %1378 = vmatpush1.bf16.xpose.msra.mxu0 0
        %1379 = vmatprep.subr.bf16.mxu0 0
        %1380 = vmatpush1.bf16.xpose.msra.mxu0 0
        %1381 = vmatprep.subr.bf16.mxu0 0
        %1382 = vmatpush1.bf16.xpose.msra.mxu0 0
        %1383 = vmatprep.subr.bf16.mxu0 0
        %1384 = vmatpush1.bf16.xpose.msra.mxu0 0
        %1385 = vmatprep.subr.bf16.mxu0 0
        %1386 = vmatpush1.bf16.xpose.msra.mxu0 0
        %1387 = vmatprep.subr.bf16.mxu0 0
        %1388 = vmatpush1.bf16.xpose.msra.mxu0 0
        %1389 = vmatprep.subr.bf16.mxu0 0
        %1390 = vmatpush1.bf16.xpose.msra.mxu0 0
        %1391 = vmatprep.mubr.bf16.mxu0 0
        %1392 = vmatmul.mubr.bf16.gmra.mrb[0].mxu0 %v1354
        %v1393 = vpop.f32.mrb[0].mxu0
        %v1394 = vadd.f32 0.0, %v1393
        %v1395 = vpop.f32.mrb[0].mxu0
        %v1396 = vpop.f32.mrb[0].mxu0
        %v1397 = vpop.f32.mrb[0].mxu0
        %1398 = vdwg.mxu0
        %v1399 = vmul.f32 %v1344, 0.35355338
        %v1400 = vmul.f32 %v1394, 0.35355338
        %v1401 = vsel %vm858, %v1399, -inf
        %1402 = vmax.xlane.f32.xlu0 %v1401
        %v1403 = vpop.xlane.xlu0 %1402
        %v1404 = vsel %vm858, %v1400, -inf
        %1405 = vmax.xlane.f32.xlu0 %v1404
        %v1406 = vpop.xlane.xlu0 %1405
        %v1407 = vsub.f32 %v1399, %v1403
        %v1408 = vsub.f32 %v1400, %v1406
        %v1409 = vmul.f32 %v1407, 1.442695
        %v1410 = vpow.pop %v1409
        %v1411 = vmul.f32 %v1408, 1.442695
        %v1412 = vpow.pop %v1411
        %v1413 = vsel %vm858, %v1410, 0.0
        %1414 = vadd.xlane.f32.xlu0 %v1413
        %v1415 = vpop.xlane.xlu0 %1414
        %v1416 = vsel %vm858, %v1412, 0.0
        %1417 = vadd.xlane.f32.xlu0 %v1416
        %v1418 = vpop.xlane.xlu0 %1417
        %v1419 = vrcp.pop %v1415
        %v1420 = vrcp.pop %v1418
        %v1421 = vmul.f32 %v1410, %v1419
        %v1422 = vmul.f32 %v1412, %v1420
        %v1423 = vpack.c.bf16 %v1421, %v1421
        %v1424 = vpack.c.bf16 %v1422, %v1422
        %1425 = vrot.lane.b32.xlu0 %v853, 48
        %v1426 = vpop.permute.xlu0 %1425
        %v1428 = vsel %vm858, %v1423, 0
        %v1431 = vsel %vm985, %v1426, 0
        %1433 = vmatprep.subr.bf16.mxu0 0
        %1434 = vmatpush1.bf16.msra.mxu0 %v1431
        %1435 = vmatprep.subr.bf16.mxu0 0
        %1436 = vmatpush1.bf16.msra.mxu0 0
        %1437 = vmatprep.subr.bf16.mxu0 0
        %1438 = vmatpush1.bf16.msra.mxu0 0
        %1439 = vmatprep.subr.bf16.mxu0 0
        %1440 = vmatpush1.bf16.msra.mxu0 0
        %1441 = vmatprep.subr.bf16.mxu0 0
        %1442 = vmatpush1.bf16.msra.mxu0 0
        %1443 = vmatprep.subr.bf16.mxu0 0
        %1444 = vmatpush1.bf16.msra.mxu0 0
        %1445 = vmatprep.subr.bf16.mxu0 0
        %1446 = vmatpush1.bf16.msra.mxu0 0
        %1447 = vmatprep.subr.bf16.mxu0 0
        %1448 = vmatpush1.bf16.msra.mxu0 0
        %1449 = vmatprep.subr.bf16.mxu0 0
        %1450 = vmatpush1.bf16.msra.mxu0 0
        %1451 = vmatprep.subr.bf16.mxu0 0
        %1452 = vmatpush1.bf16.msra.mxu0 0
        %1453 = vmatprep.subr.bf16.mxu0 0
        %1454 = vmatpush1.bf16.msra.mxu0 0
        %1455 = vmatprep.subr.bf16.mxu0 0
        %1456 = vmatpush1.bf16.msra.mxu0 0
        %1457 = vmatprep.subr.bf16.mxu0 0
        %1458 = vmatpush1.bf16.msra.mxu0 0
        %1459 = vmatprep.subr.bf16.mxu0 0
        %1460 = vmatpush1.bf16.msra.mxu0 0
        %1461 = vmatprep.subr.bf16.mxu0 0
        %1462 = vmatpush1.bf16.msra.mxu0 0
        %1463 = vmatprep.subr.bf16.mxu0 0
        %1464 = vmatpush1.bf16.msra.mxu0 0
        %1465 = vmatprep.mubr.bf16.mxu0 0
        %1466 = vmatmul.mubr.bf16.gmra.mrb[0].mxu0 %v1428
        %v1467 = vpop.f32.mrb[0].mxu0
        %v1468 = vadd.f32 0.0, %v1467
        %v1469 = vpop.f32.mrb[0].mxu0
        %v1470 = vpop.f32.mrb[0].mxu0
        %v1471 = vpop.f32.mrb[0].mxu0
        %1472 = vdwg.mxu0
        %1473 = vrot.lane.b32.xlu0 %v854, 48
        %v1474 = vpop.permute.xlu0 %1473
        %v1476 = vsel %vm858, %v1424, 0
        %v1479 = vsel %vm985, %v1474, 0
        %1481 = vmatprep.subr.bf16.mxu0 0
        %1482 = vmatpush1.bf16.msra.mxu0 %v1479
        %1483 = vmatprep.subr.bf16.mxu0 0
        %1484 = vmatpush1.bf16.msra.mxu0 0
        %1485 = vmatprep.subr.bf16.mxu0 0
        %1486 = vmatpush1.bf16.msra.mxu0 0
        %1487 = vmatprep.subr.bf16.mxu0 0
        %1488 = vmatpush1.bf16.msra.mxu0 0
        %1489 = vmatprep.subr.bf16.mxu0 0
        %1490 = vmatpush1.bf16.msra.mxu0 0
        %1491 = vmatprep.subr.bf16.mxu0 0
        %1492 = vmatpush1.bf16.msra.mxu0 0
        %1493 = vmatprep.subr.bf16.mxu0 0
        %1494 = vmatpush1.bf16.msra.mxu0 0
        %1495 = vmatprep.subr.bf16.mxu0 0
        %1496 = vmatpush1.bf16.msra.mxu0 0
        %1497 = vmatprep.subr.bf16.mxu0 0
        %1498 = vmatpush1.bf16.msra.mxu0 0
        %1499 = vmatprep.subr.bf16.mxu0 0
        %1500 = vmatpush1.bf16.msra.mxu0 0
        %1501 = vmatprep.subr.bf16.mxu0 0
        %1502 = vmatpush1.bf16.msra.mxu0 0
        %1503 = vmatprep.subr.bf16.mxu0 0
        %1504 = vmatpush1.bf16.msra.mxu0 0
        %1505 = vmatprep.subr.bf16.mxu0 0
        %1506 = vmatpush1.bf16.msra.mxu0 0
        %1507 = vmatprep.subr.bf16.mxu0 0
        %1508 = vmatpush1.bf16.msra.mxu0 0
        %1509 = vmatprep.subr.bf16.mxu0 0
        %1510 = vmatpush1.bf16.msra.mxu0 0
        %1511 = vmatprep.subr.bf16.mxu0 0
        %1512 = vmatpush1.bf16.msra.mxu0 0
        %1513 = vmatprep.mubr.bf16.mxu0 0
        %1514 = vmatmul.mubr.bf16.gmra.mrb[0].mxu0 %v1476
        %v1515 = vpop.f32.mrb[0].mxu0
        %v1516 = vadd.f32 0.0, %v1515
        %v1517 = vpop.f32.mrb[0].mxu0
        %v1518 = vpop.f32.mrb[0].mxu0
        %v1519 = vpop.f32.mrb[0].mxu0
        %1520 = vdwg.mxu0
        %1521 = vrot.lane.b32.xlu0 %v853, 104
        %v1522 = vpop.permute.xlu0 %1521
        %1523 = vrot.lane.b32.xlu0 %v853, 72
        %v1524 = vpop.permute.xlu0 %1523
        %v1526 = vsel %vm858, %v1522, 0
        %v1529 = vsel %vm858, %v1524, 0
        %1531 = vmatprep.subr.bf16.mxu0 0
        %1532 = vmatpush1.bf16.xpose.msra.mxu0 %v1529
        %1533 = vmatprep.subr.bf16.mxu0 0
        %1534 = vmatpush1.bf16.xpose.msra.mxu0 0
        %1535 = vmatprep.subr.bf16.mxu0 0
        %1536 = vmatpush1.bf16.xpose.msra.mxu0 0
        %1537 = vmatprep.subr.bf16.mxu0 0
        %1538 = vmatpush1.bf16.xpose.msra.mxu0 0
        %1539 = vmatprep.subr.bf16.mxu0 0
        %1540 = vmatpush1.bf16.xpose.msra.mxu0 0
        %1541 = vmatprep.subr.bf16.mxu0 0
        %1542 = vmatpush1.bf16.xpose.msra.mxu0 0
        %1543 = vmatprep.subr.bf16.mxu0 0
        %1544 = vmatpush1.bf16.xpose.msra.mxu0 0
        %1545 = vmatprep.subr.bf16.mxu0 0
        %1546 = vmatpush1.bf16.xpose.msra.mxu0 0
        %1547 = vmatprep.subr.bf16.mxu0 0
        %1548 = vmatpush1.bf16.xpose.msra.mxu0 0
        %1549 = vmatprep.subr.bf16.mxu0 0
        %1550 = vmatpush1.bf16.xpose.msra.mxu0 0
        %1551 = vmatprep.subr.bf16.mxu0 0
        %1552 = vmatpush1.bf16.xpose.msra.mxu0 0
        %1553 = vmatprep.subr.bf16.mxu0 0
        %1554 = vmatpush1.bf16.xpose.msra.mxu0 0
        %1555 = vmatprep.subr.bf16.mxu0 0
        %1556 = vmatpush1.bf16.xpose.msra.mxu0 0
        %1557 = vmatprep.subr.bf16.mxu0 0
        %1558 = vmatpush1.bf16.xpose.msra.mxu0 0
        %1559 = vmatprep.subr.bf16.mxu0 0
        %1560 = vmatpush1.bf16.xpose.msra.mxu0 0
        %1561 = vmatprep.subr.bf16.mxu0 0
        %1562 = vmatpush1.bf16.xpose.msra.mxu0 0
        %1563 = vmatprep.mubr.bf16.mxu0 0
        %1564 = vmatmul.mubr.bf16.gmra.mrb[0].mxu0 %v1526
        %v1565 = vpop.f32.mrb[0].mxu0
        %v1566 = vadd.f32 0.0, %v1565
        %v1567 = vpop.f32.mrb[0].mxu0
        %v1568 = vpop.f32.mrb[0].mxu0
        %v1569 = vpop.f32.mrb[0].mxu0
        %1570 = vdwg.mxu0
        %1571 = vrot.lane.b32.xlu0 %v854, 104
        %v1572 = vpop.permute.xlu0 %1571
        %1573 = vrot.lane.b32.xlu0 %v854, 72
        %v1574 = vpop.permute.xlu0 %1573
        %v1576 = vsel %vm858, %v1572, 0
        %v1579 = vsel %vm858, %v1574, 0
        %1581 = vmatprep.subr.bf16.mxu0 0
        %1582 = vmatpush1.bf16.xpose.msra.mxu0 %v1579
        %1583 = vmatprep.subr.bf16.mxu0 0
        %1584 = vmatpush1.bf16.xpose.msra.mxu0 0
        %1585 = vmatprep.subr.bf16.mxu0 0
        %1586 = vmatpush1.bf16.xpose.msra.mxu0 0
        %1587 = vmatprep.subr.bf16.mxu0 0
        %1588 = vmatpush1.bf16.xpose.msra.mxu0 0
        %1589 = vmatprep.subr.bf16.mxu0 0
        %1590 = vmatpush1.bf16.xpose.msra.mxu0 0
        %1591 = vmatprep.subr.bf16.mxu0 0
        %1592 = vmatpush1.bf16.xpose.msra.mxu0 0
        %1593 = vmatprep.subr.bf16.mxu0 0
        %1594 = vmatpush1.bf16.xpose.msra.mxu0 0
        %1595 = vmatprep.subr.bf16.mxu0 0
        %1596 = vmatpush1.bf16.xpose.msra.mxu0 0
        %1597 = vmatprep.subr.bf16.mxu0 0
        %1598 = vmatpush1.bf16.xpose.msra.mxu0 0
        %1599 = vmatprep.subr.bf16.mxu0 0
        %1600 = vmatpush1.bf16.xpose.msra.mxu0 0
        %1601 = vmatprep.subr.bf16.mxu0 0
        %1602 = vmatpush1.bf16.xpose.msra.mxu0 0
        %1603 = vmatprep.subr.bf16.mxu0 0
        %1604 = vmatpush1.bf16.xpose.msra.mxu0 0
        %1605 = vmatprep.subr.bf16.mxu0 0
        %1606 = vmatpush1.bf16.xpose.msra.mxu0 0
        %1607 = vmatprep.subr.bf16.mxu0 0
        %1608 = vmatpush1.bf16.xpose.msra.mxu0 0
        %1609 = vmatprep.subr.bf16.mxu0 0
        %1610 = vmatpush1.bf16.xpose.msra.mxu0 0
        %1611 = vmatprep.subr.bf16.mxu0 0
        %1612 = vmatpush1.bf16.xpose.msra.mxu0 0
        %1613 = vmatprep.mubr.bf16.mxu0 0
        %1614 = vmatmul.mubr.bf16.gmra.mrb[0].mxu0 %v1576
        %v1615 = vpop.f32.mrb[0].mxu0
        %v1616 = vadd.f32 0.0, %v1615
        %v1617 = vpop.f32.mrb[0].mxu0
        %v1618 = vpop.f32.mrb[0].mxu0
        %v1619 = vpop.f32.mrb[0].mxu0
        %1620 = vdwg.mxu0
        %v1621 = vmul.f32 %v1566, 0.35355338
        %v1622 = vmul.f32 %v1616, 0.35355338
        %v1623 = vsel %vm858, %v1621, -inf
        %1624 = vmax.xlane.f32.xlu0 %v1623
        %v1625 = vpop.xlane.xlu0 %1624
        %v1626 = vsel %vm858, %v1622, -inf
        %1627 = vmax.xlane.f32.xlu0 %v1626
        %v1628 = vpop.xlane.xlu0 %1627
        %v1629 = vsub.f32 %v1621, %v1625
        %v1630 = vsub.f32 %v1622, %v1628
        %v1631 = vmul.f32 %v1629, 1.442695
        %v1632 = vpow.pop %v1631
        %v1633 = vmul.f32 %v1630, 1.442695
        %v1634 = vpow.pop %v1633
        %v1635 = vsel %vm858, %v1632, 0.0
        %1636 = vadd.xlane.f32.xlu0 %v1635
        %v1637 = vpop.xlane.xlu0 %1636
        %v1638 = vsel %vm858, %v1634, 0.0
        %1639 = vadd.xlane.f32.xlu0 %v1638
        %v1640 = vpop.xlane.xlu0 %1639
        %v1641 = vrcp.pop %v1637
        %v1642 = vrcp.pop %v1640
        %v1643 = vmul.f32 %v1632, %v1641
        %v1644 = vmul.f32 %v1634, %v1642
        %v1645 = vpack.c.bf16 %v1643, %v1643
        %v1646 = vpack.c.bf16 %v1644, %v1644
        %1647 = vrot.lane.b32.xlu0 %v853, 40
        %v1648 = vpop.permute.xlu0 %1647
        %v1650 = vsel %vm858, %v1645, 0
        %v1653 = vsel %vm985, %v1648, 0
        %1655 = vmatprep.subr.bf16.mxu0 0
        %1656 = vmatpush1.bf16.msra.mxu0 %v1653
        %1657 = vmatprep.subr.bf16.mxu0 0
        %1658 = vmatpush1.bf16.msra.mxu0 0
        %1659 = vmatprep.subr.bf16.mxu0 0
        %1660 = vmatpush1.bf16.msra.mxu0 0
        %1661 = vmatprep.subr.bf16.mxu0 0
        %1662 = vmatpush1.bf16.msra.mxu0 0
        %1663 = vmatprep.subr.bf16.mxu0 0
        %1664 = vmatpush1.bf16.msra.mxu0 0
        %1665 = vmatprep.subr.bf16.mxu0 0
        %1666 = vmatpush1.bf16.msra.mxu0 0
        %1667 = vmatprep.subr.bf16.mxu0 0
        %1668 = vmatpush1.bf16.msra.mxu0 0
        %1669 = vmatprep.subr.bf16.mxu0 0
        %1670 = vmatpush1.bf16.msra.mxu0 0
        %1671 = vmatprep.subr.bf16.mxu0 0
        %1672 = vmatpush1.bf16.msra.mxu0 0
        %1673 = vmatprep.subr.bf16.mxu0 0
        %1674 = vmatpush1.bf16.msra.mxu0 0
        %1675 = vmatprep.subr.bf16.mxu0 0
        %1676 = vmatpush1.bf16.msra.mxu0 0
        %1677 = vmatprep.subr.bf16.mxu0 0
        %1678 = vmatpush1.bf16.msra.mxu0 0
        %1679 = vmatprep.subr.bf16.mxu0 0
        %1680 = vmatpush1.bf16.msra.mxu0 0
        %1681 = vmatprep.subr.bf16.mxu0 0
        %1682 = vmatpush1.bf16.msra.mxu0 0
        %1683 = vmatprep.subr.bf16.mxu0 0
        %1684 = vmatpush1.bf16.msra.mxu0 0
        %1685 = vmatprep.subr.bf16.mxu0 0
        %1686 = vmatpush1.bf16.msra.mxu0 0
        %1687 = vmatprep.mubr.bf16.mxu0 0
        %1688 = vmatmul.mubr.bf16.gmra.mrb[0].mxu0 %v1650
        %v1689 = vpop.f32.mrb[0].mxu0
        %v1690 = vadd.f32 0.0, %v1689
        %v1691 = vpop.f32.mrb[0].mxu0
        %v1692 = vpop.f32.mrb[0].mxu0
        %v1693 = vpop.f32.mrb[0].mxu0
        %1694 = vdwg.mxu0
        %1695 = vrot.lane.b32.xlu0 %v854, 40
        %v1696 = vpop.permute.xlu0 %1695
        %v1698 = vsel %vm858, %v1646, 0
        %v1701 = vsel %vm985, %v1696, 0
        %1703 = vmatprep.subr.bf16.mxu0 0
        %1704 = vmatpush1.bf16.msra.mxu0 %v1701
        %1705 = vmatprep.subr.bf16.mxu0 0
        %1706 = vmatpush1.bf16.msra.mxu0 0
        %1707 = vmatprep.subr.bf16.mxu0 0
        %1708 = vmatpush1.bf16.msra.mxu0 0
        %1709 = vmatprep.subr.bf16.mxu0 0
        %1710 = vmatpush1.bf16.msra.mxu0 0
        %1711 = vmatprep.subr.bf16.mxu0 0
        %1712 = vmatpush1.bf16.msra.mxu0 0
        %1713 = vmatprep.subr.bf16.mxu0 0
        %1714 = vmatpush1.bf16.msra.mxu0 0
        %1715 = vmatprep.subr.bf16.mxu0 0
        %1716 = vmatpush1.bf16.msra.mxu0 0
        %1717 = vmatprep.subr.bf16.mxu0 0
        %1718 = vmatpush1.bf16.msra.mxu0 0
        %1719 = vmatprep.subr.bf16.mxu0 0
        %1720 = vmatpush1.bf16.msra.mxu0 0
        %1721 = vmatprep.subr.bf16.mxu0 0
        %1722 = vmatpush1.bf16.msra.mxu0 0
        %1723 = vmatprep.subr.bf16.mxu0 0
        %1724 = vmatpush1.bf16.msra.mxu0 0
        %1725 = vmatprep.subr.bf16.mxu0 0
        %1726 = vmatpush1.bf16.msra.mxu0 0
        %1727 = vmatprep.subr.bf16.mxu0 0
        %1728 = vmatpush1.bf16.msra.mxu0 0
        %1729 = vmatprep.subr.bf16.mxu0 0
        %1730 = vmatpush1.bf16.msra.mxu0 0
        %1731 = vmatprep.subr.bf16.mxu0 0
        %1732 = vmatpush1.bf16.msra.mxu0 0
        %1733 = vmatprep.subr.bf16.mxu0 0
        %1734 = vmatpush1.bf16.msra.mxu0 0
        %1735 = vmatprep.mubr.bf16.mxu0 0
        %1736 = vmatmul.mubr.bf16.gmra.mrb[0].mxu0 %v1698
        %v1737 = vpop.f32.mrb[0].mxu0
        %v1738 = vadd.f32 0.0, %v1737
        %v1739 = vpop.f32.mrb[0].mxu0
        %v1740 = vpop.f32.mrb[0].mxu0
        %v1741 = vpop.f32.mrb[0].mxu0
        %1742 = vdwg.mxu0
        %1745 = vrot.lane.b32.xlu0 %v1246, 8
        %v1746 = vpop.permute.xlu0 %1745
        %1747 = vrot.lane.b32.xlu0 %v1294, 8
        %v1748 = vpop.permute.xlu0 %1747
        %1753 = vrot.lane.b32.xlu0 %v1468, 16
        %v1754 = vpop.permute.xlu0 %1753
        %1755 = vrot.lane.b32.xlu0 %v1516, 16
        %v1756 = vpop.permute.xlu0 %1755
        %1761 = vrot.lane.b32.xlu0 %v1690, 24
        %v1762 = vpop.permute.xlu0 %1761
        %1763 = vrot.lane.b32.xlu0 %v1738, 24
        %v1764 = vpop.permute.xlu0 %1763
        %v1767 = vsel %vm858, %v1024, %v1746
        %v1768 = vsel %vm858, %v1072, %v1748
        %vm1769 = vcmask 130048
        %v1770 = vsel %vm1769, %v1767, %v1754
        %v1771 = vsel %vm1769, %v1768, %v1756
        %vm1772 = vcmask 195584
        %v1773 = vsel %vm1772, %v1770, %v1762
        %v1774 = vsel %vm1772, %v1771, %v1764
        %v1775 = vpack.c.bf16 %v1774, %v1773
        %v1776 = vld [vmem:[%s700] sm:$0xf]
        %v1777 = vld [vmem:[%s700 + $0x4] sm:$0xf]
        %v1778 = vld [vmem:[%s700 + $0x8] sm:$0xf]
        %v1779 = vld [vmem:[%s700 + $0xc] sm:$0xf]
        %v1780 = vld [vmem:[%s703] sm:$0x1]
        %v1782 = vlaneseq
        %v1783 = vshrl.u32 %v1782, 7
        %v1784 = vsub.s32 0, %v1783
        %v1785 = vrot.slane %v1780, %v1784
        %v1791 = vunpack.c.l.b16 %v1776
        %v1792 = vunpack.c.l.b16 %v1777
        %v1793 = vunpack.c.l.b16 %v1778
        %v1794 = vunpack.c.l.b16 %v1779
        %v1795 = vpack.c.b16 %v1792, %v1791
        %v1796 = vpack.c.b16 %v1794, %v1793
        %v1800 = vsel %vm761, %v1775, 0
        %1802 = vmatprep.subr.bf16.mxu0 0
        %1803 = vmatpush1.bf16.msra.mxu0 %v1795
        %1804 = vmatprep.subr.bf16.mxu0 0
        %1805 = vmatpush1.bf16.msra.mxu0 %v1796
        %1806 = vmatprep.subr.bf16.mxu0 0
        %1807 = vmatpush1.bf16.msra.mxu0 0
        %1808 = vmatprep.subr.bf16.mxu0 0
        %1809 = vmatpush1.bf16.msra.mxu0 0
        %1810 = vmatprep.subr.bf16.mxu0 0
        %1811 = vmatpush1.bf16.msra.mxu0 0
        %1812 = vmatprep.subr.bf16.mxu0 0
        %1813 = vmatpush1.bf16.msra.mxu0 0
        %1814 = vmatprep.subr.bf16.mxu0 0
        %1815 = vmatpush1.bf16.msra.mxu0 0
        %1816 = vmatprep.subr.bf16.mxu0 0
        %1817 = vmatpush1.bf16.msra.mxu0 0
        %1818 = vmatprep.subr.bf16.mxu0 0
        %1819 = vmatpush1.bf16.msra.mxu0 0
        %1820 = vmatprep.subr.bf16.mxu0 0
        %1821 = vmatpush1.bf16.msra.mxu0 0
        %1822 = vmatprep.subr.bf16.mxu0 0
        %1823 = vmatpush1.bf16.msra.mxu0 0
        %1824 = vmatprep.subr.bf16.mxu0 0
        %1825 = vmatpush1.bf16.msra.mxu0 0
        %1826 = vmatprep.subr.bf16.mxu0 0
        %1827 = vmatpush1.bf16.msra.mxu0 0
        %1828 = vmatprep.subr.bf16.mxu0 0
        %1829 = vmatpush1.bf16.msra.mxu0 0
        %1830 = vmatprep.subr.bf16.mxu0 0
        %1831 = vmatpush1.bf16.msra.mxu0 0
        %1832 = vmatprep.subr.bf16.mxu0 0
        %1833 = vmatpush1.bf16.msra.mxu0 0
        %1834 = vmatprep.mubr.bf16.mxu0 0
        %1835 = vmatmul.mubr.bf16.gmra.mrb[0].mxu0 %v1800
        %v1836 = vpop.f32.mrb[0].mxu0
        %v1837 = vadd.f32 %v1785, %v1836
        %v1838 = vpop.f32.mrb[0].mxu0
        %v1839 = vpop.f32.mrb[0].mxu0
        %v1840 = vadd.f32 %v1785, %v1839
        %v1841 = vpop.f32.mrb[0].mxu0
        %1842 = vdwg.mxu0
        %v1843 = vadd.f32 %v756, %v1837
        %v1844 = vadd.f32 %v757, %v1840
        %v1845 = vld [vmem:[%s706] sm:$0x1]
        %v1846 = vmul.f32 %v1843, %v1843
        %v1847 = vmul.f32 %v1844, %v1844
        %v1848 = vsel %vm761, %v1846, 0.0
        %1849 = vadd.xlane.f32.xlu0 %v1848
        %v1850 = vpop.xlane.xlu0 %1849
        %v1851 = vsel %vm761, %v1847, 0.0
        %1852 = vadd.xlane.f32.xlu0 %v1851
        %v1853 = vpop.xlane.xlu0 %1852
        %v1854 = vmul.f32 %v1850, %v768
        %v1855 = vmul.f32 %v1853, %v768
        %v1856 = vadd.f32 %v1854, 1.1920929e-07
        %v1857 = vadd.f32 %v1855, 1.1920929e-07
        %v1858 = vrsqrt.pop %v1856
        %v1859 = vrsqrt.pop %v1857
        %v1860 = vmul.f32 %v1843, %v1858
        %v1861 = vmul.f32 %v1844, %v1859
        %v1863 = vlaneseq
        %v1864 = vshrl.u32 %v1863, 7
        %v1865 = vsub.s32 0, %v1864
        %v1866 = vrot.slane %v1845, %v1865
        %v1868 = vmul.f32 %v1860, %v1866
        %v1869 = vmul.f32 %v1861, %v1866
        %v1870 = vld [vmem:[%s711] sm:$0xff]
        %v1871 = vld [vmem:[%s711 + $0x8] sm:$0xff]
        %v1872 = vld [vmem:[%s711 + $0x10] sm:$0xff]
        %v1873 = vld [vmem:[%s711 + $0x18] sm:$0xff]
        %v1875 = vsel %vm761, %v1868, 0
        %v1878 = vsel %vm761, %v1869, 0
        %1880 = vmatprep.subr.mxu0 0.0
        %1881 = vmatpush1.msra.mxu0 %v1870
        %1882 = vmatprep.subr.mxu0 0.0
        %1883 = vmatpush1.msra.mxu0 %v1871
        %1884 = vmatprep.subr.mxu0 0.0
        %1885 = vmatpush1.msra.mxu0 %v1872
        %1886 = vmatprep.subr.mxu0 0.0
        %1887 = vmatpush1.msra.mxu0 %v1873
        %1888 = vmatprep.subr.mxu0 0.0
        %1889 = vmatpush1.msra.mxu0 0.0
        %1890 = vmatprep.subr.mxu0 0.0
        %1891 = vmatpush1.msra.mxu0 0.0
        %1892 = vmatprep.subr.mxu0 0.0
        %1893 = vmatpush1.msra.mxu0 0.0
        %1894 = vmatprep.subr.mxu0 0.0
        %1895 = vmatpush1.msra.mxu0 0.0
        %1896 = vmatprep.subr.mxu0 0.0
        %1897 = vmatpush1.msra.mxu0 0.0
        %1898 = vmatprep.subr.mxu0 0.0
        %1899 = vmatpush1.msra.mxu0 0.0
        %1900 = vmatprep.subr.mxu0 0.0
        %1901 = vmatpush1.msra.mxu0 0.0
        %1902 = vmatprep.subr.mxu0 0.0
        %1903 = vmatpush1.msra.mxu0 0.0
        %1904 = vmatprep.subr.mxu0 0.0
        %1905 = vmatpush1.msra.mxu0 0.0
        %1906 = vmatprep.subr.mxu0 0.0
        %1907 = vmatpush1.msra.mxu0 0.0
        %1908 = vmatprep.subr.mxu0 0.0
        %1909 = vmatpush1.msra.mxu0 0.0
        %1910 = vmatprep.subr.mxu0 0.0
        %1911 = vmatpush1.msra.mxu0 0.0
        %1912 = vmatprep.subr.mxu0 0.0
        %1913 = vmatpush1.msra.mxu0 0.0
        %1914 = vmatprep.subr.mxu0 0.0
        %1915 = vmatpush1.msra.mxu0 0.0
        %1916 = vmatprep.subr.mxu0 0.0
        %1917 = vmatpush1.msra.mxu0 0.0
        %1918 = vmatprep.subr.mxu0 0.0
        %1919 = vmatpush1.msra.mxu0 0.0
        %1920 = vmatprep.subr.mxu0 0.0
        %1921 = vmatpush1.msra.mxu0 0.0
        %1922 = vmatprep.subr.mxu0 0.0
        %1923 = vmatpush1.msra.mxu0 0.0
        %1924 = vmatprep.subr.mxu0 0.0
        %1925 = vmatpush1.msra.mxu0 0.0
        %1926 = vmatprep.subr.mxu0 0.0
        %1927 = vmatpush1.msra.mxu0 0.0
        %1928 = vmatprep.subr.mxu0 0.0
        %1929 = vmatpush1.msra.mxu0 0.0
        %1930 = vmatprep.subr.mxu0 0.0
        %1931 = vmatpush1.msra.mxu0 0.0
        %1932 = vmatprep.subr.mxu0 0.0
        %1933 = vmatpush1.msra.mxu0 0.0
        %1934 = vmatprep.subr.mxu0 0.0
        %1935 = vmatpush1.msra.mxu0 0.0
        %1936 = vmatprep.subr.mxu0 0.0
        %1937 = vmatpush1.msra.mxu0 0.0
        %1938 = vmatprep.subr.mxu0 0.0
        %1939 = vmatpush1.msra.mxu0 0.0
        %1940 = vmatprep.subr.mxu0 0.0
        %1941 = vmatpush1.msra.mxu0 0.0
        %1942 = vmatprep.subr.mxu0 0.0
        %1943 = vmatpush1.msra.mxu0 0.0
        %1944 = vmatprep.mubr.f32.mxu0 0.0
        %1945 = vmatmul.mubr.f32.gmra.mrb[0].mxu0 %v1875
        %v1946 = vpop.f32.mrb[0].mxu0
        %v1947 = vadd.f32 0.0, %v1946
        %v1948 = vpop.f32.mrb[0].mxu0
        %1949 = vmatprep.mubr.f32.mxu0 0.0
        %1950 = vmatmul.mubr.f32.gmra.mrb[0].mxu0 %v1878
        %v1951 = vpop.f32.mrb[0].mxu0
        %v1952 = vadd.f32 0.0, %v1951
        %v1953 = vpop.f32.mrb[0].mxu0
        %1954 = vdwg.mxu0
        %v1955 = vsel %vm858, %v1947, -inf
        %1956 = vmax.xlane.f32.xlu0 %v1955
        %v1957 = vpop.xlane.xlu0 %1956
        %v1958 = vsel %vm858, %v1952, -inf
        %1959 = vmax.xlane.f32.xlu0 %v1958
        %v1960 = vpop.xlane.xlu0 %1959
        %v1961 = vsub.f32 %v1947, %v1957
        %v1962 = vsub.f32 %v1952, %v1960
        %v1963 = vmul.f32 %v1961, 1.442695
        %v1964 = vpow.pop %v1963
        %v1965 = vmul.f32 %v1962, 1.442695
        %v1966 = vpow.pop %v1965
        %v1967 = vsel %vm858, %v1964, 0.0
        %1968 = vadd.xlane.f32.xlu0 %v1967
        %v1969 = vpop.xlane.xlu0 %1968
        %v1970 = vsel %vm858, %v1966, 0.0
        %1971 = vadd.xlane.f32.xlu0 %v1970
        %v1972 = vpop.xlane.xlu0 %1971
        %v1973 = vrcp.pop %v1969
        %v1974 = vrcp.pop %v1972
        %v1975 = vmul.f32 %v1964, %v1973
        %v1976 = vmul.f32 %v1966, %v1974
        %v1977 = vsel %vm858, %v1975, -inf
        %1978 = vmax.xlane.f32.xlu0 %v1977
        %v1979 = vpop.xlane.xlu0 %1978
        %v1980 = vsel %vm858, %v1976, -inf
        %1981 = vmax.xlane.f32.xlu0 %v1980
        %v1982 = vpop.xlane.xlu0 %1981
        %vm1983 = vcmp.ge.f32.partialorder %v1975, %v1979
        %vm1984 = vcmp.ge.f32.partialorder %v1976, %v1982
        %v1985 = vsel %vm1983, -inf, %v1975
        %v1986 = vsel %vm1984, -inf, %v1976
        %v1987 = vsel %vm858, %v1985, -inf
        %1988 = vmax.xlane.f32.xlu0 %v1987
        %v1989 = vpop.xlane.xlu0 %1988
        %v1990 = vsel %vm858, %v1986, -inf
        %1991 = vmax.xlane.f32.xlu0 %v1990
        %v1992 = vpop.xlane.xlu0 %1991
        %vm1993 = vcmp.ge.f32.partialorder %v1985, %v1989
        %vm1994 = vcmp.ge.f32.partialorder %v1986, %v1992
        %vm1995 = vmor %vm1983, %vm1993
        %vm1996 = vmor %vm1984, %vm1994
        %v1997 = vsel %vm1995, %v1975, 0.0
        %v1998 = vsel %vm1996, %v1976, 0.0
        %v1999 = vsel %vm858, %v1997, 0.0
        %2000 = vadd.xlane.f32.xlu0 %v1999
        %v2001 = vpop.xlane.xlu0 %2000
        %v2002 = vsel %vm858, %v1998, 0.0
        %2003 = vadd.xlane.f32.xlu0 %v2002
        %v2004 = vpop.xlane.xlu0 %2003
        %v2005 = vrcp.pop %v2001
        %v2006 = vrcp.pop %v2004
        %v2007 = vmul.f32 %v1997, %v2005
        %v2008 = vmul.f32 %v1998, %v2006
        %v2009 = vpack.c.bf16 %v1869, %v1868
        %v2010 = vld [vmem:[%s716] sm:$0xff]
        %v2011 = vld [vmem:[%s716 + $0x8] sm:$0xff]
        %v2012 = vld [vmem:[%s716 + $0x10] sm:$0xff]
        %v2013 = vld [vmem:[%s716 + $0x18] sm:$0xff]
        %v2014 = vld [vmem:[%s720] sm:$0x3]
        %v2016 = vlaneseq
        %v2017 = vshrl.u32 %v2016, 7
        %v2018 = vsub.s32 0, %v2017
        %v2019 = vrot.slane %v2014, %v2018
        %v2020 = vlaneseq
        %v2021 = vshrl.u32 %v2020, 7
        %v2022 = vsub.s32 1, %v2021
        %v2023 = vrot.slane %v2014, %v2022
        %v2030 = vunpack.c.l.b16 %v2010
        %v2031 = vunpack.c.h.b16 %v2010
        %v2032 = vunpack.c.l.b16 %v2011
        %v2033 = vunpack.c.h.b16 %v2011
        %v2034 = vunpack.c.l.b16 %v2012
        %v2035 = vunpack.c.h.b16 %v2012
        %v2036 = vunpack.c.l.b16 %v2013
        %v2037 = vunpack.c.h.b16 %v2013
        %v2038 = vpack.c.b16 %v2032, %v2030
        %v2039 = vpack.c.b16 %v2033, %v2031
        %v2040 = vpack.c.b16 %v2036, %v2034
        %v2041 = vpack.c.b16 %v2037, %v2035
        %v2047 = vsel %vm761, %v2009, 0
        %2049 = vmatprep.subr.bf16.mxu0 %v2039
        %2050 = vmatpush1.bf16.msra.mxu0 %v2038
        %2051 = vmatprep.subr.bf16.mxu0 %v2041
        %2052 = vmatpush1.bf16.msra.mxu0 %v2040
        %2053 = vmatprep.subr.bf16.mxu0 0
        %2054 = vmatpush1.bf16.msra.mxu0 0
        %2055 = vmatprep.subr.bf16.mxu0 0
        %2056 = vmatpush1.bf16.msra.mxu0 0
        %2057 = vmatprep.subr.bf16.mxu0 0
        %2058 = vmatpush1.bf16.msra.mxu0 0
        %2059 = vmatprep.subr.bf16.mxu0 0
        %2060 = vmatpush1.bf16.msra.mxu0 0
        %2061 = vmatprep.subr.bf16.mxu0 0
        %2062 = vmatpush1.bf16.msra.mxu0 0
        %2063 = vmatprep.subr.bf16.mxu0 0
        %2064 = vmatpush1.bf16.msra.mxu0 0
        %2065 = vmatprep.subr.bf16.mxu0 0
        %2066 = vmatpush1.bf16.msra.mxu0 0
        %2067 = vmatprep.subr.bf16.mxu0 0
        %2068 = vmatpush1.bf16.msra.mxu0 0
        %2069 = vmatprep.subr.bf16.mxu0 0
        %2070 = vmatpush1.bf16.msra.mxu0 0
        %2071 = vmatprep.subr.bf16.mxu0 0
        %2072 = vmatpush1.bf16.msra.mxu0 0
        %2073 = vmatprep.subr.bf16.mxu0 0
        %2074 = vmatpush1.bf16.msra.mxu0 0
        %2075 = vmatprep.subr.bf16.mxu0 0
        %2076 = vmatpush1.bf16.msra.mxu0 0
        %2077 = vmatprep.subr.bf16.mxu0 0
        %2078 = vmatpush1.bf16.msra.mxu0 0
        %2079 = vmatprep.subr.bf16.mxu0 0
        %2080 = vmatpush1.bf16.msra.mxu0 0
        %2081 = vmatprep.mubr.bf16.mxu0 0
        %2082 = vmatmul.mubr.bf16.gmra.mrb[0].mxu0 %v2047
        %v2083 = vpop.f32.mrb[0].mxu0
        %v2084 = vadd.f32 %v2019, %v2083
        %v2085 = vpop.f32.mrb[0].mxu0
        %v2086 = vadd.f32 %v2023, %v2085
        %v2087 = vpop.f32.mrb[0].mxu0
        %v2088 = vadd.f32 %v2019, %v2087
        %v2089 = vpop.f32.mrb[0].mxu0
        %v2090 = vadd.f32 %v2023, %v2089
        %2091 = vdwg.mxu0
        %v2092 = vmax.f32 %v2084, 0.0
        %v2093 = vmax.f32 %v2086, 0.0
        %v2094 = vmax.f32 %v2088, 0.0
        %v2095 = vmax.f32 %v2090, 0.0
        %v2096 = vlaneseq
        %v2097 = vshrl.u32 %v2096, 7
        %v2098 = vlaneseq
        %v2099 = vand.u32 %v2098, 127
        %v2100 = vadd.s32 %v2099, 128
        %v2101 = vmul.u32 %v2097, 32
        %vm2102 = vcmp.ge.s32.totalorder %v2099, %v2101
        %vm2103 = vcmp.ge.s32.totalorder %v2100, %v2101
        %v2104 = vadd.s32 %v2097, 1
        %v2105 = vmul.u32 %v2104, 32
        %vm2106 = vcmp.lt.s32.totalorder %v2099, %v2105
        %vm2107 = vcmp.lt.s32.totalorder %v2100, %v2105
        %vm2108 = vmand %vm2102, %vm2106
        %vm2109 = vmand %vm2103, %vm2107
        %v2110 = vsel %vm2108, 1, 0
        %v2111 = vsel %vm2109, 1, 0
        %v2112 = vcvt.s32.f32 %v2110
        %v2113 = vcvt.s32.f32 %v2111
        %v2115 = vsel %vm858, %v2007, 0
        %v2118 = vsel %vm858, %v2008, 0
        %2120 = vmatprep.subr.mxu0 %v2113
        %2121 = vmatpush1.msra.mxu0 %v2112
        %2122 = vmatprep.subr.mxu0 0.0
        %2123 = vmatpush1.msra.mxu0 0.0
        %2124 = vmatprep.subr.mxu0 0.0
        %2125 = vmatpush1.msra.mxu0 0.0
        %2126 = vmatprep.subr.mxu0 0.0
        %2127 = vmatpush1.msra.mxu0 0.0
        %2128 = vmatprep.subr.mxu0 0.0
        %2129 = vmatpush1.msra.mxu0 0.0
        %2130 = vmatprep.subr.mxu0 0.0
        %2131 = vmatpush1.msra.mxu0 0.0
        %2132 = vmatprep.subr.mxu0 0.0
        %2133 = vmatpush1.msra.mxu0 0.0
        %2134 = vmatprep.subr.mxu0 0.0
        %2135 = vmatpush1.msra.mxu0 0.0
        %2136 = vmatprep.subr.mxu0 0.0
        %2137 = vmatpush1.msra.mxu0 0.0
        %2138 = vmatprep.subr.mxu0 0.0
        %2139 = vmatpush1.msra.mxu0 0.0
        %2140 = vmatprep.subr.mxu0 0.0
        %2141 = vmatpush1.msra.mxu0 0.0
        %2142 = vmatprep.subr.mxu0 0.0
        %2143 = vmatpush1.msra.mxu0 0.0
        %2144 = vmatprep.subr.mxu0 0.0
        %2145 = vmatpush1.msra.mxu0 0.0
        %2146 = vmatprep.subr.mxu0 0.0
        %2147 = vmatpush1.msra.mxu0 0.0
        %2148 = vmatprep.subr.mxu0 0.0
        %2149 = vmatpush1.msra.mxu0 0.0
        %2150 = vmatprep.subr.mxu0 0.0
        %2151 = vmatpush1.msra.mxu0 0.0
        %2152 = vmatprep.subr.mxu0 0.0
        %2153 = vmatpush1.msra.mxu0 0.0
        %2154 = vmatprep.subr.mxu0 0.0
        %2155 = vmatpush1.msra.mxu0 0.0
        %2156 = vmatprep.subr.mxu0 0.0
        %2157 = vmatpush1.msra.mxu0 0.0
        %2158 = vmatprep.subr.mxu0 0.0
        %2159 = vmatpush1.msra.mxu0 0.0
        %2160 = vmatprep.subr.mxu0 0.0
        %2161 = vmatpush1.msra.mxu0 0.0
        %2162 = vmatprep.subr.mxu0 0.0
        %2163 = vmatpush1.msra.mxu0 0.0
        %2164 = vmatprep.subr.mxu0 0.0
        %2165 = vmatpush1.msra.mxu0 0.0
        %2166 = vmatprep.subr.mxu0 0.0
        %2167 = vmatpush1.msra.mxu0 0.0
        %2168 = vmatprep.subr.mxu0 0.0
        %2169 = vmatpush1.msra.mxu0 0.0
        %2170 = vmatprep.subr.mxu0 0.0
        %2171 = vmatpush1.msra.mxu0 0.0
        %2172 = vmatprep.subr.mxu0 0.0
        %2173 = vmatpush1.msra.mxu0 0.0
        %2174 = vmatprep.subr.mxu0 0.0
        %2175 = vmatpush1.msra.mxu0 0.0
        %2176 = vmatprep.subr.mxu0 0.0
        %2177 = vmatpush1.msra.mxu0 0.0
        %2178 = vmatprep.subr.mxu0 0.0
        %2179 = vmatpush1.msra.mxu0 0.0
        %2180 = vmatprep.subr.mxu0 0.0
        %2181 = vmatpush1.msra.mxu0 0.0
        %2182 = vmatprep.subr.mxu0 0.0
        %2183 = vmatpush1.msra.mxu0 0.0
        %2184 = vmatprep.mubr.f32.mxu0 0.0
        %2185 = vmatmul.mubr.f32.gmra.mrb[0].mxu0 %v2115
        %v2186 = vpop.f32.mrb[0].mxu0
        %v2187 = vadd.f32 0.0, %v2186
        %v2188 = vpop.f32.mrb[0].mxu0
        %v2189 = vadd.f32 0.0, %v2188
        %2190 = vmatprep.mubr.f32.mxu0 0.0
        %2191 = vmatmul.mubr.f32.gmra.mrb[0].mxu0 %v2118
        %v2192 = vpop.f32.mrb[0].mxu0
        %v2193 = vadd.f32 0.0, %v2192
        %v2194 = vpop.f32.mrb[0].mxu0
        %v2195 = vadd.f32 0.0, %v2194
        %2196 = vdwg.mxu0
        %v2197 = vmul.f32 %v2092, %v2187
        %v2198 = vmul.f32 %v2093, %v2189
        %v2199 = vmul.f32 %v2094, %v2193
        %v2200 = vmul.f32 %v2095, %v2195
        %v2201 = vpack.c.bf16 %v2199, %v2197
        %v2202 = vpack.c.bf16 %v2200, %v2198
        %v2203 = vld [vmem:[%s725] sm:$0xf]
        %v2204 = vld [vmem:[%s725 + $0x4] sm:$0xf]
        %v2205 = vld [vmem:[%s725 + $0x8] sm:$0xf]
        %v2206 = vld [vmem:[%s725 + $0xc] sm:$0xf]
        %v2207 = vld [vmem:[%s725 + $0x10] sm:$0xf]
        %v2208 = vld [vmem:[%s725 + $0x14] sm:$0xf]
        %v2209 = vld [vmem:[%s725 + $0x18] sm:$0xf]
        %v2210 = vld [vmem:[%s725 + $0x1c] sm:$0xf]
        %v2211 = vld [vmem:[%s725 + $0x20] sm:$0xf]
        %v2212 = vld [vmem:[%s725 + $0x24] sm:$0xf]
        %v2213 = vld [vmem:[%s725 + $0x28] sm:$0xf]
        %v2214 = vld [vmem:[%s725 + $0x2c] sm:$0xf]
        %v2215 = vld [vmem:[%s725 + $0x30] sm:$0xf]
        %v2216 = vld [vmem:[%s725 + $0x34] sm:$0xf]
        %v2217 = vld [vmem:[%s725 + $0x38] sm:$0xf]
        %v2218 = vld [vmem:[%s725 + $0x3c] sm:$0xf]
        %v2219 = vld [vmem:[%s725 + $0x40] sm:$0xf]
        %v2220 = vld [vmem:[%s725 + $0x44] sm:$0xf]
        %v2221 = vld [vmem:[%s725 + $0x48] sm:$0xf]
        %v2222 = vld [vmem:[%s725 + $0x4c] sm:$0xf]
        %v2223 = vld [vmem:[%s725 + $0x50] sm:$0xf]
        %v2224 = vld [vmem:[%s725 + $0x54] sm:$0xf]
        %v2225 = vld [vmem:[%s725 + $0x58] sm:$0xf]
        %v2226 = vld [vmem:[%s725 + $0x5c] sm:$0xf]
        %v2227 = vld [vmem:[%s725 + $0x60] sm:$0xf]
        %v2228 = vld [vmem:[%s725 + $0x64] sm:$0xf]
        %v2229 = vld [vmem:[%s725 + $0x68] sm:$0xf]
        %v2230 = vld [vmem:[%s725 + $0x6c] sm:$0xf]
        %v2231 = vld [vmem:[%s725 + $0x70] sm:$0xf]
        %v2232 = vld [vmem:[%s725 + $0x74] sm:$0xf]
        %v2233 = vld [vmem:[%s725 + $0x78] sm:$0xf]
        %v2234 = vld [vmem:[%s725 + $0x7c] sm:$0xf]
        %v2235 = vld [vmem:[%s729] sm:$0xff]
        %2236 = vmatprep.subr.mxu0 0.0
        %2237 = vmatpush1.msra.mxu0 %v2235
        %2238 = vmatprep.subr.mxu0 0.0
        %2239 = vmatpush1.msra.mxu0 0.0
        %2240 = vmatprep.subr.mxu0 0.0
        %2241 = vmatpush1.msra.mxu0 0.0
        %2242 = vmatprep.subr.mxu0 0.0
        %2243 = vmatpush1.msra.mxu0 0.0
        %2244 = vmatprep.subr.mxu0 0.0
        %2245 = vmatpush1.msra.mxu0 0.0
        %2246 = vmatprep.subr.mxu0 0.0
        %2247 = vmatpush1.msra.mxu0 0.0
        %2248 = vmatprep.subr.mxu0 0.0
        %2249 = vmatpush1.msra.mxu0 0.0
        %2250 = vmatprep.subr.mxu0 0.0
        %2251 = vmatpush1.msra.mxu0 0.0
        %2252 = vmatprep.subr.mxu0 0.0
        %2253 = vmatpush1.msra.mxu0 0.0
        %2254 = vmatprep.subr.mxu0 0.0
        %2255 = vmatpush1.msra.mxu0 0.0
        %2256 = vmatprep.subr.mxu0 0.0
        %2257 = vmatpush1.msra.mxu0 0.0
        %2258 = vmatprep.subr.mxu0 0.0
        %2259 = vmatpush1.msra.mxu0 0.0
        %2260 = vmatprep.subr.mxu0 0.0
        %2261 = vmatpush1.msra.mxu0 0.0
        %2262 = vmatprep.subr.mxu0 0.0
        %2263 = vmatpush1.msra.mxu0 0.0
        %2264 = vmatprep.subr.mxu0 0.0
        %2265 = vmatpush1.msra.mxu0 0.0
        %2266 = vmatprep.subr.mxu0 0.0
        %2267 = vmatpush1.msra.mxu0 0.0
        %2268 = vmatprep.subr.mxu0 0.0
        %2269 = vmatpush1.msra.mxu0 0.0
        %2270 = vmatprep.subr.mxu0 0.0
        %2271 = vmatpush1.msra.mxu0 0.0
        %2272 = vmatprep.subr.mxu0 0.0
        %2273 = vmatpush1.msra.mxu0 0.0
        %2274 = vmatprep.subr.mxu0 0.0
        %2275 = vmatpush1.msra.mxu0 0.0
        %2276 = vmatprep.subr.mxu0 0.0
        %2277 = vmatpush1.msra.mxu0 0.0
        %2278 = vmatprep.subr.mxu0 0.0
        %2279 = vmatpush1.msra.mxu0 0.0
        %2280 = vmatprep.subr.mxu0 0.0
        %2281 = vmatpush1.msra.mxu0 0.0
        %2282 = vmatprep.subr.mxu0 0.0
        %2283 = vmatpush1.msra.mxu0 0.0
        %2284 = vmatprep.subr.mxu0 0.0
        %2285 = vmatpush1.msra.mxu0 0.0
        %2286 = vmatprep.subr.mxu0 0.0
        %2287 = vmatpush1.msra.mxu0 0.0
        %2288 = vmatprep.subr.mxu0 0.0
        %2289 = vmatpush1.msra.mxu0 0.0
        %2290 = vmatprep.subr.mxu0 0.0
        %2291 = vmatpush1.msra.mxu0 0.0
        %2292 = vmatprep.subr.mxu0 0.0
        %2293 = vmatpush1.msra.mxu0 0.0
        %2294 = vmatprep.subr.mxu0 0.0
        %2295 = vmatpush1.msra.mxu0 0.0
        %2296 = vmatprep.subr.mxu0 0.0
        %2297 = vmatpush1.msra.mxu0 0.0
        %2298 = vmatprep.subr.mxu0 0.0
        %2299 = vmatpush1.msra.mxu0 0.0
        %2300 = vmatprep.mubr.f32.mxu0 0.0
        %2301 = vmatmul.mubr.f32.gmra.mrb[0].mxu0 %v2115
        %v2302 = vpop.f32.mrb[0].mxu0
        %v2303 = vadd.f32 0.0, %v2302
        %v2304 = vpop.f32.mrb[0].mxu0
        %2305 = vmatprep.mubr.f32.mxu0 0.0
        %2306 = vmatmul.mubr.f32.gmra.mrb[0].mxu0 %v2118
        %v2307 = vpop.f32.mrb[0].mxu0
        %v2308 = vadd.f32 0.0, %v2307
        %v2309 = vpop.f32.mrb[0].mxu0
        %2310 = vdwg.mxu0
        %v2343 = vunpack.c.l.b16 %v2203
        %v2344 = vunpack.c.l.b16 %v2204
        %v2345 = vunpack.c.l.b16 %v2205
        %v2346 = vunpack.c.l.b16 %v2206
        %v2347 = vunpack.c.l.b16 %v2207
        %v2348 = vunpack.c.l.b16 %v2208
        %v2349 = vunpack.c.l.b16 %v2209
        %v2350 = vunpack.c.l.b16 %v2210
        %v2351 = vunpack.c.l.b16 %v2211
        %v2352 = vunpack.c.l.b16 %v2212
        %v2353 = vunpack.c.l.b16 %v2213
        %v2354 = vunpack.c.l.b16 %v2214
        %v2355 = vunpack.c.l.b16 %v2215
        %v2356 = vunpack.c.l.b16 %v2216
        %v2357 = vunpack.c.l.b16 %v2217
        %v2358 = vunpack.c.l.b16 %v2218
        %v2359 = vunpack.c.l.b16 %v2219
        %v2360 = vunpack.c.l.b16 %v2220
        %v2361 = vunpack.c.l.b16 %v2221
        %v2362 = vunpack.c.l.b16 %v2222
        %v2363 = vunpack.c.l.b16 %v2223
        %v2364 = vunpack.c.l.b16 %v2224
        %v2365 = vunpack.c.l.b16 %v2225
        %v2366 = vunpack.c.l.b16 %v2226
        %v2367 = vunpack.c.l.b16 %v2227
        %v2368 = vunpack.c.l.b16 %v2228
        %v2369 = vunpack.c.l.b16 %v2229
        %v2370 = vunpack.c.l.b16 %v2230
        %v2371 = vunpack.c.l.b16 %v2231
        %v2372 = vunpack.c.l.b16 %v2232
        %v2373 = vunpack.c.l.b16 %v2233
        %v2374 = vunpack.c.l.b16 %v2234
        %v2375 = vpack.c.b16 %v2344, %v2343
        %v2376 = vpack.c.b16 %v2346, %v2345
        %v2377 = vpack.c.b16 %v2348, %v2347
        %v2378 = vpack.c.b16 %v2350, %v2349
        %v2379 = vpack.c.b16 %v2352, %v2351
        %v2380 = vpack.c.b16 %v2354, %v2353
        %v2381 = vpack.c.b16 %v2356, %v2355
        %v2382 = vpack.c.b16 %v2358, %v2357
        %v2383 = vpack.c.b16 %v2360, %v2359
        %v2384 = vpack.c.b16 %v2362, %v2361
        %v2385 = vpack.c.b16 %v2364, %v2363
        %v2386 = vpack.c.b16 %v2366, %v2365
        %v2387 = vpack.c.b16 %v2368, %v2367
        %v2388 = vpack.c.b16 %v2370, %v2369
        %v2389 = vpack.c.b16 %v2372, %v2371
        %v2390 = vpack.c.b16 %v2374, %v2373
        %2407 = vmatprep.subr.bf16.mxu0 0
        %2408 = vmatpush1.bf16.msra.mxu0 %v2375
        %2409 = vmatprep.subr.bf16.mxu0 0
        %2410 = vmatpush1.bf16.msra.mxu0 %v2376
        %2411 = vmatprep.subr.bf16.mxu0 0
        %2412 = vmatpush1.bf16.msra.mxu0 %v2377
        %2413 = vmatprep.subr.bf16.mxu0 0
        %2414 = vmatpush1.bf16.msra.mxu0 %v2378
        %2415 = vmatprep.subr.bf16.mxu0 0
        %2416 = vmatpush1.bf16.msra.mxu0 %v2379
        %2417 = vmatprep.subr.bf16.mxu0 0
        %2418 = vmatpush1.bf16.msra.mxu0 %v2380
        %2419 = vmatprep.subr.bf16.mxu0 0
        %2420 = vmatpush1.bf16.msra.mxu0 %v2381
        %2421 = vmatprep.subr.bf16.mxu0 0
        %2422 = vmatpush1.bf16.msra.mxu0 %v2382
        %2423 = vmatprep.subr.bf16.mxu0 0
        %2424 = vmatpush1.bf16.msra.mxu0 %v2383
        %2425 = vmatprep.subr.bf16.mxu0 0
        %2426 = vmatpush1.bf16.msra.mxu0 %v2384
        %2427 = vmatprep.subr.bf16.mxu0 0
        %2428 = vmatpush1.bf16.msra.mxu0 %v2385
        %2429 = vmatprep.subr.bf16.mxu0 0
        %2430 = vmatpush1.bf16.msra.mxu0 %v2386
        %2431 = vmatprep.subr.bf16.mxu0 0
        %2432 = vmatpush1.bf16.msra.mxu0 %v2387
        %2433 = vmatprep.subr.bf16.mxu0 0
        %2434 = vmatpush1.bf16.msra.mxu0 %v2388
        %2435 = vmatprep.subr.bf16.mxu0 0
        %2436 = vmatpush1.bf16.msra.mxu0 %v2389
        %2437 = vmatprep.subr.bf16.mxu0 0
        %2438 = vmatpush1.bf16.msra.mxu0 %v2390
        %2439 = vmatprep.mubr.bf16.mxu0 %v2202
        %2440 = vmatmul.mubr.bf16.gmra.mrb[0].mxu0 %v2201
        %v2441 = vpop.f32.mrb[0].mxu0
        %v2442 = vadd.f32 %v2303, %v2441
        %v2443 = vpop.f32.mrb[0].mxu0
        %v2444 = vpop.f32.mrb[0].mxu0
        %v2445 = vadd.f32 %v2308, %v2444
        %v2446 = vpop.f32.mrb[0].mxu0
        %2447 = vdwg.mxu0
        %v2448 = vld [vmem:[%s734] sm:$0xf]
        %v2449 = vld [vmem:[%s734 + $0x4] sm:$0xf]
        %v2450 = vld [vmem:[%s734 + $0x8] sm:$0xf]
        %v2451 = vld [vmem:[%s734 + $0xc] sm:$0xf]
        %v2452 = vld [vmem:[%s737] sm:$0x1]
        %v2454 = vlaneseq
        %v2455 = vshrl.u32 %v2454, 7
        %v2456 = vsub.s32 0, %v2455
        %v2457 = vrot.slane %v2452, %v2456
        %v2463 = vunpack.c.l.b16 %v2448
        %v2464 = vunpack.c.l.b16 %v2449
        %v2465 = vunpack.c.l.b16 %v2450
        %v2466 = vunpack.c.l.b16 %v2451
        %v2467 = vpack.c.b16 %v2464, %v2463
        %v2468 = vpack.c.b16 %v2466, %v2465
        %2471 = vmatprep.subr.bf16.mxu0 0
        %2472 = vmatpush1.bf16.msra.mxu0 %v2467
        %2473 = vmatprep.subr.bf16.mxu0 0
        %2474 = vmatpush1.bf16.msra.mxu0 %v2468
        %2475 = vmatprep.subr.bf16.mxu0 0
        %2476 = vmatpush1.bf16.msra.mxu0 0
        %2477 = vmatprep.subr.bf16.mxu0 0
        %2478 = vmatpush1.bf16.msra.mxu0 0
        %2479 = vmatprep.subr.bf16.mxu0 0
        %2480 = vmatpush1.bf16.msra.mxu0 0
        %2481 = vmatprep.subr.bf16.mxu0 0
        %2482 = vmatpush1.bf16.msra.mxu0 0
        %2483 = vmatprep.subr.bf16.mxu0 0
        %2484 = vmatpush1.bf16.msra.mxu0 0
        %2485 = vmatprep.subr.bf16.mxu0 0
        %2486 = vmatpush1.bf16.msra.mxu0 0
        %2487 = vmatprep.subr.bf16.mxu0 0
        %2488 = vmatpush1.bf16.msra.mxu0 0
        %2489 = vmatprep.subr.bf16.mxu0 0
        %2490 = vmatpush1.bf16.msra.mxu0 0
        %2491 = vmatprep.subr.bf16.mxu0 0
        %2492 = vmatpush1.bf16.msra.mxu0 0
        %2493 = vmatprep.subr.bf16.mxu0 0
        %2494 = vmatpush1.bf16.msra.mxu0 0
        %2495 = vmatprep.subr.bf16.mxu0 0
        %2496 = vmatpush1.bf16.msra.mxu0 0
        %2497 = vmatprep.subr.bf16.mxu0 0
        %2498 = vmatpush1.bf16.msra.mxu0 0
        %2499 = vmatprep.subr.bf16.mxu0 0
        %2500 = vmatpush1.bf16.msra.mxu0 0
        %2501 = vmatprep.subr.bf16.mxu0 0
        %2502 = vmatpush1.bf16.msra.mxu0 0
        %2503 = vmatprep.mubr.bf16.mxu0 0
        %2504 = vmatmul.mubr.bf16.gmra.mrb[0].mxu0 %v2047
        %v2505 = vpop.f32.mrb[0].mxu0
        %v2506 = vadd.f32 %v2457, %v2505
        %v2507 = vpop.f32.mrb[0].mxu0
        %v2508 = vpop.f32.mrb[0].mxu0
        %v2509 = vadd.f32 %v2457, %v2508
        %v2510 = vpop.f32.mrb[0].mxu0
        %2511 = vdwg.mxu0
        %v2512 = vmax.f32 %v2506, 0.0
        %v2513 = vmax.f32 %v2509, 0.0
        %v2514 = vpack.c.bf16 %v2513, %v2512
        %v2515 = vld [vmem:[%s742] sm:$0xf]
        %v2516 = vld [vmem:[%s742 + $0x4] sm:$0xf]
        %v2517 = vld [vmem:[%s742 + $0x8] sm:$0xf]
        %v2518 = vld [vmem:[%s742 + $0xc] sm:$0xf]
        %v2519 = vld [vmem:[%s745] sm:$0x1]
        %v2521 = vlaneseq
        %v2522 = vshrl.u32 %v2521, 7
        %v2523 = vsub.s32 0, %v2522
        %v2524 = vrot.slane %v2519, %v2523
        %v2530 = vunpack.c.l.b16 %v2515
        %v2531 = vunpack.c.l.b16 %v2516
        %v2532 = vunpack.c.l.b16 %v2517
        %v2533 = vunpack.c.l.b16 %v2518
        %v2534 = vpack.c.b16 %v2531, %v2530
        %v2535 = vpack.c.b16 %v2533, %v2532
        %v2539 = vsel %vm761, %v2514, 0
        %2541 = vmatprep.subr.bf16.mxu0 0
        %2542 = vmatpush1.bf16.msra.mxu0 %v2534
        %2543 = vmatprep.subr.bf16.mxu0 0
        %2544 = vmatpush1.bf16.msra.mxu0 %v2535
        %2545 = vmatprep.subr.bf16.mxu0 0
        %2546 = vmatpush1.bf16.msra.mxu0 0
        %2547 = vmatprep.subr.bf16.mxu0 0
        %2548 = vmatpush1.bf16.msra.mxu0 0
        %2549 = vmatprep.subr.bf16.mxu0 0
        %2550 = vmatpush1.bf16.msra.mxu0 0
        %2551 = vmatprep.subr.bf16.mxu0 0
        %2552 = vmatpush1.bf16.msra.mxu0 0
        %2553 = vmatprep.subr.bf16.mxu0 0
        %2554 = vmatpush1.bf16.msra.mxu0 0
        %2555 = vmatprep.subr.bf16.mxu0 0
        %2556 = vmatpush1.bf16.msra.mxu0 0
        %2557 = vmatprep.subr.bf16.mxu0 0
        %2558 = vmatpush1.bf16.msra.mxu0 0
        %2559 = vmatprep.subr.bf16.mxu0 0
        %2560 = vmatpush1.bf16.msra.mxu0 0
        %2561 = vmatprep.subr.bf16.mxu0 0
        %2562 = vmatpush1.bf16.msra.mxu0 0
        %2563 = vmatprep.subr.bf16.mxu0 0
        %2564 = vmatpush1.bf16.msra.mxu0 0
        %2565 = vmatprep.subr.bf16.mxu0 0
        %2566 = vmatpush1.bf16.msra.mxu0 0
        %2567 = vmatprep.subr.bf16.mxu0 0
        %2568 = vmatpush1.bf16.msra.mxu0 0
        %2569 = vmatprep.subr.bf16.mxu0 0
        %2570 = vmatpush1.bf16.msra.mxu0 0
        %2571 = vmatprep.subr.bf16.mxu0 0
        %2572 = vmatpush1.bf16.msra.mxu0 0
        %2573 = vmatprep.mubr.bf16.mxu0 0
        %2574 = vmatmul.mubr.bf16.gmra.mrb[0].mxu0 %v2539
        %v2575 = vpop.f32.mrb[0].mxu0
        %v2576 = vadd.f32 %v2524, %v2575
        %v2577 = vpop.f32.mrb[0].mxu0
        %v2578 = vpop.f32.mrb[0].mxu0
        %v2579 = vadd.f32 %v2524, %v2578
        %v2580 = vpop.f32.mrb[0].mxu0
        %2581 = vdwg.mxu0
        %v2582 = vadd.f32 %v1843, %v2442
        %v2583 = vadd.f32 %v1844, %v2445
        %v2584 = vadd.f32 %v2582, %v2576
        %v2585 = vadd.f32 %v2583, %v2579
        %2586 = vst.msk [vmem:[#allocation2] sm:$0xff] %vm761, %v2584
        %2587 = vst.msk [vmem:[#allocation2 + $0x8] sm:$0xff] %vm761, %v2585
        // Predicated region
        $region89: #{tpu_custom_call.1} parent=83 // pred_check
          %p2588 = pneg %p452
        $region90: #{tpu_custom_call.1} parent=83 // pred_check_branch
          %2590 = sbr.rel (%p2588) target = $region92
        $region91: #{tpu_custom_call.1} parent=83 // pred_region
          %s2592 = ssub.s32 256, 256
          %2593 = vsyncadd [#allocation3], %s2592
          %s2594 = sshll.u32 [#allocation2], 4
          %s2595 = int_to_ptr.vmem [resolvable:$true] %s2594
          %2600 = dma.vmem_to_hbm [thread:$0]  %s2595, 256, %s16, [#allocation3], 128, 128, 8
        $region92: #{tpu_custom_call.1} parent=83 // pred_fallthru
          _
        // Predicated region
        $region93: #{tpu_custom_call.1} parent=83 // pred_check
          %p2601 = pneg %p452
        $region94: #{tpu_custom_call.1} parent=83 // pred_check_branch
          %2603 = sbr.rel (%p2601) target = $region96
        $region95: #{tpu_custom_call.1} parent=83 // pred_region
          %2604 = dma.done [#allocation3], 256
        $region96: #{tpu_custom_call.1} parent=83 // pred_fallthru
          _
      $region84: #{tpu_custom_call.1} parent=5 // pred_fallthru
        _
      %p2605 = scmp.le.s32.totalorder 2, %s23
      // Predicated region
      $region97: #{tpu_custom_call.1} parent=5 // pred_check
        %p2606 = pneg %p2605
      $region98: #{tpu_custom_call.1} parent=5 // pred_check_branch
        %2608 = sbr.rel (%p2606) target = $region100
      $region99: #{tpu_custom_call.1} parent=5 // pred_region
        %s2609 = ssub.s32 %s23, 2
      $region100: #{tpu_custom_call.1} parent=5 // pred_fallthru
        _
    $region6: #{tpu_custom_call.1} parent=1 // loop_footer
      %s27 = sadd.s32 1, %s23
    $region7: #{tpu_custom_call.1} parent=1 // loop_footer_branch
      %22 = sbr.rel target = $region3
    $region8: #{tpu_custom_call.1} parent=1 // loop_exit
      _
    %2610 = vsyncpa [#allocation3], 1
    %s2611 = scalar_lea.sflag [#allocation3], 1
    %2612 = vsyncpa %s2611, 1

</llo_original>
